<compile_context>
chip_gen: v7x
topology: tpu7x:2x2x1
jax: 0.10.0
libtpu: 0.0.40
codegen_flags: <defaults>
</compile_context>

<pallas_src>
import functools
import math

import jax
import jax.numpy as jnp
from jax.experimental import pallas as pl
from jax.experimental.pallas import tpu as pltpu


# ---------------- model config (small, deterministic) ----------------
INPUT_DIM = 16
HIDDEN_DIM = 32
N_HEADS = 4
HEAD_DIM = HIDDEN_DIM // N_HEADS
DIM_FEEDFORWARD = 64
N_LAYERS = 2
LN_EPS = 1e-5
SEQ_LEN = 8
BATCH = 2


def _layer_norm(v, gamma, beta, eps):
    mean = jnp.mean(v, axis=-1, keepdims=True)
    var = jnp.mean((v - mean) ** 2, axis=-1, keepdims=True)
    return (v - mean) * jax.lax.rsqrt(var + eps) * gamma + beta


def _directional_kernel(x_ref, *rest, hidden_dim, n_heads, n_layers, ln_eps):
    # rest = 18 parameter refs + 1 output ref (robust to arg-count mismatches).
    (w_in_ref, b_in_ref,
     w_qkv_ref, b_qkv_ref, w_o_ref, b_o_ref,
     ln1_g_ref, ln1_b_ref,
     w_ff1_ref, b_ff1_ref, w_ff2_ref, b_ff2_ref,
     ln2_g_ref, ln2_b_ref,
     w_h1_ref, b_h1_ref, w_h2_ref, b_h2_ref) = rest[:-1]
    out_ref = rest[-1]

    d = hidden_dim
    dh = d // n_heads
    inv_sqrt_dh = 1.0 / math.sqrt(dh)

    x = x_ref[0]                                                   # (S, input_dim)

    # --- input projection ---
    h = jnp.dot(x, w_in_ref[...], preferred_element_type=jnp.float32) + b_in_ref[...]

    for l in range(n_layers):
        # ---- self-attention block (post-LN; dropout = identity in eval) ----
        qkv = (jnp.dot(h, w_qkv_ref[l], preferred_element_type=jnp.float32)
               + b_qkv_ref[l])                                     # (S, 3D)
        q = qkv[:, 0:d]
        k = qkv[:, d:2 * d]
        v = qkv[:, 2 * d:3 * d]

        head_outs = []
        for hd in range(n_heads):
            qh = q[:, hd * dh:(hd + 1) * dh]                       # (S, dh)
            kh = k[:, hd * dh:(hd + 1) * dh]
            vh = v[:, hd * dh:(hd + 1) * dh]
            # q @ k^T without materializing a transpose.
            scores = jax.lax.dot_general(
                qh, kh, (((1,), (1,)), ((), ())),
                preferred_element_type=jnp.float32) * inv_sqrt_dh  # (S, S)
            scores = scores - jnp.max(scores, axis=-1, keepdims=True)
            p = jnp.exp(scores)
            p = p / jnp.sum(p, axis=-1, keepdims=True)
            head_outs.append(
                jnp.dot(p, vh, preferred_element_type=jnp.float32))
        attn = jnp.concatenate(head_outs, axis=-1)                 # (S, D)
        attn = (jnp.dot(attn, w_o_ref[l], preferred_element_type=jnp.float32)
                + b_o_ref[l])
        h = _layer_norm(h + attn, ln1_g_ref[l], ln1_b_ref[l], ln_eps)

        # ---- feed-forward block ----
        ff = (jnp.dot(h, w_ff1_ref[l], preferred_element_type=jnp.float32)
              + b_ff1_ref[l])
        ff = jnp.maximum(ff, 0.0)
        ff = (jnp.dot(ff, w_ff2_ref[l], preferred_element_type=jnp.float32)
              + b_ff2_ref[l])
        h = _layer_norm(h + ff, ln2_g_ref[l], ln2_b_ref[l], ln_eps)

    # --- last token + output head ---
    s = h.shape[0]
    last = h[s - 1:s, :]                                           # (1, D)
    hh = (jnp.dot(last, w_h1_ref[...], preferred_element_type=jnp.float32)
          + b_h1_ref[...])
    hh = jnp.maximum(hh, 0.0)
    out = (jnp.dot(hh, w_h2_ref[...], preferred_element_type=jnp.float32)
           + b_h2_ref[...])                                        # (1, 3)
    out_ref[0] = out


def _resident_spec(shape):
    """Full-array block with a constant index_map -> weight stays VMEM-resident."""
    ndim = len(shape)
    return pl.BlockSpec(shape, lambda b, _n=ndim: (0,) * _n)


def directional_model_forward(x, params):
    """x: (B, S, input_dim) float32. Returns (B, 3) float32."""
    B, S, Din = x.shape
    kernel = functools.partial(
        _directional_kernel,
        hidden_dim=HIDDEN_DIM, n_heads=N_HEADS, n_layers=N_LAYERS, ln_eps=LN_EPS)

    in_specs = [pl.BlockSpec((1, S, Din), lambda b: (b, 0, 0))]
    in_specs += [_resident_spec(p.shape) for p in params]

    out = pl.pallas_call(
        kernel,
        out_shape=jax.ShapeDtypeStruct((B, 1, 3), jnp.float32),
        grid=(B,),
        in_specs=in_specs,
        out_specs=pl.BlockSpec((1, 1, 3), lambda b: (b, 0, 0)),
        compiler_params=pltpu.CompilerParams(
            dimension_semantics=("parallel",)),
    )(x, *params)
    return out[:, 0, :]


def init_params(key):
    """Deterministic synthetic parameters matching the PyTorch module's shapes
    (weights stored (in_features, out_features); per-layer tensors stacked on a
    leading n_layers axis)."""
    ks = jax.random.split(key, 16)
    it = iter(ks)

    def u(k, shape, fan_in):
        bound = 1.0 / math.sqrt(fan_in)
        return jax.random.uniform(k, shape, jnp.float32, -bound, bound)

    D, F, L, Din = HIDDEN_DIM, DIM_FEEDFORWARD, N_LAYERS, INPUT_DIM
    w_in = u(next(it), (Din, D), Din)
    b_in = u(next(it), (1, D), Din)
    w_qkv = u(next(it), (L, D, 3 * D), D)
    b_qkv = u(next(it), (L, 1, 3 * D), D)
    w_o = u(next(it), (L, D, D), D)
    b_o = u(next(it), (L, 1, D), D)
    ln1_g = jnp.ones((L, 1, D), jnp.float32)
    ln1_b = jnp.zeros((L, 1, D), jnp.float32)
    w_ff1 = u(next(it), (L, D, F), D)
    b_ff1 = u(next(it), (L, 1, F), D)
    w_ff2 = u(next(it), (L, F, D), F)
    b_ff2 = u(next(it), (L, 1, D), F)
    ln2_g = jnp.ones((L, 1, D), jnp.float32)
    ln2_b = jnp.zeros((L, 1, D), jnp.float32)
    w_h1 = u(next(it), (D, D), D)
    b_h1 = u(next(it), (1, D), D)
    w_h2 = u(next(it), (D, 3), D)
    b_h2 = u(next(it), (1, 3), D)
    return (w_in, b_in, w_qkv, b_qkv, w_o, b_o, ln1_g, ln1_b,
            w_ff1, b_ff1, w_ff2, b_ff2, ln2_g, ln2_b,
            w_h1, b_h1, w_h2, b_h2)


def reference_forward(x, params):
    """Pure-JAX reference mirroring PyTorch TransformerEncoder (post-LN, eval)."""
    (w_in, b_in, w_qkv, b_qkv, w_o, b_o, ln1_g, ln1_b,
     w_ff1, b_ff1, w_ff2, b_ff2, ln2_g, ln2_b,
     w_h1, b_h1, w_h2, b_h2) = params
    B, S, _ = x.shape
    D, H = HIDDEN_DIM, N_HEADS
    Dh = D // H

    def ln(v, g, b):
        m = jnp.mean(v, axis=-1, keepdims=True)
        var = jnp.mean((v - m) ** 2, axis=-1, keepdims=True)
        return (v - m) / jnp.sqrt(var + LN_EPS) * g + b

    h = x @ w_in + b_in
    for l in range(N_LAYERS):
        qkv = h @ w_qkv[l] + b_qkv[l]
        q, k, v = qkv[..., :D], qkv[..., D:2 * D], qkv[..., 2 * D:]
        q = q.reshape(B, S, H, Dh).transpose(0, 2, 1, 3)
        k = k.reshape(B, S, H, Dh).transpose(0, 2, 1, 3)
        v = v.reshape(B, S, H, Dh).transpose(0, 2, 1, 3)
        scores = (q @ k.transpose(0, 1, 3, 2)) / math.sqrt(Dh)
        p = jax.nn.softmax(scores, axis=-1)
        attn = (p @ v).transpose(0, 2, 1, 3).reshape(B, S, D)
        attn = attn @ w_o[l] + b_o[l]
        h = ln(h + attn, ln1_g[l], ln1_b[l])
        ff = jnp.maximum(h @ w_ff1[l] + b_ff1[l], 0.0) @ w_ff2[l] + b_ff2[l]
        h = ln(h + ff, ln2_g[l], ln2_b[l])
    last = h[:, -1, :]
    out = jnp.maximum(last @ w_h1 + b_h1, 0.0) @ w_h2 + b_h2
    return out


if __name__ == "__main__":
    key = jax.random.PRNGKey(0)
    k_x, k_p = jax.random.split(key)
    x = jax.random.normal(k_x, (BATCH, SEQ_LEN, INPUT_DIM), jnp.float32)
    params = init_params(k_p)

    out = directional_model_forward(x, params)
    out = jax.block_until_ready(out)

    ref = reference_forward(x, params)
    assert out.shape == (BATCH, 3), out.shape
    max_diff = float(jnp.max(jnp.abs(out - ref)))
    assert jnp.allclose(out, ref, atol=2e-4, rtol=2e-4), (
        f"mismatch vs reference, max abs diff {max_diff}")

    print("KERNEL_OK")
</pallas_src>

<mosaic_0001>
module attributes {stable_mosaic.version = 11 : i64} {
  func.func @_directional_kernel(%arg0: i32, %arg1: memref<1x8x16xf32, #tpu.memory_space<vmem>>, %arg2: memref<16x32xf32, #tpu.memory_space<vmem>>, %arg3: memref<1x32xf32, #tpu.memory_space<vmem>>, %arg4: memref<2x32x96xf32, #tpu.memory_space<vmem>>, %arg5: memref<2x1x96xf32, #tpu.memory_space<vmem>>, %arg6: memref<2x32x32xf32, #tpu.memory_space<vmem>>, %arg7: memref<2x1x32xf32, #tpu.memory_space<vmem>>, %arg8: memref<2x1x32xf32, #tpu.memory_space<vmem>>, %arg9: memref<2x1x32xf32, #tpu.memory_space<vmem>>, %arg10: memref<2x32x64xf32, #tpu.memory_space<vmem>>, %arg11: memref<2x1x64xf32, #tpu.memory_space<vmem>>, %arg12: memref<2x64x32xf32, #tpu.memory_space<vmem>>, %arg13: memref<2x1x32xf32, #tpu.memory_space<vmem>>, %arg14: memref<2x1x32xf32, #tpu.memory_space<vmem>>, %arg15: memref<2x1x32xf32, #tpu.memory_space<vmem>>, %arg16: memref<32x32xf32, #tpu.memory_space<vmem>>, %arg17: memref<1x32xf32, #tpu.memory_space<vmem>>, %arg18: memref<32x3xf32, #tpu.memory_space<vmem>>, %arg19: memref<1x3xf32, #tpu.memory_space<vmem>>, %arg20: memref<1x1x3xf32, #tpu.memory_space<vmem>>) attributes {dimension_semantics = [#tpu.dimension_semantics<parallel>], iteration_bounds = array<i64: 2>, scalar_prefetch = 0 : i64, scratch_operands = 0 : i64, tpu.core_type = #tpu.core_type<tc>, window_params = [{transform_indices = @transform_0, window_bounds = array<i64: 1, 8, 16>}, {pipeline_mode = #tpu.pipeline_mode<synchronous>, transform_indices = @transform_1, window_bounds = array<i64: 16, 32>}, {pipeline_mode = #tpu.pipeline_mode<synchronous>, transform_indices = @transform_2, window_bounds = array<i64: 1, 32>}, {pipeline_mode = #tpu.pipeline_mode<synchronous>, transform_indices = @transform_3, window_bounds = array<i64: 2, 32, 96>}, {pipeline_mode = #tpu.pipeline_mode<synchronous>, transform_indices = @transform_4, window_bounds = array<i64: 2, 1, 96>}, {pipeline_mode = #tpu.pipeline_mode<synchronous>, transform_indices = @transform_5, window_bounds = array<i64: 2, 32, 32>}, {pipeline_mode = #tpu.pipeline_mode<synchronous>, transform_indices = @transform_6, window_bounds = array<i64: 2, 1, 32>}, {pipeline_mode = #tpu.pipeline_mode<synchronous>, transform_indices = @transform_7, window_bounds = array<i64: 2, 1, 32>}, {pipeline_mode = #tpu.pipeline_mode<synchronous>, transform_indices = @transform_8, window_bounds = array<i64: 2, 1, 32>}, {pipeline_mode = #tpu.pipeline_mode<synchronous>, transform_indices = @transform_9, window_bounds = array<i64: 2, 32, 64>}, {pipeline_mode = #tpu.pipeline_mode<synchronous>, transform_indices = @transform_10, window_bounds = array<i64: 2, 1, 64>}, {pipeline_mode = #tpu.pipeline_mode<synchronous>, transform_indices = @transform_11, window_bounds = array<i64: 2, 64, 32>}, {pipeline_mode = #tpu.pipeline_mode<synchronous>, transform_indices = @transform_12, window_bounds = array<i64: 2, 1, 32>}, {pipeline_mode = #tpu.pipeline_mode<synchronous>, transform_indices = @transform_13, window_bounds = array<i64: 2, 1, 32>}, {pipeline_mode = #tpu.pipeline_mode<synchronous>, transform_indices = @transform_14, window_bounds = array<i64: 2, 1, 32>}, {pipeline_mode = #tpu.pipeline_mode<synchronous>, transform_indices = @transform_15, window_bounds = array<i64: 32, 32>}, {pipeline_mode = #tpu.pipeline_mode<synchronous>, transform_indices = @transform_16, window_bounds = array<i64: 1, 32>}, {pipeline_mode = #tpu.pipeline_mode<synchronous>, transform_indices = @transform_17, window_bounds = array<i64: 32, 3>}, {pipeline_mode = #tpu.pipeline_mode<synchronous>, transform_indices = @transform_18, window_bounds = array<i64: 1, 3>}, {transform_indices = @transform_19, window_bounds = array<i64: 1, 1, 3>}]} {
    %c0 = arith.constant 0 : index
    %c0_0 = arith.constant 0 : index
    %c0_1 = arith.constant 0 : index
    %0 = vector.load %arg1[%c0, %c0_0, %c0_1] : memref<1x8x16xf32, #tpu.memory_space<vmem>>, vector<1x8x16xf32>
    %1 = vector.shape_cast %0 : vector<1x8x16xf32> to vector<8x16xf32>
    %c0_2 = arith.constant 0 : index
    %c0_3 = arith.constant 0 : index
    %2 = vector.load %arg2[%c0_2, %c0_3] : memref<16x32xf32, #tpu.memory_space<vmem>>, vector<16x32xf32>
    %cst = arith.constant dense<0.000000e+00> : vector<8x32xf32>
    %3 = tpu.matmul %1, %2, %cst {dimension_numbers = #tpu.dot_dimension_numbers<[1], [0], [0], [1], [0, 0, 1, 1], [], []>} : vector<8x16xf32>, vector<16x32xf32>, vector<8x32xf32> -> vector<8x32xf32>
    %c0_4 = arith.constant 0 : index
    %c0_5 = arith.constant 0 : index
    %4 = vector.load %arg3[%c0_4, %c0_5] : memref<1x32xf32, #tpu.memory_space<vmem>>, vector<1x32xf32>
    %5 = vector.broadcast %4 : vector<1x32xf32> to vector<8x32xf32>
    %6 = arith.addf %3, %5 : vector<8x32xf32>
    %c0_6 = arith.constant 0 : index
    %c0_7 = arith.constant 0 : index
    %c0_8 = arith.constant 0 : index
    %7 = vector.load %arg4[%c0_6, %c0_7, %c0_8] : memref<2x32x96xf32, #tpu.memory_space<vmem>>, vector<1x32x96xf32>
    %8 = vector.shape_cast %7 : vector<1x32x96xf32> to vector<32x96xf32>
    %cst_9 = arith.constant dense<0.000000e+00> : vector<8x96xf32>
    %9 = tpu.matmul %6, %8, %cst_9 {dimension_numbers = #tpu.dot_dimension_numbers<[1], [0], [0], [1], [0, 0, 1, 1], [], []>} : vector<8x32xf32>, vector<32x96xf32>, vector<8x96xf32> -> vector<8x96xf32>
    %c0_10 = arith.constant 0 : index
    %c0_11 = arith.constant 0 : index
    %c0_12 = arith.constant 0 : index
    %10 = vector.load %arg5[%c0_10, %c0_11, %c0_12] : memref<2x1x96xf32, #tpu.memory_space<vmem>>, vector<1x1x96xf32>
    %11 = vector.shape_cast %10 : vector<1x1x96xf32> to vector<1x96xf32>
    %12 = vector.broadcast %11 : vector<1x96xf32> to vector<8x96xf32>
    %13 = arith.addf %9, %12 : vector<8x96xf32>
    %14 = vector.extract_strided_slice %13 {offsets = [0, 0], sizes = [8, 32], strides = [1, 1]} : vector<8x96xf32> to vector<8x32xf32>
    %15 = vector.extract_strided_slice %13 {offsets = [0, 32], sizes = [8, 32], strides = [1, 1]} : vector<8x96xf32> to vector<8x32xf32>
    %16 = vector.extract_strided_slice %13 {offsets = [0, 64], sizes = [8, 32], strides = [1, 1]} : vector<8x96xf32> to vector<8x32xf32>
    %17 = vector.extract_strided_slice %14 {offsets = [0, 0], sizes = [8, 8], strides = [1, 1]} : vector<8x32xf32> to vector<8x8xf32>
    %18 = vector.extract_strided_slice %15 {offsets = [0, 0], sizes = [8, 8], strides = [1, 1]} : vector<8x32xf32> to vector<8x8xf32>
    %19 = vector.extract_strided_slice %16 {offsets = [0, 0], sizes = [8, 8], strides = [1, 1]} : vector<8x32xf32> to vector<8x8xf32>
    %cst_13 = arith.constant dense<0.000000e+00> : vector<8x8xf32>
    %20 = tpu.matmul %17, %18, %cst_13 {dimension_numbers = #tpu.dot_dimension_numbers<[1], [1], [0], [0], [0, 0, 1, 0], [], []>} : vector<8x8xf32>, vector<8x8xf32>, vector<8x8xf32> -> vector<8x8xf32>
    %cst_14 = arith.constant 0.353553385 : f32
    %21 = vector.broadcast %cst_14 : f32 to vector<8x8xf32>
    %22 = arith.mulf %20, %21 : vector<8x8xf32>
    %cst_15 = arith.constant dense<0xFF800000> : vector<8xf32>
    %23 = vector.multi_reduction <maximumf>, %22, %cst_15 [1] : vector<8x8xf32> to vector<8xf32>
    %24 = vector.shape_cast %23 : vector<8xf32> to vector<8x1xf32>
    %25 = vector.broadcast %24 : vector<8x1xf32> to vector<8x8xf32>
    %26 = arith.subf %22, %25 : vector<8x8xf32>
    %27 = math.exp %26 : vector<8x8xf32>
    %cst_16 = arith.constant dense<0.000000e+00> : vector<8xf32>
    %28 = vector.multi_reduction <add>, %27, %cst_16 [1] : vector<8x8xf32> to vector<8xf32>
    %29 = vector.shape_cast %28 : vector<8xf32> to vector<8x1xf32>
    %30 = vector.broadcast %29 : vector<8x1xf32> to vector<8x8xf32>
    %31 = arith.divf %27, %30 : vector<8x8xf32>
    %cst_17 = arith.constant dense<0.000000e+00> : vector<8x8xf32>
    %32 = tpu.matmul %31, %19, %cst_17 {dimension_numbers = #tpu.dot_dimension_numbers<[1], [0], [0], [1], [0, 0, 1, 1], [], []>} : vector<8x8xf32>, vector<8x8xf32>, vector<8x8xf32> -> vector<8x8xf32>
    %33 = vector.extract_strided_slice %14 {offsets = [0, 8], sizes = [8, 8], strides = [1, 1]} : vector<8x32xf32> to vector<8x8xf32>
    %34 = vector.extract_strided_slice %15 {offsets = [0, 8], sizes = [8, 8], strides = [1, 1]} : vector<8x32xf32> to vector<8x8xf32>
    %35 = vector.extract_strided_slice %16 {offsets = [0, 8], sizes = [8, 8], strides = [1, 1]} : vector<8x32xf32> to vector<8x8xf32>
    %cst_18 = arith.constant dense<0.000000e+00> : vector<8x8xf32>
    %36 = tpu.matmul %33, %34, %cst_18 {dimension_numbers = #tpu.dot_dimension_numbers<[1], [1], [0], [0], [0, 0, 1, 0], [], []>} : vector<8x8xf32>, vector<8x8xf32>, vector<8x8xf32> -> vector<8x8xf32>
    %cst_19 = arith.constant 0.353553385 : f32
    %37 = vector.broadcast %cst_19 : f32 to vector<8x8xf32>
    %38 = arith.mulf %36, %37 : vector<8x8xf32>
    %cst_20 = arith.constant dense<0xFF800000> : vector<8xf32>
    %39 = vector.multi_reduction <maximumf>, %38, %cst_20 [1] : vector<8x8xf32> to vector<8xf32>
    %40 = vector.shape_cast %39 : vector<8xf32> to vector<8x1xf32>
    %41 = vector.broadcast %40 : vector<8x1xf32> to vector<8x8xf32>
    %42 = arith.subf %38, %41 : vector<8x8xf32>
    %43 = math.exp %42 : vector<8x8xf32>
    %cst_21 = arith.constant dense<0.000000e+00> : vector<8xf32>
    %44 = vector.multi_reduction <add>, %43, %cst_21 [1] : vector<8x8xf32> to vector<8xf32>
    %45 = vector.shape_cast %44 : vector<8xf32> to vector<8x1xf32>
    %46 = vector.broadcast %45 : vector<8x1xf32> to vector<8x8xf32>
    %47 = arith.divf %43, %46 : vector<8x8xf32>
    %cst_22 = arith.constant dense<0.000000e+00> : vector<8x8xf32>
    %48 = tpu.matmul %47, %35, %cst_22 {dimension_numbers = #tpu.dot_dimension_numbers<[1], [0], [0], [1], [0, 0, 1, 1], [], []>} : vector<8x8xf32>, vector<8x8xf32>, vector<8x8xf32> -> vector<8x8xf32>
    %49 = vector.extract_strided_slice %14 {offsets = [0, 16], sizes = [8, 8], strides = [1, 1]} : vector<8x32xf32> to vector<8x8xf32>
    %50 = vector.extract_strided_slice %15 {offsets = [0, 16], sizes = [8, 8], strides = [1, 1]} : vector<8x32xf32> to vector<8x8xf32>
    %51 = vector.extract_strided_slice %16 {offsets = [0, 16], sizes = [8, 8], strides = [1, 1]} : vector<8x32xf32> to vector<8x8xf32>
    %cst_23 = arith.constant dense<0.000000e+00> : vector<8x8xf32>
    %52 = tpu.matmul %49, %50, %cst_23 {dimension_numbers = #tpu.dot_dimension_numbers<[1], [1], [0], [0], [0, 0, 1, 0], [], []>} : vector<8x8xf32>, vector<8x8xf32>, vector<8x8xf32> -> vector<8x8xf32>
    %cst_24 = arith.constant 0.353553385 : f32
    %53 = vector.broadcast %cst_24 : f32 to vector<8x8xf32>
    %54 = arith.mulf %52, %53 : vector<8x8xf32>
    %cst_25 = arith.constant dense<0xFF800000> : vector<8xf32>
    %55 = vector.multi_reduction <maximumf>, %54, %cst_25 [1] : vector<8x8xf32> to vector<8xf32>
    %56 = vector.shape_cast %55 : vector<8xf32> to vector<8x1xf32>
    %57 = vector.broadcast %56 : vector<8x1xf32> to vector<8x8xf32>
    %58 = arith.subf %54, %57 : vector<8x8xf32>
    %59 = math.exp %58 : vector<8x8xf32>
    %cst_26 = arith.constant dense<0.000000e+00> : vector<8xf32>
    %60 = vector.multi_reduction <add>, %59, %cst_26 [1] : vector<8x8xf32> to vector<8xf32>
    %61 = vector.shape_cast %60 : vector<8xf32> to vector<8x1xf32>
    %62 = vector.broadcast %61 : vector<8x1xf32> to vector<8x8xf32>
    %63 = arith.divf %59, %62 : vector<8x8xf32>
    %cst_27 = arith.constant dense<0.000000e+00> : vector<8x8xf32>
    %64 = tpu.matmul %63, %51, %cst_27 {dimension_numbers = #tpu.dot_dimension_numbers<[1], [0], [0], [1], [0, 0, 1, 1], [], []>} : vector<8x8xf32>, vector<8x8xf32>, vector<8x8xf32> -> vector<8x8xf32>
    %65 = vector.extract_strided_slice %14 {offsets = [0, 24], sizes = [8, 8], strides = [1, 1]} : vector<8x32xf32> to vector<8x8xf32>
    %66 = vector.extract_strided_slice %15 {offsets = [0, 24], sizes = [8, 8], strides = [1, 1]} : vector<8x32xf32> to vector<8x8xf32>
    %67 = vector.extract_strided_slice %16 {offsets = [0, 24], sizes = [8, 8], strides = [1, 1]} : vector<8x32xf32> to vector<8x8xf32>
    %cst_28 = arith.constant dense<0.000000e+00> : vector<8x8xf32>
    %68 = tpu.matmul %65, %66, %cst_28 {dimension_numbers = #tpu.dot_dimension_numbers<[1], [1], [0], [0], [0, 0, 1, 0], [], []>} : vector<8x8xf32>, vector<8x8xf32>, vector<8x8xf32> -> vector<8x8xf32>
    %cst_29 = arith.constant 0.353553385 : f32
    %69 = vector.broadcast %cst_29 : f32 to vector<8x8xf32>
    %70 = arith.mulf %68, %69 : vector<8x8xf32>
    %cst_30 = arith.constant dense<0xFF800000> : vector<8xf32>
    %71 = vector.multi_reduction <maximumf>, %70, %cst_30 [1] : vector<8x8xf32> to vector<8xf32>
    %72 = vector.shape_cast %71 : vector<8xf32> to vector<8x1xf32>
    %73 = vector.broadcast %72 : vector<8x1xf32> to vector<8x8xf32>
    %74 = arith.subf %70, %73 : vector<8x8xf32>
    %75 = math.exp %74 : vector<8x8xf32>
    %cst_31 = arith.constant dense<0.000000e+00> : vector<8xf32>
    %76 = vector.multi_reduction <add>, %75, %cst_31 [1] : vector<8x8xf32> to vector<8xf32>
    %77 = vector.shape_cast %76 : vector<8xf32> to vector<8x1xf32>
    %78 = vector.broadcast %77 : vector<8x1xf32> to vector<8x8xf32>
    %79 = arith.divf %75, %78 : vector<8x8xf32>
    %cst_32 = arith.constant dense<0.000000e+00> : vector<8x8xf32>
    %80 = tpu.matmul %79, %67, %cst_32 {dimension_numbers = #tpu.dot_dimension_numbers<[1], [0], [0], [1], [0, 0, 1, 1], [], []>} : vector<8x8xf32>, vector<8x8xf32>, vector<8x8xf32> -> vector<8x8xf32>
    %81 = tpu.concatenate %32, %48, %64, %80 in 1 : vector<8x8xf32>, vector<8x8xf32>, vector<8x8xf32>, vector<8x8xf32> -> vector<8x32xf32>
    %c0_33 = arith.constant 0 : index
    %c0_34 = arith.constant 0 : index
    %c0_35 = arith.constant 0 : index
    %82 = vector.load %arg6[%c0_33, %c0_34, %c0_35] : memref<2x32x32xf32, #tpu.memory_space<vmem>>, vector<1x32x32xf32>
    %83 = vector.shape_cast %82 : vector<1x32x32xf32> to vector<32x32xf32>
    %cst_36 = arith.constant dense<0.000000e+00> : vector<8x32xf32>
    %84 = tpu.matmul %81, %83, %cst_36 {dimension_numbers = #tpu.dot_dimension_numbers<[1], [0], [0], [1], [0, 0, 1, 1], [], []>} : vector<8x32xf32>, vector<32x32xf32>, vector<8x32xf32> -> vector<8x32xf32>
    %c0_37 = arith.constant 0 : index
    %c0_38 = arith.constant 0 : index
    %c0_39 = arith.constant 0 : index
    %85 = vector.load %arg7[%c0_37, %c0_38, %c0_39] : memref<2x1x32xf32, #tpu.memory_space<vmem>>, vector<1x1x32xf32>
    %86 = vector.shape_cast %85 : vector<1x1x32xf32> to vector<1x32xf32>
    %87 = vector.broadcast %86 : vector<1x32xf32> to vector<8x32xf32>
    %88 = arith.addf %84, %87 : vector<8x32xf32>
    %89 = arith.addf %6, %88 : vector<8x32xf32>
    %c0_40 = arith.constant 0 : index
    %c0_41 = arith.constant 0 : index
    %c0_42 = arith.constant 0 : index
    %90 = vector.load %arg8[%c0_40, %c0_41, %c0_42] : memref<2x1x32xf32, #tpu.memory_space<vmem>>, vector<1x1x32xf32>
    %91 = vector.shape_cast %90 : vector<1x1x32xf32> to vector<1x32xf32>
    %c0_43 = arith.constant 0 : index
    %c0_44 = arith.constant 0 : index
    %c0_45 = arith.constant 0 : index
    %92 = vector.load %arg9[%c0_43, %c0_44, %c0_45] : memref<2x1x32xf32, #tpu.memory_space<vmem>>, vector<1x1x32xf32>
    %93 = vector.shape_cast %92 : vector<1x1x32xf32> to vector<1x32xf32>
    %cst_46 = arith.constant dense<0.000000e+00> : vector<8xf32>
    %94 = vector.multi_reduction <add>, %89, %cst_46 [1] : vector<8x32xf32> to vector<8xf32>
    %95 = vector.shape_cast %94 : vector<8xf32> to vector<8x1xf32>
    %cst_47 = arith.constant 3.200000e+01 : f32
    %96 = vector.broadcast %cst_47 : f32 to vector<8x1xf32>
    %97 = arith.divf %95, %96 : vector<8x1xf32>
    %98 = vector.broadcast %97 : vector<8x1xf32> to vector<8x32xf32>
    %99 = arith.subf %89, %98 : vector<8x32xf32>
    %100 = arith.mulf %99, %99 : vector<8x32xf32>
    %cst_48 = arith.constant dense<0.000000e+00> : vector<8xf32>
    %101 = vector.multi_reduction <add>, %100, %cst_48 [1] : vector<8x32xf32> to vector<8xf32>
    %102 = vector.shape_cast %101 : vector<8xf32> to vector<8x1xf32>
    %cst_49 = arith.constant 3.200000e+01 : f32
    %103 = vector.broadcast %cst_49 : f32 to vector<8x1xf32>
    %104 = arith.divf %102, %103 : vector<8x1xf32>
    %105 = vector.broadcast %97 : vector<8x1xf32> to vector<8x32xf32>
    %106 = arith.subf %89, %105 : vector<8x32xf32>
    %cst_50 = arith.constant 9.99999974E-6 : f32
    %107 = vector.broadcast %cst_50 : f32 to vector<8x1xf32>
    %108 = arith.addf %104, %107 : vector<8x1xf32>
    %109 = math.rsqrt %108 : vector<8x1xf32>
    %110 = vector.broadcast %109 : vector<8x1xf32> to vector<8x32xf32>
    %111 = arith.mulf %106, %110 : vector<8x32xf32>
    %112 = vector.broadcast %91 : vector<1x32xf32> to vector<8x32xf32>
    %113 = arith.mulf %111, %112 : vector<8x32xf32>
    %114 = vector.broadcast %93 : vector<1x32xf32> to vector<8x32xf32>
    %115 = arith.addf %113, %114 : vector<8x32xf32>
    %c0_51 = arith.constant 0 : index
    %c0_52 = arith.constant 0 : index
    %c0_53 = arith.constant 0 : index
    %116 = vector.load %arg10[%c0_51, %c0_52, %c0_53] : memref<2x32x64xf32, #tpu.memory_space<vmem>>, vector<1x32x64xf32>
    %117 = vector.shape_cast %116 : vector<1x32x64xf32> to vector<32x64xf32>
    %cst_54 = arith.constant dense<0.000000e+00> : vector<8x64xf32>
    %118 = tpu.matmul %115, %117, %cst_54 {dimension_numbers = #tpu.dot_dimension_numbers<[1], [0], [0], [1], [0, 0, 1, 1], [], []>} : vector<8x32xf32>, vector<32x64xf32>, vector<8x64xf32> -> vector<8x64xf32>
    %c0_55 = arith.constant 0 : index
    %c0_56 = arith.constant 0 : index
    %c0_57 = arith.constant 0 : index
    %119 = vector.load %arg11[%c0_55, %c0_56, %c0_57] : memref<2x1x64xf32, #tpu.memory_space<vmem>>, vector<1x1x64xf32>
    %120 = vector.shape_cast %119 : vector<1x1x64xf32> to vector<1x64xf32>
    %121 = vector.broadcast %120 : vector<1x64xf32> to vector<8x64xf32>
    %122 = arith.addf %118, %121 : vector<8x64xf32>
    %cst_58 = arith.constant 0.000000e+00 : f32
    %123 = vector.broadcast %cst_58 : f32 to vector<8x64xf32>
    %124 = arith.maximumf %122, %123 : vector<8x64xf32>
    %c0_59 = arith.constant 0 : index
    %c0_60 = arith.constant 0 : index
    %c0_61 = arith.constant 0 : index
    %125 = vector.load %arg12[%c0_59, %c0_60, %c0_61] : memref<2x64x32xf32, #tpu.memory_space<vmem>>, vector<1x64x32xf32>
    %126 = vector.shape_cast %125 : vector<1x64x32xf32> to vector<64x32xf32>
    %cst_62 = arith.constant dense<0.000000e+00> : vector<8x32xf32>
    %127 = tpu.matmul %124, %126, %cst_62 {dimension_numbers = #tpu.dot_dimension_numbers<[1], [0], [0], [1], [0, 0, 1, 1], [], []>} : vector<8x64xf32>, vector<64x32xf32>, vector<8x32xf32> -> vector<8x32xf32>
    %c0_63 = arith.constant 0 : index
    %c0_64 = arith.constant 0 : index
    %c0_65 = arith.constant 0 : index
    %128 = vector.load %arg13[%c0_63, %c0_64, %c0_65] : memref<2x1x32xf32, #tpu.memory_space<vmem>>, vector<1x1x32xf32>
    %129 = vector.shape_cast %128 : vector<1x1x32xf32> to vector<1x32xf32>
    %130 = vector.broadcast %129 : vector<1x32xf32> to vector<8x32xf32>
    %131 = arith.addf %127, %130 : vector<8x32xf32>
    %132 = arith.addf %115, %131 : vector<8x32xf32>
    %c0_66 = arith.constant 0 : index
    %c0_67 = arith.constant 0 : index
    %c0_68 = arith.constant 0 : index
    %133 = vector.load %arg14[%c0_66, %c0_67, %c0_68] : memref<2x1x32xf32, #tpu.memory_space<vmem>>, vector<1x1x32xf32>
    %134 = vector.shape_cast %133 : vector<1x1x32xf32> to vector<1x32xf32>
    %c0_69 = arith.constant 0 : index
    %c0_70 = arith.constant 0 : index
    %c0_71 = arith.constant 0 : index
    %135 = vector.load %arg15[%c0_69, %c0_70, %c0_71] : memref<2x1x32xf32, #tpu.memory_space<vmem>>, vector<1x1x32xf32>
    %136 = vector.shape_cast %135 : vector<1x1x32xf32> to vector<1x32xf32>
    %cst_72 = arith.constant dense<0.000000e+00> : vector<8xf32>
    %137 = vector.multi_reduction <add>, %132, %cst_72 [1] : vector<8x32xf32> to vector<8xf32>
    %138 = vector.shape_cast %137 : vector<8xf32> to vector<8x1xf32>
    %cst_73 = arith.constant 3.200000e+01 : f32
    %139 = vector.broadcast %cst_73 : f32 to vector<8x1xf32>
    %140 = arith.divf %138, %139 : vector<8x1xf32>
    %141 = vector.broadcast %140 : vector<8x1xf32> to vector<8x32xf32>
    %142 = arith.subf %132, %141 : vector<8x32xf32>
    %143 = arith.mulf %142, %142 : vector<8x32xf32>
    %cst_74 = arith.constant dense<0.000000e+00> : vector<8xf32>
    %144 = vector.multi_reduction <add>, %143, %cst_74 [1] : vector<8x32xf32> to vector<8xf32>
    %145 = vector.shape_cast %144 : vector<8xf32> to vector<8x1xf32>
    %cst_75 = arith.constant 3.200000e+01 : f32
    %146 = vector.broadcast %cst_75 : f32 to vector<8x1xf32>
    %147 = arith.divf %145, %146 : vector<8x1xf32>
    %148 = vector.broadcast %140 : vector<8x1xf32> to vector<8x32xf32>
    %149 = arith.subf %132, %148 : vector<8x32xf32>
    %cst_76 = arith.constant 9.99999974E-6 : f32
    %150 = vector.broadcast %cst_76 : f32 to vector<8x1xf32>
    %151 = arith.addf %147, %150 : vector<8x1xf32>
    %152 = math.rsqrt %151 : vector<8x1xf32>
    %153 = vector.broadcast %152 : vector<8x1xf32> to vector<8x32xf32>
    %154 = arith.mulf %149, %153 : vector<8x32xf32>
    %155 = vector.broadcast %134 : vector<1x32xf32> to vector<8x32xf32>
    %156 = arith.mulf %154, %155 : vector<8x32xf32>
    %157 = vector.broadcast %136 : vector<1x32xf32> to vector<8x32xf32>
    %158 = arith.addf %156, %157 : vector<8x32xf32>
    %c1 = arith.constant 1 : index
    %c0_77 = arith.constant 0 : index
    %c0_78 = arith.constant 0 : index
    %159 = vector.load %arg4[%c1, %c0_77, %c0_78] : memref<2x32x96xf32, #tpu.memory_space<vmem>>, vector<1x32x96xf32>
    %160 = vector.shape_cast %159 : vector<1x32x96xf32> to vector<32x96xf32>
    %cst_79 = arith.constant dense<0.000000e+00> : vector<8x96xf32>
    %161 = tpu.matmul %158, %160, %cst_79 {dimension_numbers = #tpu.dot_dimension_numbers<[1], [0], [0], [1], [0, 0, 1, 1], [], []>} : vector<8x32xf32>, vector<32x96xf32>, vector<8x96xf32> -> vector<8x96xf32>
    %c1_80 = arith.constant 1 : index
    %c0_81 = arith.constant 0 : index
    %c0_82 = arith.constant 0 : index
    %162 = vector.load %arg5[%c1_80, %c0_81, %c0_82] : memref<2x1x96xf32, #tpu.memory_space<vmem>>, vector<1x1x96xf32>
    %163 = vector.shape_cast %162 : vector<1x1x96xf32> to vector<1x96xf32>
    %164 = vector.broadcast %163 : vector<1x96xf32> to vector<8x96xf32>
    %165 = arith.addf %161, %164 : vector<8x96xf32>
    %166 = vector.extract_strided_slice %165 {offsets = [0, 0], sizes = [8, 32], strides = [1, 1]} : vector<8x96xf32> to vector<8x32xf32>
    %167 = vector.extract_strided_slice %165 {offsets = [0, 32], sizes = [8, 32], strides = [1, 1]} : vector<8x96xf32> to vector<8x32xf32>
    %168 = vector.extract_strided_slice %165 {offsets = [0, 64], sizes = [8, 32], strides = [1, 1]} : vector<8x96xf32> to vector<8x32xf32>
    %169 = vector.extract_strided_slice %166 {offsets = [0, 0], sizes = [8, 8], strides = [1, 1]} : vector<8x32xf32> to vector<8x8xf32>
    %170 = vector.extract_strided_slice %167 {offsets = [0, 0], sizes = [8, 8], strides = [1, 1]} : vector<8x32xf32> to vector<8x8xf32>
    %171 = vector.extract_strided_slice %168 {offsets = [0, 0], sizes = [8, 8], strides = [1, 1]} : vector<8x32xf32> to vector<8x8xf32>
    %cst_83 = arith.constant dense<0.000000e+00> : vector<8x8xf32>
    %172 = tpu.matmul %169, %170, %cst_83 {dimension_numbers = #tpu.dot_dimension_numbers<[1], [1], [0], [0], [0, 0, 1, 0], [], []>} : vector<8x8xf32>, vector<8x8xf32>, vector<8x8xf32> -> vector<8x8xf32>
    %cst_84 = arith.constant 0.353553385 : f32
    %173 = vector.broadcast %cst_84 : f32 to vector<8x8xf32>
    %174 = arith.mulf %172, %173 : vector<8x8xf32>
    %cst_85 = arith.constant dense<0xFF800000> : vector<8xf32>
    %175 = vector.multi_reduction <maximumf>, %174, %cst_85 [1] : vector<8x8xf32> to vector<8xf32>
    %176 = vector.shape_cast %175 : vector<8xf32> to vector<8x1xf32>
    %177 = vector.broadcast %176 : vector<8x1xf32> to vector<8x8xf32>
    %178 = arith.subf %174, %177 : vector<8x8xf32>
    %179 = math.exp %178 : vector<8x8xf32>
    %cst_86 = arith.constant dense<0.000000e+00> : vector<8xf32>
    %180 = vector.multi_reduction <add>, %179, %cst_86 [1] : vector<8x8xf32> to vector<8xf32>
    %181 = vector.shape_cast %180 : vector<8xf32> to vector<8x1xf32>
    %182 = vector.broadcast %181 : vector<8x1xf32> to vector<8x8xf32>
    %183 = arith.divf %179, %182 : vector<8x8xf32>
    %cst_87 = arith.constant dense<0.000000e+00> : vector<8x8xf32>
    %184 = tpu.matmul %183, %171, %cst_87 {dimension_numbers = #tpu.dot_dimension_numbers<[1], [0], [0], [1], [0, 0, 1, 1], [], []>} : vector<8x8xf32>, vector<8x8xf32>, vector<8x8xf32> -> vector<8x8xf32>
    %185 = vector.extract_strided_slice %166 {offsets = [0, 8], sizes = [8, 8], strides = [1, 1]} : vector<8x32xf32> to vector<8x8xf32>
    %186 = vector.extract_strided_slice %167 {offsets = [0, 8], sizes = [8, 8], strides = [1, 1]} : vector<8x32xf32> to vector<8x8xf32>
    %187 = vector.extract_strided_slice %168 {offsets = [0, 8], sizes = [8, 8], strides = [1, 1]} : vector<8x32xf32> to vector<8x8xf32>
    %cst_88 = arith.constant dense<0.000000e+00> : vector<8x8xf32>
    %188 = tpu.matmul %185, %186, %cst_88 {dimension_numbers = #tpu.dot_dimension_numbers<[1], [1], [0], [0], [0, 0, 1, 0], [], []>} : vector<8x8xf32>, vector<8x8xf32>, vector<8x8xf32> -> vector<8x8xf32>
    %cst_89 = arith.constant 0.353553385 : f32
    %189 = vector.broadcast %cst_89 : f32 to vector<8x8xf32>
    %190 = arith.mulf %188, %189 : vector<8x8xf32>
    %cst_90 = arith.constant dense<0xFF800000> : vector<8xf32>
    %191 = vector.multi_reduction <maximumf>, %190, %cst_90 [1] : vector<8x8xf32> to vector<8xf32>
    %192 = vector.shape_cast %191 : vector<8xf32> to vector<8x1xf32>
    %193 = vector.broadcast %192 : vector<8x1xf32> to vector<8x8xf32>
    %194 = arith.subf %190, %193 : vector<8x8xf32>
    %195 = math.exp %194 : vector<8x8xf32>
    %cst_91 = arith.constant dense<0.000000e+00> : vector<8xf32>
    %196 = vector.multi_reduction <add>, %195, %cst_91 [1] : vector<8x8xf32> to vector<8xf32>
    %197 = vector.shape_cast %196 : vector<8xf32> to vector<8x1xf32>
    %198 = vector.broadcast %197 : vector<8x1xf32> to vector<8x8xf32>
    %199 = arith.divf %195, %198 : vector<8x8xf32>
    %cst_92 = arith.constant dense<0.000000e+00> : vector<8x8xf32>
    %200 = tpu.matmul %199, %187, %cst_92 {dimension_numbers = #tpu.dot_dimension_numbers<[1], [0], [0], [1], [0, 0, 1, 1], [], []>} : vector<8x8xf32>, vector<8x8xf32>, vector<8x8xf32> -> vector<8x8xf32>
    %201 = vector.extract_strided_slice %166 {offsets = [0, 16], sizes = [8, 8], strides = [1, 1]} : vector<8x32xf32> to vector<8x8xf32>
    %202 = vector.extract_strided_slice %167 {offsets = [0, 16], sizes = [8, 8], strides = [1, 1]} : vector<8x32xf32> to vector<8x8xf32>
    %203 = vector.extract_strided_slice %168 {offsets = [0, 16], sizes = [8, 8], strides = [1, 1]} : vector<8x32xf32> to vector<8x8xf32>
    %cst_93 = arith.constant dense<0.000000e+00> : vector<8x8xf32>
    %204 = tpu.matmul %201, %202, %cst_93 {dimension_numbers = #tpu.dot_dimension_numbers<[1], [1], [0], [0], [0, 0, 1, 0], [], []>} : vector<8x8xf32>, vector<8x8xf32>, vector<8x8xf32> -> vector<8x8xf32>
    %cst_94 = arith.constant 0.353553385 : f32
    %205 = vector.broadcast %cst_94 : f32 to vector<8x8xf32>
    %206 = arith.mulf %204, %205 : vector<8x8xf32>
    %cst_95 = arith.constant dense<0xFF800000> : vector<8xf32>
    %207 = vector.multi_reduction <maximumf>, %206, %cst_95 [1] : vector<8x8xf32> to vector<8xf32>
    %208 = vector.shape_cast %207 : vector<8xf32> to vector<8x1xf32>
    %209 = vector.broadcast %208 : vector<8x1xf32> to vector<8x8xf32>
    %210 = arith.subf %206, %209 : vector<8x8xf32>
    %211 = math.exp %210 : vector<8x8xf32>
    %cst_96 = arith.constant dense<0.000000e+00> : vector<8xf32>
    %212 = vector.multi_reduction <add>, %211, %cst_96 [1] : vector<8x8xf32> to vector<8xf32>
    %213 = vector.shape_cast %212 : vector<8xf32> to vector<8x1xf32>
    %214 = vector.broadcast %213 : vector<8x1xf32> to vector<8x8xf32>
    %215 = arith.divf %211, %214 : vector<8x8xf32>
    %cst_97 = arith.constant dense<0.000000e+00> : vector<8x8xf32>
    %216 = tpu.matmul %215, %203, %cst_97 {dimension_numbers = #tpu.dot_dimension_numbers<[1], [0], [0], [1], [0, 0, 1, 1], [], []>} : vector<8x8xf32>, vector<8x8xf32>, vector<8x8xf32> -> vector<8x8xf32>
    %217 = vector.extract_strided_slice %166 {offsets = [0, 24], sizes = [8, 8], strides = [1, 1]} : vector<8x32xf32> to vector<8x8xf32>
    %218 = vector.extract_strided_slice %167 {offsets = [0, 24], sizes = [8, 8], strides = [1, 1]} : vector<8x32xf32> to vector<8x8xf32>
    %219 = vector.extract_strided_slice %168 {offsets = [0, 24], sizes = [8, 8], strides = [1, 1]} : vector<8x32xf32> to vector<8x8xf32>
    %cst_98 = arith.constant dense<0.000000e+00> : vector<8x8xf32>
    %220 = tpu.matmul %217, %218, %cst_98 {dimension_numbers = #tpu.dot_dimension_numbers<[1], [1], [0], [0], [0, 0, 1, 0], [], []>} : vector<8x8xf32>, vector<8x8xf32>, vector<8x8xf32> -> vector<8x8xf32>
    %cst_99 = arith.constant 0.353553385 : f32
    %221 = vector.broadcast %cst_99 : f32 to vector<8x8xf32>
    %222 = arith.mulf %220, %221 : vector<8x8xf32>
    %cst_100 = arith.constant dense<0xFF800000> : vector<8xf32>
    %223 = vector.multi_reduction <maximumf>, %222, %cst_100 [1] : vector<8x8xf32> to vector<8xf32>
    %224 = vector.shape_cast %223 : vector<8xf32> to vector<8x1xf32>
    %225 = vector.broadcast %224 : vector<8x1xf32> to vector<8x8xf32>
    %226 = arith.subf %222, %225 : vector<8x8xf32>
    %227 = math.exp %226 : vector<8x8xf32>
    %cst_101 = arith.constant dense<0.000000e+00> : vector<8xf32>
    %228 = vector.multi_reduction <add>, %227, %cst_101 [1] : vector<8x8xf32> to vector<8xf32>
    %229 = vector.shape_cast %228 : vector<8xf32> to vector<8x1xf32>
    %230 = vector.broadcast %229 : vector<8x1xf32> to vector<8x8xf32>
    %231 = arith.divf %227, %230 : vector<8x8xf32>
    %cst_102 = arith.constant dense<0.000000e+00> : vector<8x8xf32>
    %232 = tpu.matmul %231, %219, %cst_102 {dimension_numbers = #tpu.dot_dimension_numbers<[1], [0], [0], [1], [0, 0, 1, 1], [], []>} : vector<8x8xf32>, vector<8x8xf32>, vector<8x8xf32> -> vector<8x8xf32>
    %233 = tpu.concatenate %184, %200, %216, %232 in 1 : vector<8x8xf32>, vector<8x8xf32>, vector<8x8xf32>, vector<8x8xf32> -> vector<8x32xf32>
    %c1_103 = arith.constant 1 : index
    %c0_104 = arith.constant 0 : index
    %c0_105 = arith.constant 0 : index
    %234 = vector.load %arg6[%c1_103, %c0_104, %c0_105] : memref<2x32x32xf32, #tpu.memory_space<vmem>>, vector<1x32x32xf32>
    %235 = vector.shape_cast %234 : vector<1x32x32xf32> to vector<32x32xf32>
    %cst_106 = arith.constant dense<0.000000e+00> : vector<8x32xf32>
    %236 = tpu.matmul %233, %235, %cst_106 {dimension_numbers = #tpu.dot_dimension_numbers<[1], [0], [0], [1], [0, 0, 1, 1], [], []>} : vector<8x32xf32>, vector<32x32xf32>, vector<8x32xf32> -> vector<8x32xf32>
    %c1_107 = arith.constant 1 : index
    %c0_108 = arith.constant 0 : index
    %c0_109 = arith.constant 0 : index
    %237 = vector.load %arg7[%c1_107, %c0_108, %c0_109] : memref<2x1x32xf32, #tpu.memory_space<vmem>>, vector<1x1x32xf32>
    %238 = vector.shape_cast %237 : vector<1x1x32xf32> to vector<1x32xf32>
    %239 = vector.broadcast %238 : vector<1x32xf32> to vector<8x32xf32>
    %240 = arith.addf %236, %239 : vector<8x32xf32>
    %241 = arith.addf %158, %240 : vector<8x32xf32>
    %c1_110 = arith.constant 1 : index
    %c0_111 = arith.constant 0 : index
    %c0_112 = arith.constant 0 : index
    %242 = vector.load %arg8[%c1_110, %c0_111, %c0_112] : memref<2x1x32xf32, #tpu.memory_space<vmem>>, vector<1x1x32xf32>
    %243 = vector.shape_cast %242 : vector<1x1x32xf32> to vector<1x32xf32>
    %c1_113 = arith.constant 1 : index
    %c0_114 = arith.constant 0 : index
    %c0_115 = arith.constant 0 : index
    %244 = vector.load %arg9[%c1_113, %c0_114, %c0_115] : memref<2x1x32xf32, #tpu.memory_space<vmem>>, vector<1x1x32xf32>
    %245 = vector.shape_cast %244 : vector<1x1x32xf32> to vector<1x32xf32>
    %cst_116 = arith.constant dense<0.000000e+00> : vector<8xf32>
    %246 = vector.multi_reduction <add>, %241, %cst_116 [1] : vector<8x32xf32> to vector<8xf32>
    %247 = vector.shape_cast %246 : vector<8xf32> to vector<8x1xf32>
    %cst_117 = arith.constant 3.200000e+01 : f32
    %248 = vector.broadcast %cst_117 : f32 to vector<8x1xf32>
    %249 = arith.divf %247, %248 : vector<8x1xf32>
    %250 = vector.broadcast %249 : vector<8x1xf32> to vector<8x32xf32>
    %251 = arith.subf %241, %250 : vector<8x32xf32>
    %252 = arith.mulf %251, %251 : vector<8x32xf32>
    %cst_118 = arith.constant dense<0.000000e+00> : vector<8xf32>
    %253 = vector.multi_reduction <add>, %252, %cst_118 [1] : vector<8x32xf32> to vector<8xf32>
    %254 = vector.shape_cast %253 : vector<8xf32> to vector<8x1xf32>
    %cst_119 = arith.constant 3.200000e+01 : f32
    %255 = vector.broadcast %cst_119 : f32 to vector<8x1xf32>
    %256 = arith.divf %254, %255 : vector<8x1xf32>
    %257 = vector.broadcast %249 : vector<8x1xf32> to vector<8x32xf32>
    %258 = arith.subf %241, %257 : vector<8x32xf32>
    %cst_120 = arith.constant 9.99999974E-6 : f32
    %259 = vector.broadcast %cst_120 : f32 to vector<8x1xf32>
    %260 = arith.addf %256, %259 : vector<8x1xf32>
    %261 = math.rsqrt %260 : vector<8x1xf32>
    %262 = vector.broadcast %261 : vector<8x1xf32> to vector<8x32xf32>
    %263 = arith.mulf %258, %262 : vector<8x32xf32>
    %264 = vector.broadcast %243 : vector<1x32xf32> to vector<8x32xf32>
    %265 = arith.mulf %263, %264 : vector<8x32xf32>
    %266 = vector.broadcast %245 : vector<1x32xf32> to vector<8x32xf32>
    %267 = arith.addf %265, %266 : vector<8x32xf32>
    %c1_121 = arith.constant 1 : index
    %c0_122 = arith.constant 0 : index
    %c0_123 = arith.constant 0 : index
    %268 = vector.load %arg10[%c1_121, %c0_122, %c0_123] : memref<2x32x64xf32, #tpu.memory_space<vmem>>, vector<1x32x64xf32>
    %269 = vector.shape_cast %268 : vector<1x32x64xf32> to vector<32x64xf32>
    %cst_124 = arith.constant dense<0.000000e+00> : vector<8x64xf32>
    %270 = tpu.matmul %267, %269, %cst_124 {dimension_numbers = #tpu.dot_dimension_numbers<[1], [0], [0], [1], [0, 0, 1, 1], [], []>} : vector<8x32xf32>, vector<32x64xf32>, vector<8x64xf32> -> vector<8x64xf32>
    %c1_125 = arith.constant 1 : index
    %c0_126 = arith.constant 0 : index
    %c0_127 = arith.constant 0 : index
    %271 = vector.load %arg11[%c1_125, %c0_126, %c0_127] : memref<2x1x64xf32, #tpu.memory_space<vmem>>, vector<1x1x64xf32>
    %272 = vector.shape_cast %271 : vector<1x1x64xf32> to vector<1x64xf32>
    %273 = vector.broadcast %272 : vector<1x64xf32> to vector<8x64xf32>
    %274 = arith.addf %270, %273 : vector<8x64xf32>
    %cst_128 = arith.constant 0.000000e+00 : f32
    %275 = vector.broadcast %cst_128 : f32 to vector<8x64xf32>
    %276 = arith.maximumf %274, %275 : vector<8x64xf32>
    %c1_129 = arith.constant 1 : index
    %c0_130 = arith.constant 0 : index
    %c0_131 = arith.constant 0 : index
    %277 = vector.load %arg12[%c1_129, %c0_130, %c0_131] : memref<2x64x32xf32, #tpu.memory_space<vmem>>, vector<1x64x32xf32>
    %278 = vector.shape_cast %277 : vector<1x64x32xf32> to vector<64x32xf32>
    %cst_132 = arith.constant dense<0.000000e+00> : vector<8x32xf32>
    %279 = tpu.matmul %276, %278, %cst_132 {dimension_numbers = #tpu.dot_dimension_numbers<[1], [0], [0], [1], [0, 0, 1, 1], [], []>} : vector<8x64xf32>, vector<64x32xf32>, vector<8x32xf32> -> vector<8x32xf32>
    %c1_133 = arith.constant 1 : index
    %c0_134 = arith.constant 0 : index
    %c0_135 = arith.constant 0 : index
    %280 = vector.load %arg13[%c1_133, %c0_134, %c0_135] : memref<2x1x32xf32, #tpu.memory_space<vmem>>, vector<1x1x32xf32>
    %281 = vector.shape_cast %280 : vector<1x1x32xf32> to vector<1x32xf32>
    %282 = vector.broadcast %281 : vector<1x32xf32> to vector<8x32xf32>
    %283 = arith.addf %279, %282 : vector<8x32xf32>
    %284 = arith.addf %267, %283 : vector<8x32xf32>
    %c1_136 = arith.constant 1 : index
    %c0_137 = arith.constant 0 : index
    %c0_138 = arith.constant 0 : index
    %285 = vector.load %arg14[%c1_136, %c0_137, %c0_138] : memref<2x1x32xf32, #tpu.memory_space<vmem>>, vector<1x1x32xf32>
    %286 = vector.shape_cast %285 : vector<1x1x32xf32> to vector<1x32xf32>
    %c1_139 = arith.constant 1 : index
    %c0_140 = arith.constant 0 : index
    %c0_141 = arith.constant 0 : index
    %287 = vector.load %arg15[%c1_139, %c0_140, %c0_141] : memref<2x1x32xf32, #tpu.memory_space<vmem>>, vector<1x1x32xf32>
    %288 = vector.shape_cast %287 : vector<1x1x32xf32> to vector<1x32xf32>
    %cst_142 = arith.constant dense<0.000000e+00> : vector<8xf32>
    %289 = vector.multi_reduction <add>, %284, %cst_142 [1] : vector<8x32xf32> to vector<8xf32>
    %290 = vector.shape_cast %289 : vector<8xf32> to vector<8x1xf32>
    %cst_143 = arith.constant 3.200000e+01 : f32
    %291 = vector.broadcast %cst_143 : f32 to vector<8x1xf32>
    %292 = arith.divf %290, %291 : vector<8x1xf32>
    %293 = vector.broadcast %292 : vector<8x1xf32> to vector<8x32xf32>
    %294 = arith.subf %284, %293 : vector<8x32xf32>
    %295 = arith.mulf %294, %294 : vector<8x32xf32>
    %cst_144 = arith.constant dense<0.000000e+00> : vector<8xf32>
    %296 = vector.multi_reduction <add>, %295, %cst_144 [1] : vector<8x32xf32> to vector<8xf32>
    %297 = vector.shape_cast %296 : vector<8xf32> to vector<8x1xf32>
    %cst_145 = arith.constant 3.200000e+01 : f32
    %298 = vector.broadcast %cst_145 : f32 to vector<8x1xf32>
    %299 = arith.divf %297, %298 : vector<8x1xf32>
    %300 = vector.broadcast %292 : vector<8x1xf32> to vector<8x32xf32>
    %301 = arith.subf %284, %300 : vector<8x32xf32>
    %cst_146 = arith.constant 9.99999974E-6 : f32
    %302 = vector.broadcast %cst_146 : f32 to vector<8x1xf32>
    %303 = arith.addf %299, %302 : vector<8x1xf32>
    %304 = math.rsqrt %303 : vector<8x1xf32>
    %305 = vector.broadcast %304 : vector<8x1xf32> to vector<8x32xf32>
    %306 = arith.mulf %301, %305 : vector<8x32xf32>
    %307 = vector.broadcast %286 : vector<1x32xf32> to vector<8x32xf32>
    %308 = arith.mulf %306, %307 : vector<8x32xf32>
    %309 = vector.broadcast %288 : vector<1x32xf32> to vector<8x32xf32>
    %310 = arith.addf %308, %309 : vector<8x32xf32>
    %311 = vector.extract_strided_slice %310 {offsets = [7, 0], sizes = [1, 32], strides = [1, 1]} : vector<8x32xf32> to vector<1x32xf32>
    %c0_147 = arith.constant 0 : index
    %c0_148 = arith.constant 0 : index
    %312 = vector.load %arg16[%c0_147, %c0_148] : memref<32x32xf32, #tpu.memory_space<vmem>>, vector<32x32xf32>
    %cst_149 = arith.constant dense<0.000000e+00> : vector<1x32xf32>
    %313 = tpu.matmul %311, %312, %cst_149 {dimension_numbers = #tpu.dot_dimension_numbers<[1], [0], [0], [1], [0, 0, 1, 1], [], []>} : vector<1x32xf32>, vector<32x32xf32>, vector<1x32xf32> -> vector<1x32xf32>
    %c0_150 = arith.constant 0 : index
    %c0_151 = arith.constant 0 : index
    %314 = vector.load %arg17[%c0_150, %c0_151] : memref<1x32xf32, #tpu.memory_space<vmem>>, vector<1x32xf32>
    %315 = arith.addf %313, %314 : vector<1x32xf32>
    %cst_152 = arith.constant 0.000000e+00 : f32
    %316 = vector.broadcast %cst_152 : f32 to vector<1x32xf32>
    %317 = arith.maximumf %315, %316 : vector<1x32xf32>
    %c0_153 = arith.constant 0 : index
    %c0_154 = arith.constant 0 : index
    %318 = vector.load %arg18[%c0_153, %c0_154] : memref<32x3xf32, #tpu.memory_space<vmem>>, vector<32x3xf32>
    %cst_155 = arith.constant dense<0.000000e+00> : vector<1x3xf32>
    %319 = tpu.matmul %317, %318, %cst_155 {dimension_numbers = #tpu.dot_dimension_numbers<[1], [0], [0], [1], [0, 0, 1, 1], [], []>} : vector<1x32xf32>, vector<32x3xf32>, vector<1x3xf32> -> vector<1x3xf32>
    %c0_156 = arith.constant 0 : index
    %c0_157 = arith.constant 0 : index
    %320 = vector.load %arg19[%c0_156, %c0_157] : memref<1x3xf32, #tpu.memory_space<vmem>>, vector<1x3xf32>
    %321 = arith.addf %319, %320 : vector<1x3xf32>
    %c0_158 = arith.constant 0 : index
    %c0_159 = arith.constant 0 : index
    %c0_160 = arith.constant 0 : index
    %322 = vector.load %arg20[%c0_158, %c0_159, %c0_160] : memref<1x1x3xf32, #tpu.memory_space<vmem>>, vector<1x1x3xf32>
    %323 = vector.shape_cast %322 : vector<1x1x3xf32> to vector<1x3xf32>
    %324 = vector.shape_cast %321 : vector<1x3xf32> to vector<1x1x3xf32>
    tpu.vector_store %arg20[%c0_158, %c0_159, %c0_160], %324 {strides = array<i32>} : memref<1x1x3xf32, #tpu.memory_space<vmem>>, vector<1x1x3xf32>,
    return
  }
  func.func @transform_0(%arg0: i32) -> (i32, i32, i32) {
    %c0_i32 = arith.constant 0 : i32
    %c0_i32_0 = arith.constant 0 : i32
    %c0_i32_1 = arith.constant 0 : i32
    return %arg0, %c0_i32, %c0_i32_0 : i32, i32, i32
  }
  func.func @transform_1(%arg0: i32) -> (i32, i32) {
    %c0_i32 = arith.constant 0 : i32
    %c0_i32_0 = arith.constant 0 : i32
    %c0_i32_1 = arith.constant 0 : i32
    return %c0_i32, %c0_i32_0 : i32, i32
  }
  func.func @transform_2(%arg0: i32) -> (i32, i32) {
    %c0_i32 = arith.constant 0 : i32
    %c0_i32_0 = arith.constant 0 : i32
    %c0_i32_1 = arith.constant 0 : i32
    return %c0_i32, %c0_i32_0 : i32, i32
  }
  func.func @transform_3(%arg0: i32) -> (i32, i32, i32) {
    %c0_i32 = arith.constant 0 : i32
    %c0_i32_0 = arith.constant 0 : i32
    %c0_i32_1 = arith.constant 0 : i32
    %c0_i32_2 = arith.constant 0 : i32
    return %c0_i32, %c0_i32_0, %c0_i32_1 : i32, i32, i32
  }
  func.func @transform_4(%arg0: i32) -> (i32, i32, i32) {
    %c0_i32 = arith.constant 0 : i32
    %c0_i32_0 = arith.constant 0 : i32
    %c0_i32_1 = arith.constant 0 : i32
    %c0_i32_2 = arith.constant 0 : i32
    return %c0_i32, %c0_i32_0, %c0_i32_1 : i32, i32, i32
  }
  func.func @transform_5(%arg0: i32) -> (i32, i32, i32) {
    %c0_i32 = arith.constant 0 : i32
    %c0_i32_0 = arith.constant 0 : i32
    %c0_i32_1 = arith.constant 0 : i32
    %c0_i32_2 = arith.constant 0 : i32
    return %c0_i32, %c0_i32_0, %c0_i32_1 : i32, i32, i32
  }
  func.func @transform_6(%arg0: i32) -> (i32, i32, i32) {
    %c0_i32 = arith.constant 0 : i32
    %c0_i32_0 = arith.constant 0 : i32
    %c0_i32_1 = arith.constant 0 : i32
    %c0_i32_2 = arith.constant 0 : i32
    return %c0_i32, %c0_i32_0, %c0_i32_1 : i32, i32, i32
  }
  func.func @transform_7(%arg0: i32) -> (i32, i32, i32) {
    %c0_i32 = arith.constant 0 : i32
    %c0_i32_0 = arith.constant 0 : i32
    %c0_i32_1 = arith.constant 0 : i32
    %c0_i32_2 = arith.constant 0 : i32
    return %c0_i32, %c0_i32_0, %c0_i32_1 : i32, i32, i32
  }
  func.func @transform_8(%arg0: i32) -> (i32, i32, i32) {
    %c0_i32 = arith.constant 0 : i32
    %c0_i32_0 = arith.constant 0 : i32
    %c0_i32_1 = arith.constant 0 : i32
    %c0_i32_2 = arith.constant 0 : i32
    return %c0_i32, %c0_i32_0, %c0_i32_1 : i32, i32, i32
  }
  func.func @transform_9(%arg0: i32) -> (i32, i32, i32) {
    %c0_i32 = arith.constant 0 : i32
    %c0_i32_0 = arith.constant 0 : i32
    %c0_i32_1 = arith.constant 0 : i32
    %c0_i32_2 = arith.constant 0 : i32
    return %c0_i32, %c0_i32_0, %c0_i32_1 : i32, i32, i32
  }
  func.func @transform_10(%arg0: i32) -> (i32, i32, i32) {
    %c0_i32 = arith.constant 0 : i32
    %c0_i32_0 = arith.constant 0 : i32
    %c0_i32_1 = arith.constant 0 : i32
    %c0_i32_2 = arith.constant 0 : i32
    return %c0_i32, %c0_i32_0, %c0_i32_1 : i32, i32, i32
  }
  func.func @transform_11(%arg0: i32) -> (i32, i32, i32) {
    %c0_i32 = arith.constant 0 : i32
    %c0_i32_0 = arith.constant 0 : i32
    %c0_i32_1 = arith.constant 0 : i32
    %c0_i32_2 = arith.constant 0 : i32
    return %c0_i32, %c0_i32_0, %c0_i32_1 : i32, i32, i32
  }
  func.func @transform_12(%arg0: i32) -> (i32, i32, i32) {
    %c0_i32 = arith.constant 0 : i32
    %c0_i32_0 = arith.constant 0 : i32
    %c0_i32_1 = arith.constant 0 : i32
    %c0_i32_2 = arith.constant 0 : i32
    return %c0_i32, %c0_i32_0, %c0_i32_1 : i32, i32, i32
  }
  func.func @transform_13(%arg0: i32) -> (i32, i32, i32) {
    %c0_i32 = arith.constant 0 : i32
    %c0_i32_0 = arith.constant 0 : i32
    %c0_i32_1 = arith.constant 0 : i32
    %c0_i32_2 = arith.constant 0 : i32
    return %c0_i32, %c0_i32_0, %c0_i32_1 : i32, i32, i32
  }
  func.func @transform_14(%arg0: i32) -> (i32, i32, i32) {
    %c0_i32 = arith.constant 0 : i32
    %c0_i32_0 = arith.constant 0 : i32
    %c0_i32_1 = arith.constant 0 : i32
    %c0_i32_2 = arith.constant 0 : i32
    return %c0_i32, %c0_i32_0, %c0_i32_1 : i32, i32, i32
  }
  func.func @transform_15(%arg0: i32) -> (i32, i32) {
    %c0_i32 = arith.constant 0 : i32
    %c0_i32_0 = arith.constant 0 : i32
    %c0_i32_1 = arith.constant 0 : i32
    return %c0_i32, %c0_i32_0 : i32, i32
  }
  func.func @transform_16(%arg0: i32) -> (i32, i32) {
    %c0_i32 = arith.constant 0 : i32
    %c0_i32_0 = arith.constant 0 : i32
    %c0_i32_1 = arith.constant 0 : i32
    return %c0_i32, %c0_i32_0 : i32, i32
  }
  func.func @transform_17(%arg0: i32) -> (i32, i32) {
    %c0_i32 = arith.constant 0 : i32
    %c0_i32_0 = arith.constant 0 : i32
    %c0_i32_1 = arith.constant 0 : i32
    return %c0_i32, %c0_i32_0 : i32, i32
  }
  func.func @transform_18(%arg0: i32) -> (i32, i32) {
    %c0_i32 = arith.constant 0 : i32
    %c0_i32_0 = arith.constant 0 : i32
    %c0_i32_1 = arith.constant 0 : i32
    return %c0_i32, %c0_i32_0 : i32, i32
  }
  func.func @transform_19(%arg0: i32) -> (i32, i32, i32) {
    %c0_i32 = arith.constant 0 : i32
    %c0_i32_0 = arith.constant 0 : i32
    %c0_i32_1 = arith.constant 0 : i32
    return %arg0, %c0_i32, %c0_i32_0 : i32, i32, i32
  }
}

</mosaic_0001>

<llo_original>
// kernel: tpu_custom_call.1
$region0: #{tpu_custom_call.1}
  #allocation0 [shape = 'u32[]', space=smem, size = 0x4, offset = 0x4, fixed_abs, tag = 'smem constant byte address 0x4 - core index']
  #allocation1 [shape = 'u32[144,128]{1,0:T(1,128)}', space=vmem, size = 0x12000, scoped, tag = 'internal scratch']
  %s0 = inlined_call_operand.hbm [shape: f32[2,8,16], index: 0, kind: input, shape index: {}]
  %s1 = inlined_call_operand.hbm [shape: f32[16,32], index: 1, kind: input, shape index: {}]
  %s2 = inlined_call_operand.vmem [shape: f32[1,32], index: 2, kind: input, shape index: {}]
  %s3 = inlined_call_operand.vmem [shape: f32[2,32,96], index: 3, kind: input, shape index: {}]
  %s4 = inlined_call_operand.vmem [shape: f32[2,1,96], index: 4, kind: input, shape index: {}]
  %s5 = inlined_call_operand.vmem [shape: f32[2,32,32], index: 5, kind: input, shape index: {}]
  %s6 = inlined_call_operand.vmem [shape: f32[2,1,32], index: 6, kind: input, shape index: {}]
  %s7 = inlined_call_operand.vmem [shape: f32[2,1,32], index: 7, kind: input, shape index: {}]
  %s8 = inlined_call_operand.vmem [shape: f32[2,1,32], index: 8, kind: input, shape index: {}]
  %s9 = inlined_call_operand.vmem [shape: f32[2,32,64], index: 9, kind: input, shape index: {}]
  %s10 = inlined_call_operand.vmem [shape: f32[2,1,64], index: 10, kind: input, shape index: {}]
  %s11 = inlined_call_operand.vmem [shape: f32[2,64,32], index: 11, kind: input, shape index: {}]
  %s12 = inlined_call_operand.vmem [shape: f32[2,1,32], index: 12, kind: input, shape index: {}]
  %s13 = inlined_call_operand.vmem [shape: f32[2,1,32], index: 13, kind: input, shape index: {}]
  %s14 = inlined_call_operand.vmem [shape: f32[2,1,32], index: 14, kind: input, shape index: {}]
  %s15 = inlined_call_operand.hbm [shape: f32[32,32], index: 15, kind: input, shape index: {}]
  %s16 = inlined_call_operand.vmem [shape: f32[1,32], index: 16, kind: input, shape index: {}]
  %s17 = inlined_call_operand.vmem [shape: f32[32,3], index: 17, kind: input, shape index: {}]
  %s18 = inlined_call_operand.vmem [shape: f32[1,3], index: 18, kind: input, shape index: {}]
  %s19 = inlined_call_operand.hbm [shape: f32[2,1,3], index: 19, kind: output, shape index: {}]
  %s20 = sld [smem:[#allocation0]]
  $region121: #{tpu_custom_call.1} parent=0
    _
  %s22 = ssub.s32 1, %s20
  %s23 = scalar_select 0, %s22, %s20
  $region1: #{tpu_custom_call.1} parent=0
    #allocation2 [shape = 'u8[8192]{0}', space=vmem, size = 0x2000, scoped, tag = 'input window, operand 0']
    #allocation3 [shape = 's32[2]{0}', space=sflag, size = 0x8, scoped, tag = 'scoped memory for tpu_custom_call.1']
    #allocation4 [shape = 's32[2]{0}', space=sflag, size = 0x8, scoped, tag = 'scoped memory for tpu_custom_call.1']
    #allocation5 [shape = 'u8[8192]{0}', space=vmem, size = 0x2000, scoped, tag = 'input window, operand 1, single buffered']
    #allocation6 [shape = 's32[1]{0}', space=sflag, size = 0x4, scoped, tag = 'scoped memory for tpu_custom_call.1']
    #allocation7 [shape = 'u8[16384]{0}', space=vmem, size = 0x4000, scoped, tag = 'input window, operand 15, single buffered']
    #allocation8 [shape = 'u8[1024]{0}', space=vmem, size = 0x400, scoped, tag = 'output window, operand 0']
    %24 = vsyncpa [#allocation3], 0
    %s25 = scalar_lea.sflag [#allocation3], 1
    %26 = vsyncpa %s25, 0
    %27 = vsyncpa [#allocation6], 0
    %28 = vsyncpa [#allocation4], 0
    %s29 = scalar_lea.sflag [#allocation4], 1
    %30 = vsyncpa %s29, 0
    loop: start=0, step=1, limit=4
    $region2: #{tpu_custom_call.1} parent=1 // loop_pre_header
      _
    $region3: #{tpu_custom_call.1} parent=1 // loop_header
      %s32 = sphi 0, %s36
      %p33 = scmp.ge.s32.totalorder %s32, 4
      %s42 = sphi 0, %s44
      %s45 = sphi 0, %s42
      %s46 = sphi 0, %s45
      %s62 = sphi 0, %s46
      %s66 = sphi 0, %s66
      %s68 = sphi 0, %s66
      %s69 = sphi 0, %s68
      %s83 = sphi 0, %s69
      %s87 = sphi 0, %s87
      %s89 = sphi 0, %s87
      %s90 = sphi 0, %s89
      %s104 = sphi 0, %s90
      %s108 = sphi 0, %s108
      %s110 = sphi 0, %s108
      %s111 = sphi 0, %s110
      %s125 = sphi 0, %s111
      %s129 = sphi 0, %s129
      %s131 = sphi 0, %s129
      %s132 = sphi 0, %s131
      %s146 = sphi 0, %s132
      %s150 = sphi 0, %s150
      %s152 = sphi 0, %s150
      %s153 = sphi 0, %s152
      %s167 = sphi 0, %s153
      %s171 = sphi 0, %s171
      %s173 = sphi 0, %s171
      %s174 = sphi 0, %s173
      %s188 = sphi 0, %s174
      %s192 = sphi 0, %s192
      %s194 = sphi 0, %s192
      %s195 = sphi 0, %s194
      %s209 = sphi 0, %s195
      %s213 = sphi 0, %s213
      %s215 = sphi 0, %s213
      %s216 = sphi 0, %s215
      %s230 = sphi 0, %s216
      %s234 = sphi 0, %s234
      %s236 = sphi 0, %s234
      %s237 = sphi 0, %s236
      %s251 = sphi 0, %s237
      %s255 = sphi 0, %s255
      %s257 = sphi 0, %s255
      %s258 = sphi 0, %s257
      %s272 = sphi 0, %s258
      %s276 = sphi 0, %s276
      %s278 = sphi 0, %s276
      %s279 = sphi 0, %s278
      %s293 = sphi 0, %s279
      %s297 = sphi 0, %s297
      %s299 = sphi 0, %s297
      %s300 = sphi 0, %s299
      %s314 = sphi 0, %s300
      %s318 = sphi 0, %s318
      %s320 = sphi 0, %s318
      %s321 = sphi 0, %s320
      %s335 = sphi 0, %s321
      %s339 = sphi 0, %s339
      %s341 = sphi 0, %s339
      %s342 = sphi 0, %s341
      %s356 = sphi 0, %s342
      %s360 = sphi 0, %s360
      %s362 = sphi 0, %s360
      %s363 = sphi 0, %s362
      %s377 = sphi 0, %s363
      %s381 = sphi 0, %s381
      %s383 = sphi 0, %s381
      %s384 = sphi 0, %s383
      %s398 = sphi 0, %s384
      %s402 = sphi 0, %s402
      %s404 = sphi 0, %s402
      %s405 = sphi 0, %s404
      %s419 = sphi 0, %s405
      %s423 = sphi 0, %s423
      %s425 = sphi 0, %s423
      %s426 = sphi 0, %s425
      %s440 = sphi 0, %s426
      %s446 = sphi 0, %s448
      %s449 = sphi 0, %s446
      %s450 = sphi 0, %s449
      %s466 = sphi 0, %s450
    $region4: #{tpu_custom_call.1} parent=1 // loop_header_branch
      %35 = sbr.rel (%p33) target = $region8
    $region5: #{tpu_custom_call.1} parent=1 // loop_body
      %s37 = ssub.s32 %s32, 1
      %s38 = ssub.s32 %s32, 2
      %s39 = sadd.s32 %s32, 1
      %s40 = ssub.s32 %s32, %s39
      %p41 = scmp.eq.s32.totalorder %s40, 0
      %s43 = sadd.s32 %s42, 1
      %s44 = scalar_select %p41, %s42, %s43
      %p47 = pneg %p41
      %p48 = scmp.eq.s32.totalorder %s32, 1
      %p49 = por %p47, %p48
      %p50 = scmp.ne.s32.totalorder %s42, %s45
      %p51 = scmp.eq.s32.totalorder %s32, 0
      %p52 = por %p50, %p51
      %p53 = scmp.ne.s32.totalorder %s42, %s45
      %p54 = scmp.eq.s32.totalorder %s37, 1
      %p55 = por %p53, %p54
      %p56 = scmp.ne.s32.totalorder %s45, %s46
      %p57 = scmp.eq.s32.totalorder %s37, 0
      %p58 = por %p56, %p57
      %p59 = scmp.ne.s32.totalorder %s45, %s46
      %p60 = scmp.eq.s32.totalorder %s38, 1
      %p61 = por %p59, %p60
      %p63 = scmp.ne.s32.totalorder %s46, %s62
      %p64 = scmp.eq.s32.totalorder %s38, 0
      %p65 = por %p63, %p64
      %s67 = sadd.s32 %s66, 1
      %p70 = scmp.eq.s32.totalorder %s32, 1
      %p71 = scmp.ne.s32.totalorder %s66, %s68
      %p72 = scmp.eq.s32.totalorder %s32, 0
      %p73 = por %p71, %p72
      %p74 = scmp.ne.s32.totalorder %s66, %s68
      %p75 = scmp.eq.s32.totalorder %s37, 1
      %p76 = por %p74, %p75
      %p77 = scmp.ne.s32.totalorder %s68, %s69
      %p78 = scmp.eq.s32.totalorder %s37, 0
      %p79 = por %p77, %p78
      %p80 = scmp.ne.s32.totalorder %s68, %s69
      %p81 = scmp.eq.s32.totalorder %s38, 1
      %p82 = por %p80, %p81
      %p84 = scmp.ne.s32.totalorder %s69, %s83
      %p85 = scmp.eq.s32.totalorder %s38, 0
      %p86 = por %p84, %p85
      %s88 = sadd.s32 %s87, 1
      %p91 = scmp.eq.s32.totalorder %s32, 1
      %p92 = scmp.ne.s32.totalorder %s87, %s89
      %p93 = scmp.eq.s32.totalorder %s32, 0
      %p94 = por %p92, %p93
      %p95 = scmp.ne.s32.totalorder %s87, %s89
      %p96 = scmp.eq.s32.totalorder %s37, 1
      %p97 = por %p95, %p96
      %p98 = scmp.ne.s32.totalorder %s89, %s90
      %p99 = scmp.eq.s32.totalorder %s37, 0
      %p100 = por %p98, %p99
      %p101 = scmp.ne.s32.totalorder %s89, %s90
      %p102 = scmp.eq.s32.totalorder %s38, 1
      %p103 = por %p101, %p102
      %p105 = scmp.ne.s32.totalorder %s90, %s104
      %p106 = scmp.eq.s32.totalorder %s38, 0
      %p107 = por %p105, %p106
      %s109 = sadd.s32 %s108, 1
      %p112 = scmp.eq.s32.totalorder %s32, 1
      %p113 = scmp.ne.s32.totalorder %s108, %s110
      %p114 = scmp.eq.s32.totalorder %s32, 0
      %p115 = por %p113, %p114
      %p116 = scmp.ne.s32.totalorder %s108, %s110
      %p117 = scmp.eq.s32.totalorder %s37, 1
      %p118 = por %p116, %p117
      %p119 = scmp.ne.s32.totalorder %s110, %s111
      %p120 = scmp.eq.s32.totalorder %s37, 0
      %p121 = por %p119, %p120
      %p122 = scmp.ne.s32.totalorder %s110, %s111
      %p123 = scmp.eq.s32.totalorder %s38, 1
      %p124 = por %p122, %p123
      %p126 = scmp.ne.s32.totalorder %s111, %s125
      %p127 = scmp.eq.s32.totalorder %s38, 0
      %p128 = por %p126, %p127
      %s130 = sadd.s32 %s129, 1
      %p133 = scmp.eq.s32.totalorder %s32, 1
      %p134 = scmp.ne.s32.totalorder %s129, %s131
      %p135 = scmp.eq.s32.totalorder %s32, 0
      %p136 = por %p134, %p135
      %p137 = scmp.ne.s32.totalorder %s129, %s131
      %p138 = scmp.eq.s32.totalorder %s37, 1
      %p139 = por %p137, %p138
      %p140 = scmp.ne.s32.totalorder %s131, %s132
      %p141 = scmp.eq.s32.totalorder %s37, 0
      %p142 = por %p140, %p141
      %p143 = scmp.ne.s32.totalorder %s131, %s132
      %p144 = scmp.eq.s32.totalorder %s38, 1
      %p145 = por %p143, %p144
      %p147 = scmp.ne.s32.totalorder %s132, %s146
      %p148 = scmp.eq.s32.totalorder %s38, 0
      %p149 = por %p147, %p148
      %s151 = sadd.s32 %s150, 1
      %p154 = scmp.eq.s32.totalorder %s32, 1
      %p155 = scmp.ne.s32.totalorder %s150, %s152
      %p156 = scmp.eq.s32.totalorder %s32, 0
      %p157 = por %p155, %p156
      %p158 = scmp.ne.s32.totalorder %s150, %s152
      %p159 = scmp.eq.s32.totalorder %s37, 1
      %p160 = por %p158, %p159
      %p161 = scmp.ne.s32.totalorder %s152, %s153
      %p162 = scmp.eq.s32.totalorder %s37, 0
      %p163 = por %p161, %p162
      %p164 = scmp.ne.s32.totalorder %s152, %s153
      %p165 = scmp.eq.s32.totalorder %s38, 1
      %p166 = por %p164, %p165
      %p168 = scmp.ne.s32.totalorder %s153, %s167
      %p169 = scmp.eq.s32.totalorder %s38, 0
      %p170 = por %p168, %p169
      %s172 = sadd.s32 %s171, 1
      %p175 = scmp.eq.s32.totalorder %s32, 1
      %p176 = scmp.ne.s32.totalorder %s171, %s173
      %p177 = scmp.eq.s32.totalorder %s32, 0
      %p178 = por %p176, %p177
      %p179 = scmp.ne.s32.totalorder %s171, %s173
      %p180 = scmp.eq.s32.totalorder %s37, 1
      %p181 = por %p179, %p180
      %p182 = scmp.ne.s32.totalorder %s173, %s174
      %p183 = scmp.eq.s32.totalorder %s37, 0
      %p184 = por %p182, %p183
      %p185 = scmp.ne.s32.totalorder %s173, %s174
      %p186 = scmp.eq.s32.totalorder %s38, 1
      %p187 = por %p185, %p186
      %p189 = scmp.ne.s32.totalorder %s174, %s188
      %p190 = scmp.eq.s32.totalorder %s38, 0
      %p191 = por %p189, %p190
      %s193 = sadd.s32 %s192, 1
      %p196 = scmp.eq.s32.totalorder %s32, 1
      %p197 = scmp.ne.s32.totalorder %s192, %s194
      %p198 = scmp.eq.s32.totalorder %s32, 0
      %p199 = por %p197, %p198
      %p200 = scmp.ne.s32.totalorder %s192, %s194
      %p201 = scmp.eq.s32.totalorder %s37, 1
      %p202 = por %p200, %p201
      %p203 = scmp.ne.s32.totalorder %s194, %s195
      %p204 = scmp.eq.s32.totalorder %s37, 0
      %p205 = por %p203, %p204
      %p206 = scmp.ne.s32.totalorder %s194, %s195
      %p207 = scmp.eq.s32.totalorder %s38, 1
      %p208 = por %p206, %p207
      %p210 = scmp.ne.s32.totalorder %s195, %s209
      %p211 = scmp.eq.s32.totalorder %s38, 0
      %p212 = por %p210, %p211
      %s214 = sadd.s32 %s213, 1
      %p217 = scmp.eq.s32.totalorder %s32, 1
      %p218 = scmp.ne.s32.totalorder %s213, %s215
      %p219 = scmp.eq.s32.totalorder %s32, 0
      %p220 = por %p218, %p219
      %p221 = scmp.ne.s32.totalorder %s213, %s215
      %p222 = scmp.eq.s32.totalorder %s37, 1
      %p223 = por %p221, %p222
      %p224 = scmp.ne.s32.totalorder %s215, %s216
      %p225 = scmp.eq.s32.totalorder %s37, 0
      %p226 = por %p224, %p225
      %p227 = scmp.ne.s32.totalorder %s215, %s216
      %p228 = scmp.eq.s32.totalorder %s38, 1
      %p229 = por %p227, %p228
      %p231 = scmp.ne.s32.totalorder %s216, %s230
      %p232 = scmp.eq.s32.totalorder %s38, 0
      %p233 = por %p231, %p232
      %s235 = sadd.s32 %s234, 1
      %p238 = scmp.eq.s32.totalorder %s32, 1
      %p239 = scmp.ne.s32.totalorder %s234, %s236
      %p240 = scmp.eq.s32.totalorder %s32, 0
      %p241 = por %p239, %p240
      %p242 = scmp.ne.s32.totalorder %s234, %s236
      %p243 = scmp.eq.s32.totalorder %s37, 1
      %p244 = por %p242, %p243
      %p245 = scmp.ne.s32.totalorder %s236, %s237
      %p246 = scmp.eq.s32.totalorder %s37, 0
      %p247 = por %p245, %p246
      %p248 = scmp.ne.s32.totalorder %s236, %s237
      %p249 = scmp.eq.s32.totalorder %s38, 1
      %p250 = por %p248, %p249
      %p252 = scmp.ne.s32.totalorder %s237, %s251
      %p253 = scmp.eq.s32.totalorder %s38, 0
      %p254 = por %p252, %p253
      %s256 = sadd.s32 %s255, 1
      %p259 = scmp.eq.s32.totalorder %s32, 1
      %p260 = scmp.ne.s32.totalorder %s255, %s257
      %p261 = scmp.eq.s32.totalorder %s32, 0
      %p262 = por %p260, %p261
      %p263 = scmp.ne.s32.totalorder %s255, %s257
      %p264 = scmp.eq.s32.totalorder %s37, 1
      %p265 = por %p263, %p264
      %p266 = scmp.ne.s32.totalorder %s257, %s258
      %p267 = scmp.eq.s32.totalorder %s37, 0
      %p268 = por %p266, %p267
      %p269 = scmp.ne.s32.totalorder %s257, %s258
      %p270 = scmp.eq.s32.totalorder %s38, 1
      %p271 = por %p269, %p270
      %p273 = scmp.ne.s32.totalorder %s258, %s272
      %p274 = scmp.eq.s32.totalorder %s38, 0
      %p275 = por %p273, %p274
      %s277 = sadd.s32 %s276, 1
      %p280 = scmp.eq.s32.totalorder %s32, 1
      %p281 = scmp.ne.s32.totalorder %s276, %s278
      %p282 = scmp.eq.s32.totalorder %s32, 0
      %p283 = por %p281, %p282
      %p284 = scmp.ne.s32.totalorder %s276, %s278
      %p285 = scmp.eq.s32.totalorder %s37, 1
      %p286 = por %p284, %p285
      %p287 = scmp.ne.s32.totalorder %s278, %s279
      %p288 = scmp.eq.s32.totalorder %s37, 0
      %p289 = por %p287, %p288
      %p290 = scmp.ne.s32.totalorder %s278, %s279
      %p291 = scmp.eq.s32.totalorder %s38, 1
      %p292 = por %p290, %p291
      %p294 = scmp.ne.s32.totalorder %s279, %s293
      %p295 = scmp.eq.s32.totalorder %s38, 0
      %p296 = por %p294, %p295
      %s298 = sadd.s32 %s297, 1
      %p301 = scmp.eq.s32.totalorder %s32, 1
      %p302 = scmp.ne.s32.totalorder %s297, %s299
      %p303 = scmp.eq.s32.totalorder %s32, 0
      %p304 = por %p302, %p303
      %p305 = scmp.ne.s32.totalorder %s297, %s299
      %p306 = scmp.eq.s32.totalorder %s37, 1
      %p307 = por %p305, %p306
      %p308 = scmp.ne.s32.totalorder %s299, %s300
      %p309 = scmp.eq.s32.totalorder %s37, 0
      %p310 = por %p308, %p309
      %p311 = scmp.ne.s32.totalorder %s299, %s300
      %p312 = scmp.eq.s32.totalorder %s38, 1
      %p313 = por %p311, %p312
      %p315 = scmp.ne.s32.totalorder %s300, %s314
      %p316 = scmp.eq.s32.totalorder %s38, 0
      %p317 = por %p315, %p316
      %s319 = sadd.s32 %s318, 1
      %p322 = scmp.eq.s32.totalorder %s32, 1
      %p323 = scmp.ne.s32.totalorder %s318, %s320
      %p324 = scmp.eq.s32.totalorder %s32, 0
      %p325 = por %p323, %p324
      %p326 = scmp.ne.s32.totalorder %s318, %s320
      %p327 = scmp.eq.s32.totalorder %s37, 1
      %p328 = por %p326, %p327
      %p329 = scmp.ne.s32.totalorder %s320, %s321
      %p330 = scmp.eq.s32.totalorder %s37, 0
      %p331 = por %p329, %p330
      %p332 = scmp.ne.s32.totalorder %s320, %s321
      %p333 = scmp.eq.s32.totalorder %s38, 1
      %p334 = por %p332, %p333
      %p336 = scmp.ne.s32.totalorder %s321, %s335
      %p337 = scmp.eq.s32.totalorder %s38, 0
      %p338 = por %p336, %p337
      %s340 = sadd.s32 %s339, 1
      %p343 = scmp.eq.s32.totalorder %s32, 1
      %p344 = scmp.ne.s32.totalorder %s339, %s341
      %p345 = scmp.eq.s32.totalorder %s32, 0
      %p346 = por %p344, %p345
      %p347 = scmp.ne.s32.totalorder %s339, %s341
      %p348 = scmp.eq.s32.totalorder %s37, 1
      %p349 = por %p347, %p348
      %p350 = scmp.ne.s32.totalorder %s341, %s342
      %p351 = scmp.eq.s32.totalorder %s37, 0
      %p352 = por %p350, %p351
      %p353 = scmp.ne.s32.totalorder %s341, %s342
      %p354 = scmp.eq.s32.totalorder %s38, 1
      %p355 = por %p353, %p354
      %p357 = scmp.ne.s32.totalorder %s342, %s356
      %p358 = scmp.eq.s32.totalorder %s38, 0
      %p359 = por %p357, %p358
      %s361 = sadd.s32 %s360, 1
      %p364 = scmp.eq.s32.totalorder %s32, 1
      %p365 = scmp.ne.s32.totalorder %s360, %s362
      %p366 = scmp.eq.s32.totalorder %s32, 0
      %p367 = por %p365, %p366
      %p368 = scmp.ne.s32.totalorder %s360, %s362
      %p369 = scmp.eq.s32.totalorder %s37, 1
      %p370 = por %p368, %p369
      %p371 = scmp.ne.s32.totalorder %s362, %s363
      %p372 = scmp.eq.s32.totalorder %s37, 0
      %p373 = por %p371, %p372
      %p374 = scmp.ne.s32.totalorder %s362, %s363
      %p375 = scmp.eq.s32.totalorder %s38, 1
      %p376 = por %p374, %p375
      %p378 = scmp.ne.s32.totalorder %s363, %s377
      %p379 = scmp.eq.s32.totalorder %s38, 0
      %p380 = por %p378, %p379
      %s382 = sadd.s32 %s381, 1
      %p385 = scmp.eq.s32.totalorder %s32, 1
      %p386 = scmp.ne.s32.totalorder %s381, %s383
      %p387 = scmp.eq.s32.totalorder %s32, 0
      %p388 = por %p386, %p387
      %p389 = scmp.ne.s32.totalorder %s381, %s383
      %p390 = scmp.eq.s32.totalorder %s37, 1
      %p391 = por %p389, %p390
      %p392 = scmp.ne.s32.totalorder %s383, %s384
      %p393 = scmp.eq.s32.totalorder %s37, 0
      %p394 = por %p392, %p393
      %p395 = scmp.ne.s32.totalorder %s383, %s384
      %p396 = scmp.eq.s32.totalorder %s38, 1
      %p397 = por %p395, %p396
      %p399 = scmp.ne.s32.totalorder %s384, %s398
      %p400 = scmp.eq.s32.totalorder %s38, 0
      %p401 = por %p399, %p400
      %s403 = sadd.s32 %s402, 1
      %p406 = scmp.eq.s32.totalorder %s32, 1
      %p407 = scmp.ne.s32.totalorder %s402, %s404
      %p408 = scmp.eq.s32.totalorder %s32, 0
      %p409 = por %p407, %p408
      %p410 = scmp.ne.s32.totalorder %s402, %s404
      %p411 = scmp.eq.s32.totalorder %s37, 1
      %p412 = por %p410, %p411
      %p413 = scmp.ne.s32.totalorder %s404, %s405
      %p414 = scmp.eq.s32.totalorder %s37, 0
      %p415 = por %p413, %p414
      %p416 = scmp.ne.s32.totalorder %s404, %s405
      %p417 = scmp.eq.s32.totalorder %s38, 1
      %p418 = por %p416, %p417
      %p420 = scmp.ne.s32.totalorder %s405, %s419
      %p421 = scmp.eq.s32.totalorder %s38, 0
      %p422 = por %p420, %p421
      %s424 = sadd.s32 %s423, 1
      %p427 = scmp.eq.s32.totalorder %s32, 1
      %p428 = scmp.ne.s32.totalorder %s423, %s425
      %p429 = scmp.eq.s32.totalorder %s32, 0
      %p430 = por %p428, %p429
      %p431 = scmp.ne.s32.totalorder %s423, %s425
      %p432 = scmp.eq.s32.totalorder %s37, 1
      %p433 = por %p431, %p432
      %p434 = scmp.ne.s32.totalorder %s425, %s426
      %p435 = scmp.eq.s32.totalorder %s37, 0
      %p436 = por %p434, %p435
      %p437 = scmp.ne.s32.totalorder %s425, %s426
      %p438 = scmp.eq.s32.totalorder %s38, 1
      %p439 = por %p437, %p438
      %p441 = scmp.ne.s32.totalorder %s426, %s440
      %p442 = scmp.eq.s32.totalorder %s38, 0
      %p443 = por %p441, %p442
      %s444 = ssub.s32 %s32, %s39
      %p445 = scmp.eq.s32.totalorder %s444, 0
      %s447 = sadd.s32 %s446, 1
      %s448 = scalar_select %p445, %s446, %s447
      %p451 = pneg %p445
      %p452 = scmp.eq.s32.totalorder %s32, 1
      %p453 = por %p451, %p452
      %p454 = scmp.ne.s32.totalorder %s446, %s449
      %p455 = scmp.eq.s32.totalorder %s32, 0
      %p456 = por %p454, %p455
      %p457 = scmp.ne.s32.totalorder %s446, %s449
      %p458 = scmp.eq.s32.totalorder %s37, 1
      %p459 = por %p457, %p458
      %p460 = scmp.ne.s32.totalorder %s449, %s450
      %p461 = scmp.eq.s32.totalorder %s37, 0
      %p462 = por %p460, %p461
      %p463 = scmp.ne.s32.totalorder %s449, %s450
      %p464 = scmp.eq.s32.totalorder %s38, 1
      %p465 = por %p463, %p464
      %p467 = scmp.ne.s32.totalorder %s450, %s466
      %p468 = scmp.eq.s32.totalorder %s38, 0
      %p469 = por %p467, %p468
      %p470 = scmp.le.s32.totalorder 1, %s32
      %p471 = scmp.lt.s32.totalorder %s32, 3
      %p472 = pnand %p470, %p471
      %p473 = pneg %p472
      // Predicated region
      $region9: #{tpu_custom_call.1} parent=5 // pred_check
        _
      $region10: #{tpu_custom_call.1} parent=5 // pred_check_branch
        %475 = sbr.rel (%p472) target = $region12
      $region11: #{tpu_custom_call.1} parent=5 // pred_region
        %s476 = ssub.s32 %s32, 1
        // Predicated region
        $region13: #{tpu_custom_call.1} parent=11 // pred_check
          %p477 = pneg %p79
        $region14: #{tpu_custom_call.1} parent=11 // pred_check_branch
          %479 = sbr.rel (%p477) target = $region16
        $region15: #{tpu_custom_call.1} parent=11 // pred_region
          %s481 = ssub.s32 256, 256
          %482 = vsyncadd [#allocation6], %s481
          %s483 = sshll.u32 [#allocation5], 4
          %s484 = int_to_ptr.vmem [resolvable:$true] %s483
          %489 = dma.hbm_to_vmem [thread:$0]  %s1, 256, %s484, [#allocation6], 128, 128, 8
        $region16: #{tpu_custom_call.1} parent=11 // pred_fallthru
          _
        // Predicated region
        $region17: #{tpu_custom_call.1} parent=11 // pred_check
          %p490 = pneg %p100
        $region18: #{tpu_custom_call.1} parent=11 // pred_check_branch
          %492 = sbr.rel (%p490) target = $region20
        $region19: #{tpu_custom_call.1} parent=11 // pred_region
          _
        $region20: #{tpu_custom_call.1} parent=11 // pred_fallthru
          _
        // Predicated region
        $region21: #{tpu_custom_call.1} parent=11 // pred_check
          %p493 = pneg %p121
        $region22: #{tpu_custom_call.1} parent=11 // pred_check_branch
          %495 = sbr.rel (%p493) target = $region24
        $region23: #{tpu_custom_call.1} parent=11 // pred_region
          _
        $region24: #{tpu_custom_call.1} parent=11 // pred_fallthru
          _
        // Predicated region
        $region25: #{tpu_custom_call.1} parent=11 // pred_check
          %p496 = pneg %p142
        $region26: #{tpu_custom_call.1} parent=11 // pred_check_branch
          %498 = sbr.rel (%p496) target = $region28
        $region27: #{tpu_custom_call.1} parent=11 // pred_region
          _
        $region28: #{tpu_custom_call.1} parent=11 // pred_fallthru
          _
        // Predicated region
        $region29: #{tpu_custom_call.1} parent=11 // pred_check
          %p499 = pneg %p163
        $region30: #{tpu_custom_call.1} parent=11 // pred_check_branch
          %501 = sbr.rel (%p499) target = $region32
        $region31: #{tpu_custom_call.1} parent=11 // pred_region
          _
        $region32: #{tpu_custom_call.1} parent=11 // pred_fallthru
          _
        // Predicated region
        $region33: #{tpu_custom_call.1} parent=11 // pred_check
          %p502 = pneg %p184
        $region34: #{tpu_custom_call.1} parent=11 // pred_check_branch
          %504 = sbr.rel (%p502) target = $region36
        $region35: #{tpu_custom_call.1} parent=11 // pred_region
          _
        $region36: #{tpu_custom_call.1} parent=11 // pred_fallthru
          _
        // Predicated region
        $region37: #{tpu_custom_call.1} parent=11 // pred_check
          %p505 = pneg %p205
        $region38: #{tpu_custom_call.1} parent=11 // pred_check_branch
          %507 = sbr.rel (%p505) target = $region40
        $region39: #{tpu_custom_call.1} parent=11 // pred_region
          _
        $region40: #{tpu_custom_call.1} parent=11 // pred_fallthru
          _
        // Predicated region
        $region41: #{tpu_custom_call.1} parent=11 // pred_check
          %p508 = pneg %p226
        $region42: #{tpu_custom_call.1} parent=11 // pred_check_branch
          %510 = sbr.rel (%p508) target = $region44
        $region43: #{tpu_custom_call.1} parent=11 // pred_region
          _
        $region44: #{tpu_custom_call.1} parent=11 // pred_fallthru
          _
        // Predicated region
        $region45: #{tpu_custom_call.1} parent=11 // pred_check
          %p511 = pneg %p247
        $region46: #{tpu_custom_call.1} parent=11 // pred_check_branch
          %513 = sbr.rel (%p511) target = $region48
        $region47: #{tpu_custom_call.1} parent=11 // pred_region
          _
        $region48: #{tpu_custom_call.1} parent=11 // pred_fallthru
          _
        // Predicated region
        $region49: #{tpu_custom_call.1} parent=11 // pred_check
          %p514 = pneg %p268
        $region50: #{tpu_custom_call.1} parent=11 // pred_check_branch
          %516 = sbr.rel (%p514) target = $region52
        $region51: #{tpu_custom_call.1} parent=11 // pred_region
          _
        $region52: #{tpu_custom_call.1} parent=11 // pred_fallthru
          _
        // Predicated region
        $region53: #{tpu_custom_call.1} parent=11 // pred_check
          %p517 = pneg %p289
        $region54: #{tpu_custom_call.1} parent=11 // pred_check_branch
          %519 = sbr.rel (%p517) target = $region56
        $region55: #{tpu_custom_call.1} parent=11 // pred_region
          _
        $region56: #{tpu_custom_call.1} parent=11 // pred_fallthru
          _
        // Predicated region
        $region57: #{tpu_custom_call.1} parent=11 // pred_check
          %p520 = pneg %p310
        $region58: #{tpu_custom_call.1} parent=11 // pred_check_branch
          %522 = sbr.rel (%p520) target = $region60
        $region59: #{tpu_custom_call.1} parent=11 // pred_region
          _
        $region60: #{tpu_custom_call.1} parent=11 // pred_fallthru
          _
        // Predicated region
        $region61: #{tpu_custom_call.1} parent=11 // pred_check
          %p523 = pneg %p331
        $region62: #{tpu_custom_call.1} parent=11 // pred_check_branch
          %525 = sbr.rel (%p523) target = $region64
        $region63: #{tpu_custom_call.1} parent=11 // pred_region
          _
        $region64: #{tpu_custom_call.1} parent=11 // pred_fallthru
          _
        // Predicated region
        $region65: #{tpu_custom_call.1} parent=11 // pred_check
          %p526 = pneg %p352
        $region66: #{tpu_custom_call.1} parent=11 // pred_check_branch
          %528 = sbr.rel (%p526) target = $region68
        $region67: #{tpu_custom_call.1} parent=11 // pred_region
          _
        $region68: #{tpu_custom_call.1} parent=11 // pred_fallthru
          _
        // Predicated region
        $region69: #{tpu_custom_call.1} parent=11 // pred_check
          %p529 = pneg %p373
        $region70: #{tpu_custom_call.1} parent=11 // pred_check_branch
          %531 = sbr.rel (%p529) target = $region72
        $region71: #{tpu_custom_call.1} parent=11 // pred_region
          %s533 = ssub.s32 512, 512
          %534 = vsyncadd [#allocation6], %s533
          %s535 = sshll.u32 [#allocation7], 4
          %s536 = int_to_ptr.vmem [resolvable:$true] %s535
          %541 = dma.hbm_to_vmem [thread:$0]  %s15, 512, %s536, [#allocation6], 128, 128, 8
        $region72: #{tpu_custom_call.1} parent=11 // pred_fallthru
          _
        // Predicated region
        $region73: #{tpu_custom_call.1} parent=11 // pred_check
          %p542 = pneg %p394
        $region74: #{tpu_custom_call.1} parent=11 // pred_check_branch
          %544 = sbr.rel (%p542) target = $region76
        $region75: #{tpu_custom_call.1} parent=11 // pred_region
          _
        $region76: #{tpu_custom_call.1} parent=11 // pred_fallthru
          _
        // Predicated region
        $region77: #{tpu_custom_call.1} parent=11 // pred_check
          %p545 = pneg %p415
        $region78: #{tpu_custom_call.1} parent=11 // pred_check_branch
          %547 = sbr.rel (%p545) target = $region80
        $region79: #{tpu_custom_call.1} parent=11 // pred_region
          _
        $region80: #{tpu_custom_call.1} parent=11 // pred_fallthru
          _
        // Predicated region
        $region81: #{tpu_custom_call.1} parent=11 // pred_check
          %p548 = pneg %p436
        $region82: #{tpu_custom_call.1} parent=11 // pred_check_branch
          %550 = sbr.rel (%p548) target = $region84
        $region83: #{tpu_custom_call.1} parent=11 // pred_region
          _
        $region84: #{tpu_custom_call.1} parent=11 // pred_fallthru
          _
      $region12: #{tpu_custom_call.1} parent=5 // pred_fallthru
        _
      %p551 = scmp.lt.s32.totalorder %s32, 2
      // Predicated region
      $region85: #{tpu_custom_call.1} parent=5 // pred_check
        %p552 = pneg %p551
      $region86: #{tpu_custom_call.1} parent=5 // pred_check_branch
        %554 = sbr.rel (%p552) target = $region88
      $region87: #{tpu_custom_call.1} parent=5 // pred_region
        // Predicated region
        $region89: #{tpu_custom_call.1} parent=87 // pred_check
          %p555 = pneg %p52
        $region90: #{tpu_custom_call.1} parent=87 // pred_check_branch
          %557 = sbr.rel (%p555) target = $region92
        $region91: #{tpu_custom_call.1} parent=87 // pred_region
          %s558 = sand.u32 %s42, 1
          %s559 = scalar_lea.sflag [#allocation3], %s558
          %s560 = sand.u32 %s42, 1
          %s561 = smul.addr %s560, 8
          %s562 = scalar_lea.vmem [#allocation2], %s561
          %s564 = ssub.s32 128, 128
          %565 = vsyncadd %s559, %s564
          %s566 = smul.addr %s32, 128
          %s567 = scalar_lea.hbm %s0, %s566
          %s569 = sshll.u32 %s562, 4
          %s570 = int_to_ptr.vmem [resolvable:$true] %s569
          %572 = dma.hbm_to_vmem [thread:$0]  %s567, 128, %s570, %s559
        $region92: #{tpu_custom_call.1} parent=87 // pred_fallthru
          _
      $region88: #{tpu_custom_call.1} parent=5 // pred_fallthru
        _
      %p573 = scmp.le.s32.totalorder 1, %s32
      %p574 = scmp.lt.s32.totalorder %s32, 3
      %p575 = pnand %p573, %p574
      %p576 = pneg %p575
      // Predicated region
      $region93: #{tpu_custom_call.1} parent=5 // pred_check
        _
      $region94: #{tpu_custom_call.1} parent=5 // pred_check_branch
        %578 = sbr.rel (%p575) target = $region96
      $region95: #{tpu_custom_call.1} parent=5 // pred_region
        %s579 = ssub.s32 %s32, 1
        %s580 = sand.u32 %s45, 1
        %s581 = scalar_lea.sflag [#allocation3], %s580
        %s582 = sand.u32 %s45, 1
        %s583 = smul.addr %s582, 8
        %s584 = scalar_lea.vmem [#allocation2], %s583
        // Predicated region
        $region97: #{tpu_custom_call.1} parent=95 // pred_check
          %p585 = pneg %p58
        $region98: #{tpu_custom_call.1} parent=95 // pred_check_branch
          %587 = sbr.rel (%p585) target = $region100
        $region99: #{tpu_custom_call.1} parent=95 // pred_region
          %588 = dma.done %s581, 128
        $region100: #{tpu_custom_call.1} parent=95 // pred_fallthru
          _
        // Predicated region
        $region101: #{tpu_custom_call.1} parent=95 // pred_check
          %p589 = pneg %p79
        $region102: #{tpu_custom_call.1} parent=95 // pred_check_branch
          %591 = sbr.rel (%p589) target = $region104
        $region103: #{tpu_custom_call.1} parent=95 // pred_region
          %592 = dma.done [#allocation6], 256
        $region104: #{tpu_custom_call.1} parent=95 // pred_fallthru
          _
        // Predicated region
        $region105: #{tpu_custom_call.1} parent=95 // pred_check
          %p593 = pneg %p373
        $region106: #{tpu_custom_call.1} parent=95 // pred_check_branch
          %595 = sbr.rel (%p593) target = $region108
        $region107: #{tpu_custom_call.1} parent=95 // pred_region
          %596 = dma.done [#allocation6], 512
        $region108: #{tpu_custom_call.1} parent=95 // pred_fallthru
          _
        %s597 = sand.u32 %s45, 1
        %s598 = scalar_lea.sflag [#allocation3], %s597
        %s599 = sand.u32 %s45, 1
        %s600 = smul.addr %s599, 8
        %s601 = scalar_lea.vmem [#allocation2], %s600
        %p602 = pneg %p58
        %p603 = pneg %p55
        %p604 = pneg %p79
        %p605 = pneg %p76
        %p606 = pneg %p100
        %p607 = pneg %p97
        %p608 = pneg %p121
        %p609 = pneg %p118
        %p610 = pneg %p142
        %p611 = pneg %p139
        %p612 = pneg %p163
        %p613 = pneg %p160
        %p614 = pneg %p184
        %p615 = pneg %p181
        %p616 = pneg %p205
        %p617 = pneg %p202
        %p618 = pneg %p226
        %p619 = pneg %p223
        %p620 = pneg %p247
        %p621 = pneg %p244
        %p622 = pneg %p268
        %p623 = pneg %p265
        %p624 = pneg %p289
        %p625 = pneg %p286
        %p626 = pneg %p310
        %p627 = pneg %p307
        %p628 = pneg %p331
        %p629 = pneg %p328
        %p630 = pneg %p352
        %p631 = pneg %p349
        %p632 = pneg %p373
        %p633 = pneg %p370
        %p634 = pneg %p394
        %p635 = pneg %p391
        %p636 = pneg %p415
        %p637 = pneg %p412
        %p638 = pneg %p436
        %p639 = pneg %p433
        %p640 = pneg %p462
        %p641 = pneg %p459
        %s642 = sand.u32 %s449, 1
        %s643 = scalar_lea.sflag [#allocation4], %s642
        %s644 = sand.u32 %s449, 1
        %s645 = scalar_lea.vmem [#allocation8], %s644
        %v646 = vld [vmem:[%s584] sm:$0xff]
        %v647 = vld [vmem:[#allocation5] sm:$0xff]
        %v648 = vld [vmem:[#allocation5 + $0x8] sm:$0xff]
        %v649 = vld [vmem:[%s2] sm:$0x1]
        %v651 = vlaneseq
        %v652 = vshrl.u32 %v651, 7
        %v653 = vsub.s32 0, %v652
        %v654 = vrot.slane %v649, %v653
        %vm656 = vcmask 130048
        %v658 = vsel %vm656, %v646, 0
        %660 = vmatprep.subr.mxu0 0.0
        %661 = vmatpush1.msra.mxu0 %v647
        %662 = vmatprep.subr.mxu0 0.0
        %663 = vmatpush1.msra.mxu0 %v648
        %664 = vmatprep.subr.mxu0 0.0
        %665 = vmatpush1.msra.mxu0 0.0
        %666 = vmatprep.subr.mxu0 0.0
        %667 = vmatpush1.msra.mxu0 0.0
        %668 = vmatprep.subr.mxu0 0.0
        %669 = vmatpush1.msra.mxu0 0.0
        %670 = vmatprep.subr.mxu0 0.0
        %671 = vmatpush1.msra.mxu0 0.0
        %672 = vmatprep.subr.mxu0 0.0
        %673 = vmatpush1.msra.mxu0 0.0
        %674 = vmatprep.subr.mxu0 0.0
        %675 = vmatpush1.msra.mxu0 0.0
        %676 = vmatprep.subr.mxu0 0.0
        %677 = vmatpush1.msra.mxu0 0.0
        %678 = vmatprep.subr.mxu0 0.0
        %679 = vmatpush1.msra.mxu0 0.0
        %680 = vmatprep.subr.mxu0 0.0
        %681 = vmatpush1.msra.mxu0 0.0
        %682 = vmatprep.subr.mxu0 0.0
        %683 = vmatpush1.msra.mxu0 0.0
        %684 = vmatprep.subr.mxu0 0.0
        %685 = vmatpush1.msra.mxu0 0.0
        %686 = vmatprep.subr.mxu0 0.0
        %687 = vmatpush1.msra.mxu0 0.0
        %688 = vmatprep.subr.mxu0 0.0
        %689 = vmatpush1.msra.mxu0 0.0
        %690 = vmatprep.subr.mxu0 0.0
        %691 = vmatpush1.msra.mxu0 0.0
        %692 = vmatprep.subr.mxu0 0.0
        %693 = vmatpush1.msra.mxu0 0.0
        %694 = vmatprep.subr.mxu0 0.0
        %695 = vmatpush1.msra.mxu0 0.0
        %696 = vmatprep.subr.mxu0 0.0
        %697 = vmatpush1.msra.mxu0 0.0
        %698 = vmatprep.subr.mxu0 0.0
        %699 = vmatpush1.msra.mxu0 0.0
        %700 = vmatprep.subr.mxu0 0.0
        %701 = vmatpush1.msra.mxu0 0.0
        %702 = vmatprep.subr.mxu0 0.0
        %703 = vmatpush1.msra.mxu0 0.0
        %704 = vmatprep.subr.mxu0 0.0
        %705 = vmatpush1.msra.mxu0 0.0
        %706 = vmatprep.subr.mxu0 0.0
        %707 = vmatpush1.msra.mxu0 0.0
        %708 = vmatprep.subr.mxu0 0.0
        %709 = vmatpush1.msra.mxu0 0.0
        %710 = vmatprep.subr.mxu0 0.0
        %711 = vmatpush1.msra.mxu0 0.0
        %712 = vmatprep.subr.mxu0 0.0
        %713 = vmatpush1.msra.mxu0 0.0
        %714 = vmatprep.subr.mxu0 0.0
        %715 = vmatpush1.msra.mxu0 0.0
        %716 = vmatprep.subr.mxu0 0.0
        %717 = vmatpush1.msra.mxu0 0.0
        %718 = vmatprep.subr.mxu0 0.0
        %719 = vmatpush1.msra.mxu0 0.0
        %720 = vmatprep.subr.mxu0 0.0
        %721 = vmatpush1.msra.mxu0 0.0
        %722 = vmatprep.subr.mxu0 0.0
        %723 = vmatpush1.msra.mxu0 0.0
        %724 = vmatprep.mubr.f32.mxu0 0.0
        %725 = vmatmul.mubr.f32.gmra.mrb[0].mxu0 %v658
        %v726 = vpop.f32.mrb[0].mxu0
        %v727 = vadd.f32 %v654, %v726
        %v728 = vpop.f32.mrb[0].mxu0
        %729 = vdwg.mxu0
        %v730 = vld [vmem:[%s3] sm:$0xff]
        %v731 = vld [vmem:[%s3 + $0x8] sm:$0xff]
        %v732 = vld [vmem:[%s3 + $0x10] sm:$0xff]
        %v733 = vld [vmem:[%s3 + $0x18] sm:$0xff]
        %v734 = vld [vmem:[%s4] sm:$0x1]
        %v736 = vlaneseq
        %v737 = vshrl.u32 %v736, 7
        %v738 = vsub.s32 0, %v737
        %v739 = vrot.slane %v734, %v738
        %vm741 = vcmask 261120
        %v743 = vsel %vm741, %v727, 0
        %745 = vmatprep.subr.mxu0 0.0
        %746 = vmatpush1.msra.mxu0 %v730
        %747 = vmatprep.subr.mxu0 0.0
        %748 = vmatpush1.msra.mxu0 %v731
        %749 = vmatprep.subr.mxu0 0.0
        %750 = vmatpush1.msra.mxu0 %v732
        %751 = vmatprep.subr.mxu0 0.0
        %752 = vmatpush1.msra.mxu0 %v733
        %753 = vmatprep.subr.mxu0 0.0
        %754 = vmatpush1.msra.mxu0 0.0
        %755 = vmatprep.subr.mxu0 0.0
        %756 = vmatpush1.msra.mxu0 0.0
        %757 = vmatprep.subr.mxu0 0.0
        %758 = vmatpush1.msra.mxu0 0.0
        %759 = vmatprep.subr.mxu0 0.0
        %760 = vmatpush1.msra.mxu0 0.0
        %761 = vmatprep.subr.mxu0 0.0
        %762 = vmatpush1.msra.mxu0 0.0
        %763 = vmatprep.subr.mxu0 0.0
        %764 = vmatpush1.msra.mxu0 0.0
        %765 = vmatprep.subr.mxu0 0.0
        %766 = vmatpush1.msra.mxu0 0.0
        %767 = vmatprep.subr.mxu0 0.0
        %768 = vmatpush1.msra.mxu0 0.0
        %769 = vmatprep.subr.mxu0 0.0
        %770 = vmatpush1.msra.mxu0 0.0
        %771 = vmatprep.subr.mxu0 0.0
        %772 = vmatpush1.msra.mxu0 0.0
        %773 = vmatprep.subr.mxu0 0.0
        %774 = vmatpush1.msra.mxu0 0.0
        %775 = vmatprep.subr.mxu0 0.0
        %776 = vmatpush1.msra.mxu0 0.0
        %777 = vmatprep.subr.mxu0 0.0
        %778 = vmatpush1.msra.mxu0 0.0
        %779 = vmatprep.subr.mxu0 0.0
        %780 = vmatpush1.msra.mxu0 0.0
        %781 = vmatprep.subr.mxu0 0.0
        %782 = vmatpush1.msra.mxu0 0.0
        %783 = vmatprep.subr.mxu0 0.0
        %784 = vmatpush1.msra.mxu0 0.0
        %785 = vmatprep.subr.mxu0 0.0
        %786 = vmatpush1.msra.mxu0 0.0
        %787 = vmatprep.subr.mxu0 0.0
        %788 = vmatpush1.msra.mxu0 0.0
        %789 = vmatprep.subr.mxu0 0.0
        %790 = vmatpush1.msra.mxu0 0.0
        %791 = vmatprep.subr.mxu0 0.0
        %792 = vmatpush1.msra.mxu0 0.0
        %793 = vmatprep.subr.mxu0 0.0
        %794 = vmatpush1.msra.mxu0 0.0
        %795 = vmatprep.subr.mxu0 0.0
        %796 = vmatpush1.msra.mxu0 0.0
        %797 = vmatprep.subr.mxu0 0.0
        %798 = vmatpush1.msra.mxu0 0.0
        %799 = vmatprep.subr.mxu0 0.0
        %800 = vmatpush1.msra.mxu0 0.0
        %801 = vmatprep.subr.mxu0 0.0
        %802 = vmatpush1.msra.mxu0 0.0
        %803 = vmatprep.subr.mxu0 0.0
        %804 = vmatpush1.msra.mxu0 0.0
        %805 = vmatprep.subr.mxu0 0.0
        %806 = vmatpush1.msra.mxu0 0.0
        %807 = vmatprep.subr.mxu0 0.0
        %808 = vmatpush1.msra.mxu0 0.0
        %809 = vmatprep.mubr.f32.mxu0 0.0
        %810 = vmatmul.mubr.f32.gmra.mrb[0].mxu0 %v743
        %v811 = vpop.f32.mrb[0].mxu0
        %v812 = vadd.f32 %v739, %v811
        %v813 = vpop.f32.mrb[0].mxu0
        %814 = vdwg.mxu0
        %816 = vrot.lane.b32.xlu0 %v812, 96
        %v817 = vpop.permute.xlu0 %816
        %vm818 = vcmask 64512
        %v819 = vsel %vm818, %v812, 0
        %v821 = vsel %vm818, %v817, 0
        %823 = vmatprep.subr.mxu0 0.0
        %824 = vmatpush1.xpose.msra.mxu0 %v821
        %825 = vmatprep.subr.mxu0 0.0
        %826 = vmatpush1.xpose.msra.mxu0 0.0
        %827 = vmatprep.subr.mxu0 0.0
        %828 = vmatpush1.xpose.msra.mxu0 0.0
        %829 = vmatprep.subr.mxu0 0.0
        %830 = vmatpush1.xpose.msra.mxu0 0.0
        %831 = vmatprep.subr.mxu0 0.0
        %832 = vmatpush1.xpose.msra.mxu0 0.0
        %833 = vmatprep.subr.mxu0 0.0
        %834 = vmatpush1.xpose.msra.mxu0 0.0
        %835 = vmatprep.subr.mxu0 0.0
        %836 = vmatpush1.xpose.msra.mxu0 0.0
        %837 = vmatprep.subr.mxu0 0.0
        %838 = vmatpush1.xpose.msra.mxu0 0.0
        %839 = vmatprep.subr.mxu0 0.0
        %840 = vmatpush1.xpose.msra.mxu0 0.0
        %841 = vmatprep.subr.mxu0 0.0
        %842 = vmatpush1.xpose.msra.mxu0 0.0
        %843 = vmatprep.subr.mxu0 0.0
        %844 = vmatpush1.xpose.msra.mxu0 0.0
        %845 = vmatprep.subr.mxu0 0.0
        %846 = vmatpush1.xpose.msra.mxu0 0.0
        %847 = vmatprep.subr.mxu0 0.0
        %848 = vmatpush1.xpose.msra.mxu0 0.0
        %849 = vmatprep.subr.mxu0 0.0
        %850 = vmatpush1.xpose.msra.mxu0 0.0
        %851 = vmatprep.subr.mxu0 0.0
        %852 = vmatpush1.xpose.msra.mxu0 0.0
        %853 = vmatprep.subr.mxu0 0.0
        %854 = vmatpush1.xpose.msra.mxu0 0.0
        %855 = vmatprep.subr.mxu0 0.0
        %856 = vmatpush1.xpose.msra.mxu0 0.0
        %857 = vmatprep.subr.mxu0 0.0
        %858 = vmatpush1.xpose.msra.mxu0 0.0
        %859 = vmatprep.subr.mxu0 0.0
        %860 = vmatpush1.xpose.msra.mxu0 0.0
        %861 = vmatprep.subr.mxu0 0.0
        %862 = vmatpush1.xpose.msra.mxu0 0.0
        %863 = vmatprep.subr.mxu0 0.0
        %864 = vmatpush1.xpose.msra.mxu0 0.0
        %865 = vmatprep.subr.mxu0 0.0
        %866 = vmatpush1.xpose.msra.mxu0 0.0
        %867 = vmatprep.subr.mxu0 0.0
        %868 = vmatpush1.xpose.msra.mxu0 0.0
        %869 = vmatprep.subr.mxu0 0.0
        %870 = vmatpush1.xpose.msra.mxu0 0.0
        %871 = vmatprep.subr.mxu0 0.0
        %872 = vmatpush1.xpose.msra.mxu0 0.0
        %873 = vmatprep.subr.mxu0 0.0
        %874 = vmatpush1.xpose.msra.mxu0 0.0
        %875 = vmatprep.subr.mxu0 0.0
        %876 = vmatpush1.xpose.msra.mxu0 0.0
        %877 = vmatprep.subr.mxu0 0.0
        %878 = vmatpush1.xpose.msra.mxu0 0.0
        %879 = vmatprep.subr.mxu0 0.0
        %880 = vmatpush1.xpose.msra.mxu0 0.0
        %881 = vmatprep.subr.mxu0 0.0
        %882 = vmatpush1.xpose.msra.mxu0 0.0
        %883 = vmatprep.subr.mxu0 0.0
        %884 = vmatpush1.xpose.msra.mxu0 0.0
        %885 = vmatprep.subr.mxu0 0.0
        %886 = vmatpush1.xpose.msra.mxu0 0.0
        %887 = vmatprep.mubr.f32.mxu0 0.0
        %888 = vmatmul.mubr.f32.gmra.mrb[0].mxu0 %v819
        %v889 = vpop.f32.mrb[0].mxu0
        %v890 = vadd.f32 0.0, %v889
        %v891 = vpop.f32.mrb[0].mxu0
        %892 = vdwg.mxu0
        %v893 = vmul.f32 %v890, 0.35355338
        %v894 = vsel %vm818, %v893, -inf
        %895 = vmax.xlane.f32.xlu0 %v894
        %v896 = vpop.xlane.xlu0 %895
        %v897 = vsub.f32 %v893, %v896
        %v898 = vmul.f32 %v897, 1.442695
        %v899 = vpow.pop %v898
        %v900 = vsel %vm818, %v899, 0.0
        %901 = vadd.xlane.f32.xlu0 %v900
        %v902 = vpop.xlane.xlu0 %901
        %v903 = vrcp.pop %v902
        %v904 = vmul.f32 %v899, %v903
        %905 = vrot.lane.b32.xlu0 %v812, 64
        %v906 = vpop.permute.xlu0 %905
        %v909 = vsel %vm818, %v904, 0
        %911 = vmatprep.subr.mxu0 0.0
        %912 = vmatpush1.msra.mxu0 %v906
        %913 = vmatprep.subr.mxu0 0.0
        %914 = vmatpush1.msra.mxu0 0.0
        %915 = vmatprep.subr.mxu0 0.0
        %916 = vmatpush1.msra.mxu0 0.0
        %917 = vmatprep.subr.mxu0 0.0
        %918 = vmatpush1.msra.mxu0 0.0
        %919 = vmatprep.subr.mxu0 0.0
        %920 = vmatpush1.msra.mxu0 0.0
        %921 = vmatprep.subr.mxu0 0.0
        %922 = vmatpush1.msra.mxu0 0.0
        %923 = vmatprep.subr.mxu0 0.0
        %924 = vmatpush1.msra.mxu0 0.0
        %925 = vmatprep.subr.mxu0 0.0
        %926 = vmatpush1.msra.mxu0 0.0
        %927 = vmatprep.subr.mxu0 0.0
        %928 = vmatpush1.msra.mxu0 0.0
        %929 = vmatprep.subr.mxu0 0.0
        %930 = vmatpush1.msra.mxu0 0.0
        %931 = vmatprep.subr.mxu0 0.0
        %932 = vmatpush1.msra.mxu0 0.0
        %933 = vmatprep.subr.mxu0 0.0
        %934 = vmatpush1.msra.mxu0 0.0
        %935 = vmatprep.subr.mxu0 0.0
        %936 = vmatpush1.msra.mxu0 0.0
        %937 = vmatprep.subr.mxu0 0.0
        %938 = vmatpush1.msra.mxu0 0.0
        %939 = vmatprep.subr.mxu0 0.0
        %940 = vmatpush1.msra.mxu0 0.0
        %941 = vmatprep.subr.mxu0 0.0
        %942 = vmatpush1.msra.mxu0 0.0
        %943 = vmatprep.subr.mxu0 0.0
        %944 = vmatpush1.msra.mxu0 0.0
        %945 = vmatprep.subr.mxu0 0.0
        %946 = vmatpush1.msra.mxu0 0.0
        %947 = vmatprep.subr.mxu0 0.0
        %948 = vmatpush1.msra.mxu0 0.0
        %949 = vmatprep.subr.mxu0 0.0
        %950 = vmatpush1.msra.mxu0 0.0
        %951 = vmatprep.subr.mxu0 0.0
        %952 = vmatpush1.msra.mxu0 0.0
        %953 = vmatprep.subr.mxu0 0.0
        %954 = vmatpush1.msra.mxu0 0.0
        %955 = vmatprep.subr.mxu0 0.0
        %956 = vmatpush1.msra.mxu0 0.0
        %957 = vmatprep.subr.mxu0 0.0
        %958 = vmatpush1.msra.mxu0 0.0
        %959 = vmatprep.subr.mxu0 0.0
        %960 = vmatpush1.msra.mxu0 0.0
        %961 = vmatprep.subr.mxu0 0.0
        %962 = vmatpush1.msra.mxu0 0.0
        %963 = vmatprep.subr.mxu0 0.0
        %964 = vmatpush1.msra.mxu0 0.0
        %965 = vmatprep.subr.mxu0 0.0
        %966 = vmatpush1.msra.mxu0 0.0
        %967 = vmatprep.subr.mxu0 0.0
        %968 = vmatpush1.msra.mxu0 0.0
        %969 = vmatprep.subr.mxu0 0.0
        %970 = vmatpush1.msra.mxu0 0.0
        %971 = vmatprep.subr.mxu0 0.0
        %972 = vmatpush1.msra.mxu0 0.0
        %973 = vmatprep.subr.mxu0 0.0
        %974 = vmatpush1.msra.mxu0 0.0
        %975 = vmatprep.mubr.f32.mxu0 0.0
        %976 = vmatmul.mubr.f32.gmra.mrb[0].mxu0 %v909
        %v977 = vpop.f32.mrb[0].mxu0
        %v978 = vadd.f32 0.0, %v977
        %v979 = vpop.f32.mrb[0].mxu0
        %980 = vdwg.mxu0
        %981 = vrot.lane.b32.xlu0 %v812, 120
        %v982 = vpop.permute.xlu0 %981
        %983 = vrot.lane.b32.xlu0 %v812, 88
        %v984 = vpop.permute.xlu0 %983
        %v985 = vsel %vm818, %v982, 0
        %v987 = vsel %vm818, %v984, 0
        %989 = vmatprep.subr.mxu0 0.0
        %990 = vmatpush1.xpose.msra.mxu0 %v987
        %991 = vmatprep.subr.mxu0 0.0
        %992 = vmatpush1.xpose.msra.mxu0 0.0
        %993 = vmatprep.subr.mxu0 0.0
        %994 = vmatpush1.xpose.msra.mxu0 0.0
        %995 = vmatprep.subr.mxu0 0.0
        %996 = vmatpush1.xpose.msra.mxu0 0.0
        %997 = vmatprep.subr.mxu0 0.0
        %998 = vmatpush1.xpose.msra.mxu0 0.0
        %999 = vmatprep.subr.mxu0 0.0
        %1000 = vmatpush1.xpose.msra.mxu0 0.0
        %1001 = vmatprep.subr.mxu0 0.0
        %1002 = vmatpush1.xpose.msra.mxu0 0.0
        %1003 = vmatprep.subr.mxu0 0.0
        %1004 = vmatpush1.xpose.msra.mxu0 0.0
        %1005 = vmatprep.subr.mxu0 0.0
        %1006 = vmatpush1.xpose.msra.mxu0 0.0
        %1007 = vmatprep.subr.mxu0 0.0
        %1008 = vmatpush1.xpose.msra.mxu0 0.0
        %1009 = vmatprep.subr.mxu0 0.0
        %1010 = vmatpush1.xpose.msra.mxu0 0.0
        %1011 = vmatprep.subr.mxu0 0.0
        %1012 = vmatpush1.xpose.msra.mxu0 0.0
        %1013 = vmatprep.subr.mxu0 0.0
        %1014 = vmatpush1.xpose.msra.mxu0 0.0
        %1015 = vmatprep.subr.mxu0 0.0
        %1016 = vmatpush1.xpose.msra.mxu0 0.0
        %1017 = vmatprep.subr.mxu0 0.0
        %1018 = vmatpush1.xpose.msra.mxu0 0.0
        %1019 = vmatprep.subr.mxu0 0.0
        %1020 = vmatpush1.xpose.msra.mxu0 0.0
        %1021 = vmatprep.subr.mxu0 0.0
        %1022 = vmatpush1.xpose.msra.mxu0 0.0
        %1023 = vmatprep.subr.mxu0 0.0
        %1024 = vmatpush1.xpose.msra.mxu0 0.0
        %1025 = vmatprep.subr.mxu0 0.0
        %1026 = vmatpush1.xpose.msra.mxu0 0.0
        %1027 = vmatprep.subr.mxu0 0.0
        %1028 = vmatpush1.xpose.msra.mxu0 0.0
        %1029 = vmatprep.subr.mxu0 0.0
        %1030 = vmatpush1.xpose.msra.mxu0 0.0
        %1031 = vmatprep.subr.mxu0 0.0
        %1032 = vmatpush1.xpose.msra.mxu0 0.0
        %1033 = vmatprep.subr.mxu0 0.0
        %1034 = vmatpush1.xpose.msra.mxu0 0.0
        %1035 = vmatprep.subr.mxu0 0.0
        %1036 = vmatpush1.xpose.msra.mxu0 0.0
        %1037 = vmatprep.subr.mxu0 0.0
        %1038 = vmatpush1.xpose.msra.mxu0 0.0
        %1039 = vmatprep.subr.mxu0 0.0
        %1040 = vmatpush1.xpose.msra.mxu0 0.0
        %1041 = vmatprep.subr.mxu0 0.0
        %1042 = vmatpush1.xpose.msra.mxu0 0.0
        %1043 = vmatprep.subr.mxu0 0.0
        %1044 = vmatpush1.xpose.msra.mxu0 0.0
        %1045 = vmatprep.subr.mxu0 0.0
        %1046 = vmatpush1.xpose.msra.mxu0 0.0
        %1047 = vmatprep.subr.mxu0 0.0
        %1048 = vmatpush1.xpose.msra.mxu0 0.0
        %1049 = vmatprep.subr.mxu0 0.0
        %1050 = vmatpush1.xpose.msra.mxu0 0.0
        %1051 = vmatprep.subr.mxu0 0.0
        %1052 = vmatpush1.xpose.msra.mxu0 0.0
        %1053 = vmatprep.mubr.f32.mxu0 0.0
        %1054 = vmatmul.mubr.f32.gmra.mrb[0].mxu0 %v985
        %v1055 = vpop.f32.mrb[0].mxu0
        %v1056 = vadd.f32 0.0, %v1055
        %v1057 = vpop.f32.mrb[0].mxu0
        %1058 = vdwg.mxu0
        %v1059 = vmul.f32 %v1056, 0.35355338
        %v1060 = vsel %vm818, %v1059, -inf
        %1061 = vmax.xlane.f32.xlu0 %v1060
        %v1062 = vpop.xlane.xlu0 %1061
        %v1063 = vsub.f32 %v1059, %v1062
        %v1064 = vmul.f32 %v1063, 1.442695
        %v1065 = vpow.pop %v1064
        %v1066 = vsel %vm818, %v1065, 0.0
        %1067 = vadd.xlane.f32.xlu0 %v1066
        %v1068 = vpop.xlane.xlu0 %1067
        %v1069 = vrcp.pop %v1068
        %v1070 = vmul.f32 %v1065, %v1069
        %1071 = vrot.lane.b32.xlu0 %v812, 56
        %v1072 = vpop.permute.xlu0 %1071
        %v1075 = vsel %vm818, %v1070, 0
        %1077 = vmatprep.subr.mxu0 0.0
        %1078 = vmatpush1.msra.mxu0 %v1072
        %1079 = vmatprep.subr.mxu0 0.0
        %1080 = vmatpush1.msra.mxu0 0.0
        %1081 = vmatprep.subr.mxu0 0.0
        %1082 = vmatpush1.msra.mxu0 0.0
        %1083 = vmatprep.subr.mxu0 0.0
        %1084 = vmatpush1.msra.mxu0 0.0
        %1085 = vmatprep.subr.mxu0 0.0
        %1086 = vmatpush1.msra.mxu0 0.0
        %1087 = vmatprep.subr.mxu0 0.0
        %1088 = vmatpush1.msra.mxu0 0.0
        %1089 = vmatprep.subr.mxu0 0.0
        %1090 = vmatpush1.msra.mxu0 0.0
        %1091 = vmatprep.subr.mxu0 0.0
        %1092 = vmatpush1.msra.mxu0 0.0
        %1093 = vmatprep.subr.mxu0 0.0
        %1094 = vmatpush1.msra.mxu0 0.0
        %1095 = vmatprep.subr.mxu0 0.0
        %1096 = vmatpush1.msra.mxu0 0.0
        %1097 = vmatprep.subr.mxu0 0.0
        %1098 = vmatpush1.msra.mxu0 0.0
        %1099 = vmatprep.subr.mxu0 0.0
        %1100 = vmatpush1.msra.mxu0 0.0
        %1101 = vmatprep.subr.mxu0 0.0
        %1102 = vmatpush1.msra.mxu0 0.0
        %1103 = vmatprep.subr.mxu0 0.0
        %1104 = vmatpush1.msra.mxu0 0.0
        %1105 = vmatprep.subr.mxu0 0.0
        %1106 = vmatpush1.msra.mxu0 0.0
        %1107 = vmatprep.subr.mxu0 0.0
        %1108 = vmatpush1.msra.mxu0 0.0
        %1109 = vmatprep.subr.mxu0 0.0
        %1110 = vmatpush1.msra.mxu0 0.0
        %1111 = vmatprep.subr.mxu0 0.0
        %1112 = vmatpush1.msra.mxu0 0.0
        %1113 = vmatprep.subr.mxu0 0.0
        %1114 = vmatpush1.msra.mxu0 0.0
        %1115 = vmatprep.subr.mxu0 0.0
        %1116 = vmatpush1.msra.mxu0 0.0
        %1117 = vmatprep.subr.mxu0 0.0
        %1118 = vmatpush1.msra.mxu0 0.0
        %1119 = vmatprep.subr.mxu0 0.0
        %1120 = vmatpush1.msra.mxu0 0.0
        %1121 = vmatprep.subr.mxu0 0.0
        %1122 = vmatpush1.msra.mxu0 0.0
        %1123 = vmatprep.subr.mxu0 0.0
        %1124 = vmatpush1.msra.mxu0 0.0
        %1125 = vmatprep.subr.mxu0 0.0
        %1126 = vmatpush1.msra.mxu0 0.0
        %1127 = vmatprep.subr.mxu0 0.0
        %1128 = vmatpush1.msra.mxu0 0.0
        %1129 = vmatprep.subr.mxu0 0.0
        %1130 = vmatpush1.msra.mxu0 0.0
        %1131 = vmatprep.subr.mxu0 0.0
        %1132 = vmatpush1.msra.mxu0 0.0
        %1133 = vmatprep.subr.mxu0 0.0
        %1134 = vmatpush1.msra.mxu0 0.0
        %1135 = vmatprep.subr.mxu0 0.0
        %1136 = vmatpush1.msra.mxu0 0.0
        %1137 = vmatprep.subr.mxu0 0.0
        %1138 = vmatpush1.msra.mxu0 0.0
        %1139 = vmatprep.subr.mxu0 0.0
        %1140 = vmatpush1.msra.mxu0 0.0
        %1141 = vmatprep.mubr.f32.mxu0 0.0
        %1142 = vmatmul.mubr.f32.gmra.mrb[0].mxu0 %v1075
        %v1143 = vpop.f32.mrb[0].mxu0
        %v1144 = vadd.f32 0.0, %v1143
        %v1145 = vpop.f32.mrb[0].mxu0
        %1146 = vdwg.mxu0
        %1147 = vrot.lane.b32.xlu0 %v812, 112
        %v1148 = vpop.permute.xlu0 %1147
        %1149 = vrot.lane.b32.xlu0 %v812, 80
        %v1150 = vpop.permute.xlu0 %1149
        %v1151 = vsel %vm818, %v1148, 0
        %v1153 = vsel %vm818, %v1150, 0
        %1155 = vmatprep.subr.mxu0 0.0
        %1156 = vmatpush1.xpose.msra.mxu0 %v1153
        %1157 = vmatprep.subr.mxu0 0.0
        %1158 = vmatpush1.xpose.msra.mxu0 0.0
        %1159 = vmatprep.subr.mxu0 0.0
        %1160 = vmatpush1.xpose.msra.mxu0 0.0
        %1161 = vmatprep.subr.mxu0 0.0
        %1162 = vmatpush1.xpose.msra.mxu0 0.0
        %1163 = vmatprep.subr.mxu0 0.0
        %1164 = vmatpush1.xpose.msra.mxu0 0.0
        %1165 = vmatprep.subr.mxu0 0.0
        %1166 = vmatpush1.xpose.msra.mxu0 0.0
        %1167 = vmatprep.subr.mxu0 0.0
        %1168 = vmatpush1.xpose.msra.mxu0 0.0
        %1169 = vmatprep.subr.mxu0 0.0
        %1170 = vmatpush1.xpose.msra.mxu0 0.0
        %1171 = vmatprep.subr.mxu0 0.0
        %1172 = vmatpush1.xpose.msra.mxu0 0.0
        %1173 = vmatprep.subr.mxu0 0.0
        %1174 = vmatpush1.xpose.msra.mxu0 0.0
        %1175 = vmatprep.subr.mxu0 0.0
        %1176 = vmatpush1.xpose.msra.mxu0 0.0
        %1177 = vmatprep.subr.mxu0 0.0
        %1178 = vmatpush1.xpose.msra.mxu0 0.0
        %1179 = vmatprep.subr.mxu0 0.0
        %1180 = vmatpush1.xpose.msra.mxu0 0.0
        %1181 = vmatprep.subr.mxu0 0.0
        %1182 = vmatpush1.xpose.msra.mxu0 0.0
        %1183 = vmatprep.subr.mxu0 0.0
        %1184 = vmatpush1.xpose.msra.mxu0 0.0
        %1185 = vmatprep.subr.mxu0 0.0
        %1186 = vmatpush1.xpose.msra.mxu0 0.0
        %1187 = vmatprep.subr.mxu0 0.0
        %1188 = vmatpush1.xpose.msra.mxu0 0.0
        %1189 = vmatprep.subr.mxu0 0.0
        %1190 = vmatpush1.xpose.msra.mxu0 0.0
        %1191 = vmatprep.subr.mxu0 0.0
        %1192 = vmatpush1.xpose.msra.mxu0 0.0
        %1193 = vmatprep.subr.mxu0 0.0
        %1194 = vmatpush1.xpose.msra.mxu0 0.0
        %1195 = vmatprep.subr.mxu0 0.0
        %1196 = vmatpush1.xpose.msra.mxu0 0.0
        %1197 = vmatprep.subr.mxu0 0.0
        %1198 = vmatpush1.xpose.msra.mxu0 0.0
        %1199 = vmatprep.subr.mxu0 0.0
        %1200 = vmatpush1.xpose.msra.mxu0 0.0
        %1201 = vmatprep.subr.mxu0 0.0
        %1202 = vmatpush1.xpose.msra.mxu0 0.0
        %1203 = vmatprep.subr.mxu0 0.0
        %1204 = vmatpush1.xpose.msra.mxu0 0.0
        %1205 = vmatprep.subr.mxu0 0.0
        %1206 = vmatpush1.xpose.msra.mxu0 0.0
        %1207 = vmatprep.subr.mxu0 0.0
        %1208 = vmatpush1.xpose.msra.mxu0 0.0
        %1209 = vmatprep.subr.mxu0 0.0
        %1210 = vmatpush1.xpose.msra.mxu0 0.0
        %1211 = vmatprep.subr.mxu0 0.0
        %1212 = vmatpush1.xpose.msra.mxu0 0.0
        %1213 = vmatprep.subr.mxu0 0.0
        %1214 = vmatpush1.xpose.msra.mxu0 0.0
        %1215 = vmatprep.subr.mxu0 0.0
        %1216 = vmatpush1.xpose.msra.mxu0 0.0
        %1217 = vmatprep.subr.mxu0 0.0
        %1218 = vmatpush1.xpose.msra.mxu0 0.0
        %1219 = vmatprep.mubr.f32.mxu0 0.0
        %1220 = vmatmul.mubr.f32.gmra.mrb[0].mxu0 %v1151
        %v1221 = vpop.f32.mrb[0].mxu0
        %v1222 = vadd.f32 0.0, %v1221
        %v1223 = vpop.f32.mrb[0].mxu0
        %1224 = vdwg.mxu0
        %v1225 = vmul.f32 %v1222, 0.35355338
        %v1226 = vsel %vm818, %v1225, -inf
        %1227 = vmax.xlane.f32.xlu0 %v1226
        %v1228 = vpop.xlane.xlu0 %1227
        %v1229 = vsub.f32 %v1225, %v1228
        %v1230 = vmul.f32 %v1229, 1.442695
        %v1231 = vpow.pop %v1230
        %v1232 = vsel %vm818, %v1231, 0.0
        %1233 = vadd.xlane.f32.xlu0 %v1232
        %v1234 = vpop.xlane.xlu0 %1233
        %v1235 = vrcp.pop %v1234
        %v1236 = vmul.f32 %v1231, %v1235
        %1237 = vrot.lane.b32.xlu0 %v812, 48
        %v1238 = vpop.permute.xlu0 %1237
        %v1241 = vsel %vm818, %v1236, 0
        %1243 = vmatprep.subr.mxu0 0.0
        %1244 = vmatpush1.msra.mxu0 %v1238
        %1245 = vmatprep.subr.mxu0 0.0
        %1246 = vmatpush1.msra.mxu0 0.0
        %1247 = vmatprep.subr.mxu0 0.0
        %1248 = vmatpush1.msra.mxu0 0.0
        %1249 = vmatprep.subr.mxu0 0.0
        %1250 = vmatpush1.msra.mxu0 0.0
        %1251 = vmatprep.subr.mxu0 0.0
        %1252 = vmatpush1.msra.mxu0 0.0
        %1253 = vmatprep.subr.mxu0 0.0
        %1254 = vmatpush1.msra.mxu0 0.0
        %1255 = vmatprep.subr.mxu0 0.0
        %1256 = vmatpush1.msra.mxu0 0.0
        %1257 = vmatprep.subr.mxu0 0.0
        %1258 = vmatpush1.msra.mxu0 0.0
        %1259 = vmatprep.subr.mxu0 0.0
        %1260 = vmatpush1.msra.mxu0 0.0
        %1261 = vmatprep.subr.mxu0 0.0
        %1262 = vmatpush1.msra.mxu0 0.0
        %1263 = vmatprep.subr.mxu0 0.0
        %1264 = vmatpush1.msra.mxu0 0.0
        %1265 = vmatprep.subr.mxu0 0.0
        %1266 = vmatpush1.msra.mxu0 0.0
        %1267 = vmatprep.subr.mxu0 0.0
        %1268 = vmatpush1.msra.mxu0 0.0
        %1269 = vmatprep.subr.mxu0 0.0
        %1270 = vmatpush1.msra.mxu0 0.0
        %1271 = vmatprep.subr.mxu0 0.0
        %1272 = vmatpush1.msra.mxu0 0.0
        %1273 = vmatprep.subr.mxu0 0.0
        %1274 = vmatpush1.msra.mxu0 0.0
        %1275 = vmatprep.subr.mxu0 0.0
        %1276 = vmatpush1.msra.mxu0 0.0
        %1277 = vmatprep.subr.mxu0 0.0
        %1278 = vmatpush1.msra.mxu0 0.0
        %1279 = vmatprep.subr.mxu0 0.0
        %1280 = vmatpush1.msra.mxu0 0.0
        %1281 = vmatprep.subr.mxu0 0.0
        %1282 = vmatpush1.msra.mxu0 0.0
        %1283 = vmatprep.subr.mxu0 0.0
        %1284 = vmatpush1.msra.mxu0 0.0
        %1285 = vmatprep.subr.mxu0 0.0
        %1286 = vmatpush1.msra.mxu0 0.0
        %1287 = vmatprep.subr.mxu0 0.0
        %1288 = vmatpush1.msra.mxu0 0.0
        %1289 = vmatprep.subr.mxu0 0.0
        %1290 = vmatpush1.msra.mxu0 0.0
        %1291 = vmatprep.subr.mxu0 0.0
        %1292 = vmatpush1.msra.mxu0 0.0
        %1293 = vmatprep.subr.mxu0 0.0
        %1294 = vmatpush1.msra.mxu0 0.0
        %1295 = vmatprep.subr.mxu0 0.0
        %1296 = vmatpush1.msra.mxu0 0.0
        %1297 = vmatprep.subr.mxu0 0.0
        %1298 = vmatpush1.msra.mxu0 0.0
        %1299 = vmatprep.subr.mxu0 0.0
        %1300 = vmatpush1.msra.mxu0 0.0
        %1301 = vmatprep.subr.mxu0 0.0
        %1302 = vmatpush1.msra.mxu0 0.0
        %1303 = vmatprep.subr.mxu0 0.0
        %1304 = vmatpush1.msra.mxu0 0.0
        %1305 = vmatprep.subr.mxu0 0.0
        %1306 = vmatpush1.msra.mxu0 0.0
        %1307 = vmatprep.mubr.f32.mxu0 0.0
        %1308 = vmatmul.mubr.f32.gmra.mrb[0].mxu0 %v1241
        %v1309 = vpop.f32.mrb[0].mxu0
        %v1310 = vadd.f32 0.0, %v1309
        %v1311 = vpop.f32.mrb[0].mxu0
        %1312 = vdwg.mxu0
        %1313 = vrot.lane.b32.xlu0 %v812, 104
        %v1314 = vpop.permute.xlu0 %1313
        %1315 = vrot.lane.b32.xlu0 %v812, 72
        %v1316 = vpop.permute.xlu0 %1315
        %v1317 = vsel %vm818, %v1314, 0
        %v1319 = vsel %vm818, %v1316, 0
        %1321 = vmatprep.subr.mxu0 0.0
        %1322 = vmatpush1.xpose.msra.mxu0 %v1319
        %1323 = vmatprep.subr.mxu0 0.0
        %1324 = vmatpush1.xpose.msra.mxu0 0.0
        %1325 = vmatprep.subr.mxu0 0.0
        %1326 = vmatpush1.xpose.msra.mxu0 0.0
        %1327 = vmatprep.subr.mxu0 0.0
        %1328 = vmatpush1.xpose.msra.mxu0 0.0
        %1329 = vmatprep.subr.mxu0 0.0
        %1330 = vmatpush1.xpose.msra.mxu0 0.0
        %1331 = vmatprep.subr.mxu0 0.0
        %1332 = vmatpush1.xpose.msra.mxu0 0.0
        %1333 = vmatprep.subr.mxu0 0.0
        %1334 = vmatpush1.xpose.msra.mxu0 0.0
        %1335 = vmatprep.subr.mxu0 0.0
        %1336 = vmatpush1.xpose.msra.mxu0 0.0
        %1337 = vmatprep.subr.mxu0 0.0
        %1338 = vmatpush1.xpose.msra.mxu0 0.0
        %1339 = vmatprep.subr.mxu0 0.0
        %1340 = vmatpush1.xpose.msra.mxu0 0.0
        %1341 = vmatprep.subr.mxu0 0.0
        %1342 = vmatpush1.xpose.msra.mxu0 0.0
        %1343 = vmatprep.subr.mxu0 0.0
        %1344 = vmatpush1.xpose.msra.mxu0 0.0
        %1345 = vmatprep.subr.mxu0 0.0
        %1346 = vmatpush1.xpose.msra.mxu0 0.0
        %1347 = vmatprep.subr.mxu0 0.0
        %1348 = vmatpush1.xpose.msra.mxu0 0.0
        %1349 = vmatprep.subr.mxu0 0.0
        %1350 = vmatpush1.xpose.msra.mxu0 0.0
        %1351 = vmatprep.subr.mxu0 0.0
        %1352 = vmatpush1.xpose.msra.mxu0 0.0
        %1353 = vmatprep.subr.mxu0 0.0
        %1354 = vmatpush1.xpose.msra.mxu0 0.0
        %1355 = vmatprep.subr.mxu0 0.0
        %1356 = vmatpush1.xpose.msra.mxu0 0.0
        %1357 = vmatprep.subr.mxu0 0.0
        %1358 = vmatpush1.xpose.msra.mxu0 0.0
        %1359 = vmatprep.subr.mxu0 0.0
        %1360 = vmatpush1.xpose.msra.mxu0 0.0
        %1361 = vmatprep.subr.mxu0 0.0
        %1362 = vmatpush1.xpose.msra.mxu0 0.0
        %1363 = vmatprep.subr.mxu0 0.0
        %1364 = vmatpush1.xpose.msra.mxu0 0.0
        %1365 = vmatprep.subr.mxu0 0.0
        %1366 = vmatpush1.xpose.msra.mxu0 0.0
        %1367 = vmatprep.subr.mxu0 0.0
        %1368 = vmatpush1.xpose.msra.mxu0 0.0
        %1369 = vmatprep.subr.mxu0 0.0
        %1370 = vmatpush1.xpose.msra.mxu0 0.0
        %1371 = vmatprep.subr.mxu0 0.0
        %1372 = vmatpush1.xpose.msra.mxu0 0.0
        %1373 = vmatprep.subr.mxu0 0.0
        %1374 = vmatpush1.xpose.msra.mxu0 0.0
        %1375 = vmatprep.subr.mxu0 0.0
        %1376 = vmatpush1.xpose.msra.mxu0 0.0
        %1377 = vmatprep.subr.mxu0 0.0
        %1378 = vmatpush1.xpose.msra.mxu0 0.0
        %1379 = vmatprep.subr.mxu0 0.0
        %1380 = vmatpush1.xpose.msra.mxu0 0.0
        %1381 = vmatprep.subr.mxu0 0.0
        %1382 = vmatpush1.xpose.msra.mxu0 0.0
        %1383 = vmatprep.subr.mxu0 0.0
        %1384 = vmatpush1.xpose.msra.mxu0 0.0
        %1385 = vmatprep.mubr.f32.mxu0 0.0
        %1386 = vmatmul.mubr.f32.gmra.mrb[0].mxu0 %v1317
        %v1387 = vpop.f32.mrb[0].mxu0
        %v1388 = vadd.f32 0.0, %v1387
        %v1389 = vpop.f32.mrb[0].mxu0
        %1390 = vdwg.mxu0
        %v1391 = vmul.f32 %v1388, 0.35355338
        %v1392 = vsel %vm818, %v1391, -inf
        %1393 = vmax.xlane.f32.xlu0 %v1392
        %v1394 = vpop.xlane.xlu0 %1393
        %v1395 = vsub.f32 %v1391, %v1394
        %v1396 = vmul.f32 %v1395, 1.442695
        %v1397 = vpow.pop %v1396
        %v1398 = vsel %vm818, %v1397, 0.0
        %1399 = vadd.xlane.f32.xlu0 %v1398
        %v1400 = vpop.xlane.xlu0 %1399
        %v1401 = vrcp.pop %v1400
        %v1402 = vmul.f32 %v1397, %v1401
        %1403 = vrot.lane.b32.xlu0 %v812, 40
        %v1404 = vpop.permute.xlu0 %1403
        %v1407 = vsel %vm818, %v1402, 0
        %1409 = vmatprep.subr.mxu0 0.0
        %1410 = vmatpush1.msra.mxu0 %v1404
        %1411 = vmatprep.subr.mxu0 0.0
        %1412 = vmatpush1.msra.mxu0 0.0
        %1413 = vmatprep.subr.mxu0 0.0
        %1414 = vmatpush1.msra.mxu0 0.0
        %1415 = vmatprep.subr.mxu0 0.0
        %1416 = vmatpush1.msra.mxu0 0.0
        %1417 = vmatprep.subr.mxu0 0.0
        %1418 = vmatpush1.msra.mxu0 0.0
        %1419 = vmatprep.subr.mxu0 0.0
        %1420 = vmatpush1.msra.mxu0 0.0
        %1421 = vmatprep.subr.mxu0 0.0
        %1422 = vmatpush1.msra.mxu0 0.0
        %1423 = vmatprep.subr.mxu0 0.0
        %1424 = vmatpush1.msra.mxu0 0.0
        %1425 = vmatprep.subr.mxu0 0.0
        %1426 = vmatpush1.msra.mxu0 0.0
        %1427 = vmatprep.subr.mxu0 0.0
        %1428 = vmatpush1.msra.mxu0 0.0
        %1429 = vmatprep.subr.mxu0 0.0
        %1430 = vmatpush1.msra.mxu0 0.0
        %1431 = vmatprep.subr.mxu0 0.0
        %1432 = vmatpush1.msra.mxu0 0.0
        %1433 = vmatprep.subr.mxu0 0.0
        %1434 = vmatpush1.msra.mxu0 0.0
        %1435 = vmatprep.subr.mxu0 0.0
        %1436 = vmatpush1.msra.mxu0 0.0
        %1437 = vmatprep.subr.mxu0 0.0
        %1438 = vmatpush1.msra.mxu0 0.0
        %1439 = vmatprep.subr.mxu0 0.0
        %1440 = vmatpush1.msra.mxu0 0.0
        %1441 = vmatprep.subr.mxu0 0.0
        %1442 = vmatpush1.msra.mxu0 0.0
        %1443 = vmatprep.subr.mxu0 0.0
        %1444 = vmatpush1.msra.mxu0 0.0
        %1445 = vmatprep.subr.mxu0 0.0
        %1446 = vmatpush1.msra.mxu0 0.0
        %1447 = vmatprep.subr.mxu0 0.0
        %1448 = vmatpush1.msra.mxu0 0.0
        %1449 = vmatprep.subr.mxu0 0.0
        %1450 = vmatpush1.msra.mxu0 0.0
        %1451 = vmatprep.subr.mxu0 0.0
        %1452 = vmatpush1.msra.mxu0 0.0
        %1453 = vmatprep.subr.mxu0 0.0
        %1454 = vmatpush1.msra.mxu0 0.0
        %1455 = vmatprep.subr.mxu0 0.0
        %1456 = vmatpush1.msra.mxu0 0.0
        %1457 = vmatprep.subr.mxu0 0.0
        %1458 = vmatpush1.msra.mxu0 0.0
        %1459 = vmatprep.subr.mxu0 0.0
        %1460 = vmatpush1.msra.mxu0 0.0
        %1461 = vmatprep.subr.mxu0 0.0
        %1462 = vmatpush1.msra.mxu0 0.0
        %1463 = vmatprep.subr.mxu0 0.0
        %1464 = vmatpush1.msra.mxu0 0.0
        %1465 = vmatprep.subr.mxu0 0.0
        %1466 = vmatpush1.msra.mxu0 0.0
        %1467 = vmatprep.subr.mxu0 0.0
        %1468 = vmatpush1.msra.mxu0 0.0
        %1469 = vmatprep.subr.mxu0 0.0
        %1470 = vmatpush1.msra.mxu0 0.0
        %1471 = vmatprep.subr.mxu0 0.0
        %1472 = vmatpush1.msra.mxu0 0.0
        %1473 = vmatprep.mubr.f32.mxu0 0.0
        %1474 = vmatmul.mubr.f32.gmra.mrb[0].mxu0 %v1407
        %v1475 = vpop.f32.mrb[0].mxu0
        %v1476 = vadd.f32 0.0, %v1475
        %v1477 = vpop.f32.mrb[0].mxu0
        %1478 = vdwg.mxu0
        %1480 = vrot.lane.b32.xlu0 %v1144, 8
        %v1481 = vpop.permute.xlu0 %1480
        %1484 = vrot.lane.b32.xlu0 %v1310, 16
        %v1485 = vpop.permute.xlu0 %1484
        %1488 = vrot.lane.b32.xlu0 %v1476, 24
        %v1489 = vpop.permute.xlu0 %1488
        %v1491 = vsel %vm818, %v978, %v1481
        %v1492 = vsel %vm656, %v1491, %v1485
        %vm1493 = vcmask 195584
        %v1494 = vsel %vm1493, %v1492, %v1489
        %v1495 = vld [vmem:[%s5] sm:$0xff]
        %v1496 = vld [vmem:[%s5 + $0x8] sm:$0xff]
        %v1497 = vld [vmem:[%s5 + $0x10] sm:$0xff]
        %v1498 = vld [vmem:[%s5 + $0x18] sm:$0xff]
        %v1499 = vld [vmem:[%s6] sm:$0x1]
        %v1501 = vlaneseq
        %v1502 = vshrl.u32 %v1501, 7
        %v1503 = vsub.s32 0, %v1502
        %v1504 = vrot.slane %v1499, %v1503
        %v1507 = vsel %vm741, %v1494, 0
        %1509 = vmatprep.subr.mxu0 0.0
        %1510 = vmatpush1.msra.mxu0 %v1495
        %1511 = vmatprep.subr.mxu0 0.0
        %1512 = vmatpush1.msra.mxu0 %v1496
        %1513 = vmatprep.subr.mxu0 0.0
        %1514 = vmatpush1.msra.mxu0 %v1497
        %1515 = vmatprep.subr.mxu0 0.0
        %1516 = vmatpush1.msra.mxu0 %v1498
        %1517 = vmatprep.subr.mxu0 0.0
        %1518 = vmatpush1.msra.mxu0 0.0
        %1519 = vmatprep.subr.mxu0 0.0
        %1520 = vmatpush1.msra.mxu0 0.0
        %1521 = vmatprep.subr.mxu0 0.0
        %1522 = vmatpush1.msra.mxu0 0.0
        %1523 = vmatprep.subr.mxu0 0.0
        %1524 = vmatpush1.msra.mxu0 0.0
        %1525 = vmatprep.subr.mxu0 0.0
        %1526 = vmatpush1.msra.mxu0 0.0
        %1527 = vmatprep.subr.mxu0 0.0
        %1528 = vmatpush1.msra.mxu0 0.0
        %1529 = vmatprep.subr.mxu0 0.0
        %1530 = vmatpush1.msra.mxu0 0.0
        %1531 = vmatprep.subr.mxu0 0.0
        %1532 = vmatpush1.msra.mxu0 0.0
        %1533 = vmatprep.subr.mxu0 0.0
        %1534 = vmatpush1.msra.mxu0 0.0
        %1535 = vmatprep.subr.mxu0 0.0
        %1536 = vmatpush1.msra.mxu0 0.0
        %1537 = vmatprep.subr.mxu0 0.0
        %1538 = vmatpush1.msra.mxu0 0.0
        %1539 = vmatprep.subr.mxu0 0.0
        %1540 = vmatpush1.msra.mxu0 0.0
        %1541 = vmatprep.subr.mxu0 0.0
        %1542 = vmatpush1.msra.mxu0 0.0
        %1543 = vmatprep.subr.mxu0 0.0
        %1544 = vmatpush1.msra.mxu0 0.0
        %1545 = vmatprep.subr.mxu0 0.0
        %1546 = vmatpush1.msra.mxu0 0.0
        %1547 = vmatprep.subr.mxu0 0.0
        %1548 = vmatpush1.msra.mxu0 0.0
        %1549 = vmatprep.subr.mxu0 0.0
        %1550 = vmatpush1.msra.mxu0 0.0
        %1551 = vmatprep.subr.mxu0 0.0
        %1552 = vmatpush1.msra.mxu0 0.0
        %1553 = vmatprep.subr.mxu0 0.0
        %1554 = vmatpush1.msra.mxu0 0.0
        %1555 = vmatprep.subr.mxu0 0.0
        %1556 = vmatpush1.msra.mxu0 0.0
        %1557 = vmatprep.subr.mxu0 0.0
        %1558 = vmatpush1.msra.mxu0 0.0
        %1559 = vmatprep.subr.mxu0 0.0
        %1560 = vmatpush1.msra.mxu0 0.0
        %1561 = vmatprep.subr.mxu0 0.0
        %1562 = vmatpush1.msra.mxu0 0.0
        %1563 = vmatprep.subr.mxu0 0.0
        %1564 = vmatpush1.msra.mxu0 0.0
        %1565 = vmatprep.subr.mxu0 0.0
        %1566 = vmatpush1.msra.mxu0 0.0
        %1567 = vmatprep.subr.mxu0 0.0
        %1568 = vmatpush1.msra.mxu0 0.0
        %1569 = vmatprep.subr.mxu0 0.0
        %1570 = vmatpush1.msra.mxu0 0.0
        %1571 = vmatprep.subr.mxu0 0.0
        %1572 = vmatpush1.msra.mxu0 0.0
        %1573 = vmatprep.mubr.f32.mxu0 0.0
        %1574 = vmatmul.mubr.f32.gmra.mrb[0].mxu0 %v1507
        %v1575 = vpop.f32.mrb[0].mxu0
        %v1576 = vadd.f32 %v1504, %v1575
        %v1577 = vpop.f32.mrb[0].mxu0
        %1578 = vdwg.mxu0
        %v1579 = vadd.f32 %v727, %v1576
        %v1580 = vld [vmem:[%s7] sm:$0x1]
        %v1581 = vld [vmem:[%s8] sm:$0x1]
        %v1582 = vsel %vm741, %v1579, 0.0
        %1583 = vadd.xlane.f32.xlu0 %v1582
        %v1584 = vpop.xlane.xlu0 %1583
        %v1585 = vrcp.pop 32.0
        %v1586 = vmul.f32 %v1584, %v1585
        %v1587 = vsub.f32 %v1579, %v1586
        %v1588 = vmul.f32 %v1587, %v1587
        %v1589 = vsel %vm741, %v1588, 0.0
        %1590 = vadd.xlane.f32.xlu0 %v1589
        %v1591 = vpop.xlane.xlu0 %1590
        %v1592 = vmul.f32 %v1591, %v1585
        %v1593 = vadd.f32 %v1592, 1e-05
        %v1594 = vrsqrt.pop %v1593
        %v1595 = vmul.f32 %v1587, %v1594
        %v1597 = vlaneseq
        %v1598 = vshrl.u32 %v1597, 7
        %v1599 = vsub.s32 0, %v1598
        %v1600 = vrot.slane %v1580, %v1599
        %v1602 = vmul.f32 %v1595, %v1600
        %v1604 = vlaneseq
        %v1605 = vshrl.u32 %v1604, 7
        %v1606 = vsub.s32 0, %v1605
        %v1607 = vrot.slane %v1581, %v1606
        %v1609 = vadd.f32 %v1602, %v1607
        %v1610 = vld [vmem:[%s9] sm:$0xff]
        %v1611 = vld [vmem:[%s9 + $0x8] sm:$0xff]
        %v1612 = vld [vmem:[%s9 + $0x10] sm:$0xff]
        %v1613 = vld [vmem:[%s9 + $0x18] sm:$0xff]
        %v1614 = vld [vmem:[%s10] sm:$0x1]
        %v1616 = vlaneseq
        %v1617 = vshrl.u32 %v1616, 7
        %v1618 = vsub.s32 0, %v1617
        %v1619 = vrot.slane %v1614, %v1618
        %v1622 = vsel %vm741, %v1609, 0
        %1624 = vmatprep.subr.mxu0 0.0
        %1625 = vmatpush1.msra.mxu0 %v1610
        %1626 = vmatprep.subr.mxu0 0.0
        %1627 = vmatpush1.msra.mxu0 %v1611
        %1628 = vmatprep.subr.mxu0 0.0
        %1629 = vmatpush1.msra.mxu0 %v1612
        %1630 = vmatprep.subr.mxu0 0.0
        %1631 = vmatpush1.msra.mxu0 %v1613
        %1632 = vmatprep.subr.mxu0 0.0
        %1633 = vmatpush1.msra.mxu0 0.0
        %1634 = vmatprep.subr.mxu0 0.0
        %1635 = vmatpush1.msra.mxu0 0.0
        %1636 = vmatprep.subr.mxu0 0.0
        %1637 = vmatpush1.msra.mxu0 0.0
        %1638 = vmatprep.subr.mxu0 0.0
        %1639 = vmatpush1.msra.mxu0 0.0
        %1640 = vmatprep.subr.mxu0 0.0
        %1641 = vmatpush1.msra.mxu0 0.0
        %1642 = vmatprep.subr.mxu0 0.0
        %1643 = vmatpush1.msra.mxu0 0.0
        %1644 = vmatprep.subr.mxu0 0.0
        %1645 = vmatpush1.msra.mxu0 0.0
        %1646 = vmatprep.subr.mxu0 0.0
        %1647 = vmatpush1.msra.mxu0 0.0
        %1648 = vmatprep.subr.mxu0 0.0
        %1649 = vmatpush1.msra.mxu0 0.0
        %1650 = vmatprep.subr.mxu0 0.0
        %1651 = vmatpush1.msra.mxu0 0.0
        %1652 = vmatprep.subr.mxu0 0.0
        %1653 = vmatpush1.msra.mxu0 0.0
        %1654 = vmatprep.subr.mxu0 0.0
        %1655 = vmatpush1.msra.mxu0 0.0
        %1656 = vmatprep.subr.mxu0 0.0
        %1657 = vmatpush1.msra.mxu0 0.0
        %1658 = vmatprep.subr.mxu0 0.0
        %1659 = vmatpush1.msra.mxu0 0.0
        %1660 = vmatprep.subr.mxu0 0.0
        %1661 = vmatpush1.msra.mxu0 0.0
        %1662 = vmatprep.subr.mxu0 0.0
        %1663 = vmatpush1.msra.mxu0 0.0
        %1664 = vmatprep.subr.mxu0 0.0
        %1665 = vmatpush1.msra.mxu0 0.0
        %1666 = vmatprep.subr.mxu0 0.0
        %1667 = vmatpush1.msra.mxu0 0.0
        %1668 = vmatprep.subr.mxu0 0.0
        %1669 = vmatpush1.msra.mxu0 0.0
        %1670 = vmatprep.subr.mxu0 0.0
        %1671 = vmatpush1.msra.mxu0 0.0
        %1672 = vmatprep.subr.mxu0 0.0
        %1673 = vmatpush1.msra.mxu0 0.0
        %1674 = vmatprep.subr.mxu0 0.0
        %1675 = vmatpush1.msra.mxu0 0.0
        %1676 = vmatprep.subr.mxu0 0.0
        %1677 = vmatpush1.msra.mxu0 0.0
        %1678 = vmatprep.subr.mxu0 0.0
        %1679 = vmatpush1.msra.mxu0 0.0
        %1680 = vmatprep.subr.mxu0 0.0
        %1681 = vmatpush1.msra.mxu0 0.0
        %1682 = vmatprep.subr.mxu0 0.0
        %1683 = vmatpush1.msra.mxu0 0.0
        %1684 = vmatprep.subr.mxu0 0.0
        %1685 = vmatpush1.msra.mxu0 0.0
        %1686 = vmatprep.subr.mxu0 0.0
        %1687 = vmatpush1.msra.mxu0 0.0
        %1688 = vmatprep.mubr.f32.mxu0 0.0
        %1689 = vmatmul.mubr.f32.gmra.mrb[0].mxu0 %v1622
        %v1690 = vpop.f32.mrb[0].mxu0
        %v1691 = vadd.f32 %v1619, %v1690
        %v1692 = vpop.f32.mrb[0].mxu0
        %1693 = vdwg.mxu0
        %v1694 = vmax.f32 %v1691, 0.0
        %v1695 = vld [vmem:[%s11] sm:$0xff]
        %v1696 = vld [vmem:[%s11 + $0x8] sm:$0xff]
        %v1697 = vld [vmem:[%s11 + $0x10] sm:$0xff]
        %v1698 = vld [vmem:[%s11 + $0x18] sm:$0xff]
        %v1699 = vld [vmem:[%s11 + $0x20] sm:$0xff]
        %v1700 = vld [vmem:[%s11 + $0x28] sm:$0xff]
        %v1701 = vld [vmem:[%s11 + $0x30] sm:$0xff]
        %v1702 = vld [vmem:[%s11 + $0x38] sm:$0xff]
        %v1703 = vld [vmem:[%s12] sm:$0x1]
        %v1705 = vlaneseq
        %v1706 = vshrl.u32 %v1705, 7
        %v1707 = vsub.s32 0, %v1706
        %v1708 = vrot.slane %v1703, %v1707
        %vm1710 = vcmask 523264
        %v1712 = vsel %vm1710, %v1694, 0
        %1714 = vmatprep.subr.mxu0 0.0
        %1715 = vmatpush1.msra.mxu0 %v1695
        %1716 = vmatprep.subr.mxu0 0.0
        %1717 = vmatpush1.msra.mxu0 %v1696
        %1718 = vmatprep.subr.mxu0 0.0
        %1719 = vmatpush1.msra.mxu0 %v1697
        %1720 = vmatprep.subr.mxu0 0.0
        %1721 = vmatpush1.msra.mxu0 %v1698
        %1722 = vmatprep.subr.mxu0 0.0
        %1723 = vmatpush1.msra.mxu0 %v1699
        %1724 = vmatprep.subr.mxu0 0.0
        %1725 = vmatpush1.msra.mxu0 %v1700
        %1726 = vmatprep.subr.mxu0 0.0
        %1727 = vmatpush1.msra.mxu0 %v1701
        %1728 = vmatprep.subr.mxu0 0.0
        %1729 = vmatpush1.msra.mxu0 %v1702
        %1730 = vmatprep.subr.mxu0 0.0
        %1731 = vmatpush1.msra.mxu0 0.0
        %1732 = vmatprep.subr.mxu0 0.0
        %1733 = vmatpush1.msra.mxu0 0.0
        %1734 = vmatprep.subr.mxu0 0.0
        %1735 = vmatpush1.msra.mxu0 0.0
        %1736 = vmatprep.subr.mxu0 0.0
        %1737 = vmatpush1.msra.mxu0 0.0
        %1738 = vmatprep.subr.mxu0 0.0
        %1739 = vmatpush1.msra.mxu0 0.0
        %1740 = vmatprep.subr.mxu0 0.0
        %1741 = vmatpush1.msra.mxu0 0.0
        %1742 = vmatprep.subr.mxu0 0.0
        %1743 = vmatpush1.msra.mxu0 0.0
        %1744 = vmatprep.subr.mxu0 0.0
        %1745 = vmatpush1.msra.mxu0 0.0
        %1746 = vmatprep.subr.mxu0 0.0
        %1747 = vmatpush1.msra.mxu0 0.0
        %1748 = vmatprep.subr.mxu0 0.0
        %1749 = vmatpush1.msra.mxu0 0.0
        %1750 = vmatprep.subr.mxu0 0.0
        %1751 = vmatpush1.msra.mxu0 0.0
        %1752 = vmatprep.subr.mxu0 0.0
        %1753 = vmatpush1.msra.mxu0 0.0
        %1754 = vmatprep.subr.mxu0 0.0
        %1755 = vmatpush1.msra.mxu0 0.0
        %1756 = vmatprep.subr.mxu0 0.0
        %1757 = vmatpush1.msra.mxu0 0.0
        %1758 = vmatprep.subr.mxu0 0.0
        %1759 = vmatpush1.msra.mxu0 0.0
        %1760 = vmatprep.subr.mxu0 0.0
        %1761 = vmatpush1.msra.mxu0 0.0
        %1762 = vmatprep.subr.mxu0 0.0
        %1763 = vmatpush1.msra.mxu0 0.0
        %1764 = vmatprep.subr.mxu0 0.0
        %1765 = vmatpush1.msra.mxu0 0.0
        %1766 = vmatprep.subr.mxu0 0.0
        %1767 = vmatpush1.msra.mxu0 0.0
        %1768 = vmatprep.subr.mxu0 0.0
        %1769 = vmatpush1.msra.mxu0 0.0
        %1770 = vmatprep.subr.mxu0 0.0
        %1771 = vmatpush1.msra.mxu0 0.0
        %1772 = vmatprep.subr.mxu0 0.0
        %1773 = vmatpush1.msra.mxu0 0.0
        %1774 = vmatprep.subr.mxu0 0.0
        %1775 = vmatpush1.msra.mxu0 0.0
        %1776 = vmatprep.subr.mxu0 0.0
        %1777 = vmatpush1.msra.mxu0 0.0
        %1778 = vmatprep.mubr.f32.mxu0 0.0
        %1779 = vmatmul.mubr.f32.gmra.mrb[0].mxu0 %v1712
        %v1780 = vpop.f32.mrb[0].mxu0
        %v1781 = vadd.f32 %v1708, %v1780
        %v1782 = vpop.f32.mrb[0].mxu0
        %1783 = vdwg.mxu0
        %v1784 = vadd.f32 %v1609, %v1781
        %v1785 = vld [vmem:[%s13] sm:$0x1]
        %v1786 = vld [vmem:[%s14] sm:$0x1]
        %v1787 = vsel %vm741, %v1784, 0.0
        %1788 = vadd.xlane.f32.xlu0 %v1787
        %v1789 = vpop.xlane.xlu0 %1788
        %v1790 = vmul.f32 %v1789, %v1585
        %v1791 = vsub.f32 %v1784, %v1790
        %v1792 = vmul.f32 %v1791, %v1791
        %v1793 = vsel %vm741, %v1792, 0.0
        %1794 = vadd.xlane.f32.xlu0 %v1793
        %v1795 = vpop.xlane.xlu0 %1794
        %v1796 = vmul.f32 %v1795, %v1585
        %v1797 = vadd.f32 %v1796, 1e-05
        %v1798 = vrsqrt.pop %v1797
        %v1799 = vmul.f32 %v1791, %v1798
        %v1801 = vlaneseq
        %v1802 = vshrl.u32 %v1801, 7
        %v1803 = vsub.s32 0, %v1802
        %v1804 = vrot.slane %v1785, %v1803
        %v1806 = vmul.f32 %v1799, %v1804
        %v1808 = vlaneseq
        %v1809 = vshrl.u32 %v1808, 7
        %v1810 = vsub.s32 0, %v1809
        %v1811 = vrot.slane %v1786, %v1810
        %v1813 = vadd.f32 %v1806, %v1811
        %s1814 = scalar_lea.vmem %s3, 32
        %v1815 = vld [vmem:[%s1814] sm:$0xff]
        %v1816 = vld [vmem:[%s1814 + $0x8] sm:$0xff]
        %v1817 = vld [vmem:[%s1814 + $0x10] sm:$0xff]
        %v1818 = vld [vmem:[%s1814 + $0x18] sm:$0xff]
        %s1819 = scalar_lea.vmem %s4, 1
        %v1820 = vld [vmem:[%s1819] sm:$0x1]
        %v1822 = vlaneseq
        %v1823 = vshrl.u32 %v1822, 7
        %v1824 = vsub.s32 0, %v1823
        %v1825 = vrot.slane %v1820, %v1824
        %v1828 = vsel %vm741, %v1813, 0
        %1830 = vmatprep.subr.mxu0 0.0
        %1831 = vmatpush1.msra.mxu0 %v1815
        %1832 = vmatprep.subr.mxu0 0.0
        %1833 = vmatpush1.msra.mxu0 %v1816
        %1834 = vmatprep.subr.mxu0 0.0
        %1835 = vmatpush1.msra.mxu0 %v1817
        %1836 = vmatprep.subr.mxu0 0.0
        %1837 = vmatpush1.msra.mxu0 %v1818
        %1838 = vmatprep.subr.mxu0 0.0
        %1839 = vmatpush1.msra.mxu0 0.0
        %1840 = vmatprep.subr.mxu0 0.0
        %1841 = vmatpush1.msra.mxu0 0.0
        %1842 = vmatprep.subr.mxu0 0.0
        %1843 = vmatpush1.msra.mxu0 0.0
        %1844 = vmatprep.subr.mxu0 0.0
        %1845 = vmatpush1.msra.mxu0 0.0
        %1846 = vmatprep.subr.mxu0 0.0
        %1847 = vmatpush1.msra.mxu0 0.0
        %1848 = vmatprep.subr.mxu0 0.0
        %1849 = vmatpush1.msra.mxu0 0.0
        %1850 = vmatprep.subr.mxu0 0.0
        %1851 = vmatpush1.msra.mxu0 0.0
        %1852 = vmatprep.subr.mxu0 0.0
        %1853 = vmatpush1.msra.mxu0 0.0
        %1854 = vmatprep.subr.mxu0 0.0
        %1855 = vmatpush1.msra.mxu0 0.0
        %1856 = vmatprep.subr.mxu0 0.0
        %1857 = vmatpush1.msra.mxu0 0.0
        %1858 = vmatprep.subr.mxu0 0.0
        %1859 = vmatpush1.msra.mxu0 0.0
        %1860 = vmatprep.subr.mxu0 0.0
        %1861 = vmatpush1.msra.mxu0 0.0
        %1862 = vmatprep.subr.mxu0 0.0
        %1863 = vmatpush1.msra.mxu0 0.0
        %1864 = vmatprep.subr.mxu0 0.0
        %1865 = vmatpush1.msra.mxu0 0.0
        %1866 = vmatprep.subr.mxu0 0.0
        %1867 = vmatpush1.msra.mxu0 0.0
        %1868 = vmatprep.subr.mxu0 0.0
        %1869 = vmatpush1.msra.mxu0 0.0
        %1870 = vmatprep.subr.mxu0 0.0
        %1871 = vmatpush1.msra.mxu0 0.0
        %1872 = vmatprep.subr.mxu0 0.0
        %1873 = vmatpush1.msra.mxu0 0.0
        %1874 = vmatprep.subr.mxu0 0.0
        %1875 = vmatpush1.msra.mxu0 0.0
        %1876 = vmatprep.subr.mxu0 0.0
        %1877 = vmatpush1.msra.mxu0 0.0
        %1878 = vmatprep.subr.mxu0 0.0
        %1879 = vmatpush1.msra.mxu0 0.0
        %1880 = vmatprep.subr.mxu0 0.0
        %1881 = vmatpush1.msra.mxu0 0.0
        %1882 = vmatprep.subr.mxu0 0.0
        %1883 = vmatpush1.msra.mxu0 0.0
        %1884 = vmatprep.subr.mxu0 0.0
        %1885 = vmatpush1.msra.mxu0 0.0
        %1886 = vmatprep.subr.mxu0 0.0
        %1887 = vmatpush1.msra.mxu0 0.0
        %1888 = vmatprep.subr.mxu0 0.0
        %1889 = vmatpush1.msra.mxu0 0.0
        %1890 = vmatprep.subr.mxu0 0.0
        %1891 = vmatpush1.msra.mxu0 0.0
        %1892 = vmatprep.subr.mxu0 0.0
        %1893 = vmatpush1.msra.mxu0 0.0
        %1894 = vmatprep.mubr.f32.mxu0 0.0
        %1895 = vmatmul.mubr.f32.gmra.mrb[0].mxu0 %v1828
        %v1896 = vpop.f32.mrb[0].mxu0
        %v1897 = vadd.f32 %v1825, %v1896
        %v1898 = vpop.f32.mrb[0].mxu0
        %1899 = vdwg.mxu0
        %1901 = vrot.lane.b32.xlu0 %v1897, 96
        %v1902 = vpop.permute.xlu0 %1901
        %v1903 = vsel %vm818, %v1897, 0
        %v1905 = vsel %vm818, %v1902, 0
        %1907 = vmatprep.subr.mxu0 0.0
        %1908 = vmatpush1.xpose.msra.mxu0 %v1905
        %1909 = vmatprep.subr.mxu0 0.0
        %1910 = vmatpush1.xpose.msra.mxu0 0.0
        %1911 = vmatprep.subr.mxu0 0.0
        %1912 = vmatpush1.xpose.msra.mxu0 0.0
        %1913 = vmatprep.subr.mxu0 0.0
        %1914 = vmatpush1.xpose.msra.mxu0 0.0
        %1915 = vmatprep.subr.mxu0 0.0
        %1916 = vmatpush1.xpose.msra.mxu0 0.0
        %1917 = vmatprep.subr.mxu0 0.0
        %1918 = vmatpush1.xpose.msra.mxu0 0.0
        %1919 = vmatprep.subr.mxu0 0.0
        %1920 = vmatpush1.xpose.msra.mxu0 0.0
        %1921 = vmatprep.subr.mxu0 0.0
        %1922 = vmatpush1.xpose.msra.mxu0 0.0
        %1923 = vmatprep.subr.mxu0 0.0
        %1924 = vmatpush1.xpose.msra.mxu0 0.0
        %1925 = vmatprep.subr.mxu0 0.0
        %1926 = vmatpush1.xpose.msra.mxu0 0.0
        %1927 = vmatprep.subr.mxu0 0.0
        %1928 = vmatpush1.xpose.msra.mxu0 0.0
        %1929 = vmatprep.subr.mxu0 0.0
        %1930 = vmatpush1.xpose.msra.mxu0 0.0
        %1931 = vmatprep.subr.mxu0 0.0
        %1932 = vmatpush1.xpose.msra.mxu0 0.0
        %1933 = vmatprep.subr.mxu0 0.0
        %1934 = vmatpush1.xpose.msra.mxu0 0.0
        %1935 = vmatprep.subr.mxu0 0.0
        %1936 = vmatpush1.xpose.msra.mxu0 0.0
        %1937 = vmatprep.subr.mxu0 0.0
        %1938 = vmatpush1.xpose.msra.mxu0 0.0
        %1939 = vmatprep.subr.mxu0 0.0
        %1940 = vmatpush1.xpose.msra.mxu0 0.0
        %1941 = vmatprep.subr.mxu0 0.0
        %1942 = vmatpush1.xpose.msra.mxu0 0.0
        %1943 = vmatprep.subr.mxu0 0.0
        %1944 = vmatpush1.xpose.msra.mxu0 0.0
        %1945 = vmatprep.subr.mxu0 0.0
        %1946 = vmatpush1.xpose.msra.mxu0 0.0
        %1947 = vmatprep.subr.mxu0 0.0
        %1948 = vmatpush1.xpose.msra.mxu0 0.0
        %1949 = vmatprep.subr.mxu0 0.0
        %1950 = vmatpush1.xpose.msra.mxu0 0.0
        %1951 = vmatprep.subr.mxu0 0.0
        %1952 = vmatpush1.xpose.msra.mxu0 0.0
        %1953 = vmatprep.subr.mxu0 0.0
        %1954 = vmatpush1.xpose.msra.mxu0 0.0
        %1955 = vmatprep.subr.mxu0 0.0
        %1956 = vmatpush1.xpose.msra.mxu0 0.0
        %1957 = vmatprep.subr.mxu0 0.0
        %1958 = vmatpush1.xpose.msra.mxu0 0.0
        %1959 = vmatprep.subr.mxu0 0.0
        %1960 = vmatpush1.xpose.msra.mxu0 0.0
        %1961 = vmatprep.subr.mxu0 0.0
        %1962 = vmatpush1.xpose.msra.mxu0 0.0
        %1963 = vmatprep.subr.mxu0 0.0
        %1964 = vmatpush1.xpose.msra.mxu0 0.0
        %1965 = vmatprep.subr.mxu0 0.0
        %1966 = vmatpush1.xpose.msra.mxu0 0.0
        %1967 = vmatprep.subr.mxu0 0.0
        %1968 = vmatpush1.xpose.msra.mxu0 0.0
        %1969 = vmatprep.subr.mxu0 0.0
        %1970 = vmatpush1.xpose.msra.mxu0 0.0
        %1971 = vmatprep.mubr.f32.mxu0 0.0
        %1972 = vmatmul.mubr.f32.gmra.mrb[0].mxu0 %v1903
        %v1973 = vpop.f32.mrb[0].mxu0
        %v1974 = vadd.f32 0.0, %v1973
        %v1975 = vpop.f32.mrb[0].mxu0
        %1976 = vdwg.mxu0
        %v1977 = vmul.f32 %v1974, 0.35355338
        %v1978 = vsel %vm818, %v1977, -inf
        %1979 = vmax.xlane.f32.xlu0 %v1978
        %v1980 = vpop.xlane.xlu0 %1979
        %v1981 = vsub.f32 %v1977, %v1980
        %v1982 = vmul.f32 %v1981, 1.442695
        %v1983 = vpow.pop %v1982
        %v1984 = vsel %vm818, %v1983, 0.0
        %1985 = vadd.xlane.f32.xlu0 %v1984
        %v1986 = vpop.xlane.xlu0 %1985
        %v1987 = vrcp.pop %v1986
        %v1988 = vmul.f32 %v1983, %v1987
        %1989 = vrot.lane.b32.xlu0 %v1897, 64
        %v1990 = vpop.permute.xlu0 %1989
        %v1993 = vsel %vm818, %v1988, 0
        %1995 = vmatprep.subr.mxu0 0.0
        %1996 = vmatpush1.msra.mxu0 %v1990
        %1997 = vmatprep.subr.mxu0 0.0
        %1998 = vmatpush1.msra.mxu0 0.0
        %1999 = vmatprep.subr.mxu0 0.0
        %2000 = vmatpush1.msra.mxu0 0.0
        %2001 = vmatprep.subr.mxu0 0.0
        %2002 = vmatpush1.msra.mxu0 0.0
        %2003 = vmatprep.subr.mxu0 0.0
        %2004 = vmatpush1.msra.mxu0 0.0
        %2005 = vmatprep.subr.mxu0 0.0
        %2006 = vmatpush1.msra.mxu0 0.0
        %2007 = vmatprep.subr.mxu0 0.0
        %2008 = vmatpush1.msra.mxu0 0.0
        %2009 = vmatprep.subr.mxu0 0.0
        %2010 = vmatpush1.msra.mxu0 0.0
        %2011 = vmatprep.subr.mxu0 0.0
        %2012 = vmatpush1.msra.mxu0 0.0
        %2013 = vmatprep.subr.mxu0 0.0
        %2014 = vmatpush1.msra.mxu0 0.0
        %2015 = vmatprep.subr.mxu0 0.0
        %2016 = vmatpush1.msra.mxu0 0.0
        %2017 = vmatprep.subr.mxu0 0.0
        %2018 = vmatpush1.msra.mxu0 0.0
        %2019 = vmatprep.subr.mxu0 0.0
        %2020 = vmatpush1.msra.mxu0 0.0
        %2021 = vmatprep.subr.mxu0 0.0
        %2022 = vmatpush1.msra.mxu0 0.0
        %2023 = vmatprep.subr.mxu0 0.0
        %2024 = vmatpush1.msra.mxu0 0.0
        %2025 = vmatprep.subr.mxu0 0.0
        %2026 = vmatpush1.msra.mxu0 0.0
        %2027 = vmatprep.subr.mxu0 0.0
        %2028 = vmatpush1.msra.mxu0 0.0
        %2029 = vmatprep.subr.mxu0 0.0
        %2030 = vmatpush1.msra.mxu0 0.0
        %2031 = vmatprep.subr.mxu0 0.0
        %2032 = vmatpush1.msra.mxu0 0.0
        %2033 = vmatprep.subr.mxu0 0.0
        %2034 = vmatpush1.msra.mxu0 0.0
        %2035 = vmatprep.subr.mxu0 0.0
        %2036 = vmatpush1.msra.mxu0 0.0
        %2037 = vmatprep.subr.mxu0 0.0
        %2038 = vmatpush1.msra.mxu0 0.0
        %2039 = vmatprep.subr.mxu0 0.0
        %2040 = vmatpush1.msra.mxu0 0.0
        %2041 = vmatprep.subr.mxu0 0.0
        %2042 = vmatpush1.msra.mxu0 0.0
        %2043 = vmatprep.subr.mxu0 0.0
        %2044 = vmatpush1.msra.mxu0 0.0
        %2045 = vmatprep.subr.mxu0 0.0
        %2046 = vmatpush1.msra.mxu0 0.0
        %2047 = vmatprep.subr.mxu0 0.0
        %2048 = vmatpush1.msra.mxu0 0.0
        %2049 = vmatprep.subr.mxu0 0.0
        %2050 = vmatpush1.msra.mxu0 0.0
        %2051 = vmatprep.subr.mxu0 0.0
        %2052 = vmatpush1.msra.mxu0 0.0
        %2053 = vmatprep.subr.mxu0 0.0
        %2054 = vmatpush1.msra.mxu0 0.0
        %2055 = vmatprep.subr.mxu0 0.0
        %2056 = vmatpush1.msra.mxu0 0.0
        %2057 = vmatprep.subr.mxu0 0.0
        %2058 = vmatpush1.msra.mxu0 0.0
        %2059 = vmatprep.mubr.f32.mxu0 0.0
        %2060 = vmatmul.mubr.f32.gmra.mrb[0].mxu0 %v1993
        %v2061 = vpop.f32.mrb[0].mxu0
        %v2062 = vadd.f32 0.0, %v2061
        %v2063 = vpop.f32.mrb[0].mxu0
        %2064 = vdwg.mxu0
        %2065 = vrot.lane.b32.xlu0 %v1897, 120
        %v2066 = vpop.permute.xlu0 %2065
        %2067 = vrot.lane.b32.xlu0 %v1897, 88
        %v2068 = vpop.permute.xlu0 %2067
        %v2069 = vsel %vm818, %v2066, 0
        %v2071 = vsel %vm818, %v2068, 0
        %2073 = vmatprep.subr.mxu0 0.0
        %2074 = vmatpush1.xpose.msra.mxu0 %v2071
        %2075 = vmatprep.subr.mxu0 0.0
        %2076 = vmatpush1.xpose.msra.mxu0 0.0
        %2077 = vmatprep.subr.mxu0 0.0
        %2078 = vmatpush1.xpose.msra.mxu0 0.0
        %2079 = vmatprep.subr.mxu0 0.0
        %2080 = vmatpush1.xpose.msra.mxu0 0.0
        %2081 = vmatprep.subr.mxu0 0.0
        %2082 = vmatpush1.xpose.msra.mxu0 0.0
        %2083 = vmatprep.subr.mxu0 0.0
        %2084 = vmatpush1.xpose.msra.mxu0 0.0
        %2085 = vmatprep.subr.mxu0 0.0
        %2086 = vmatpush1.xpose.msra.mxu0 0.0
        %2087 = vmatprep.subr.mxu0 0.0
        %2088 = vmatpush1.xpose.msra.mxu0 0.0
        %2089 = vmatprep.subr.mxu0 0.0
        %2090 = vmatpush1.xpose.msra.mxu0 0.0
        %2091 = vmatprep.subr.mxu0 0.0
        %2092 = vmatpush1.xpose.msra.mxu0 0.0
        %2093 = vmatprep.subr.mxu0 0.0
        %2094 = vmatpush1.xpose.msra.mxu0 0.0
        %2095 = vmatprep.subr.mxu0 0.0
        %2096 = vmatpush1.xpose.msra.mxu0 0.0
        %2097 = vmatprep.subr.mxu0 0.0
        %2098 = vmatpush1.xpose.msra.mxu0 0.0
        %2099 = vmatprep.subr.mxu0 0.0
        %2100 = vmatpush1.xpose.msra.mxu0 0.0
        %2101 = vmatprep.subr.mxu0 0.0
        %2102 = vmatpush1.xpose.msra.mxu0 0.0
        %2103 = vmatprep.subr.mxu0 0.0
        %2104 = vmatpush1.xpose.msra.mxu0 0.0
        %2105 = vmatprep.subr.mxu0 0.0
        %2106 = vmatpush1.xpose.msra.mxu0 0.0
        %2107 = vmatprep.subr.mxu0 0.0
        %2108 = vmatpush1.xpose.msra.mxu0 0.0
        %2109 = vmatprep.subr.mxu0 0.0
        %2110 = vmatpush1.xpose.msra.mxu0 0.0
        %2111 = vmatprep.subr.mxu0 0.0
        %2112 = vmatpush1.xpose.msra.mxu0 0.0
        %2113 = vmatprep.subr.mxu0 0.0
        %2114 = vmatpush1.xpose.msra.mxu0 0.0
        %2115 = vmatprep.subr.mxu0 0.0
        %2116 = vmatpush1.xpose.msra.mxu0 0.0
        %2117 = vmatprep.subr.mxu0 0.0
        %2118 = vmatpush1.xpose.msra.mxu0 0.0
        %2119 = vmatprep.subr.mxu0 0.0
        %2120 = vmatpush1.xpose.msra.mxu0 0.0
        %2121 = vmatprep.subr.mxu0 0.0
        %2122 = vmatpush1.xpose.msra.mxu0 0.0
        %2123 = vmatprep.subr.mxu0 0.0
        %2124 = vmatpush1.xpose.msra.mxu0 0.0
        %2125 = vmatprep.subr.mxu0 0.0
        %2126 = vmatpush1.xpose.msra.mxu0 0.0
        %2127 = vmatprep.subr.mxu0 0.0
        %2128 = vmatpush1.xpose.msra.mxu0 0.0
        %2129 = vmatprep.subr.mxu0 0.0
        %2130 = vmatpush1.xpose.msra.mxu0 0.0
        %2131 = vmatprep.subr.mxu0 0.0
        %2132 = vmatpush1.xpose.msra.mxu0 0.0
        %2133 = vmatprep.subr.mxu0 0.0
        %2134 = vmatpush1.xpose.msra.mxu0 0.0
        %2135 = vmatprep.subr.mxu0 0.0
        %2136 = vmatpush1.xpose.msra.mxu0 0.0
        %2137 = vmatprep.mubr.f32.mxu0 0.0
        %2138 = vmatmul.mubr.f32.gmra.mrb[0].mxu0 %v2069
        %v2139 = vpop.f32.mrb[0].mxu0
        %v2140 = vadd.f32 0.0, %v2139
        %v2141 = vpop.f32.mrb[0].mxu0
        %2142 = vdwg.mxu0
        %v2143 = vmul.f32 %v2140, 0.35355338
        %v2144 = vsel %vm818, %v2143, -inf
        %2145 = vmax.xlane.f32.xlu0 %v2144
        %v2146 = vpop.xlane.xlu0 %2145
        %v2147 = vsub.f32 %v2143, %v2146
        %v2148 = vmul.f32 %v2147, 1.442695
        %v2149 = vpow.pop %v2148
        %v2150 = vsel %vm818, %v2149, 0.0
        %2151 = vadd.xlane.f32.xlu0 %v2150
        %v2152 = vpop.xlane.xlu0 %2151
        %v2153 = vrcp.pop %v2152
        %v2154 = vmul.f32 %v2149, %v2153
        %2155 = vrot.lane.b32.xlu0 %v1897, 56
        %v2156 = vpop.permute.xlu0 %2155
        %v2159 = vsel %vm818, %v2154, 0
        %2161 = vmatprep.subr.mxu0 0.0
        %2162 = vmatpush1.msra.mxu0 %v2156
        %2163 = vmatprep.subr.mxu0 0.0
        %2164 = vmatpush1.msra.mxu0 0.0
        %2165 = vmatprep.subr.mxu0 0.0
        %2166 = vmatpush1.msra.mxu0 0.0
        %2167 = vmatprep.subr.mxu0 0.0
        %2168 = vmatpush1.msra.mxu0 0.0
        %2169 = vmatprep.subr.mxu0 0.0
        %2170 = vmatpush1.msra.mxu0 0.0
        %2171 = vmatprep.subr.mxu0 0.0
        %2172 = vmatpush1.msra.mxu0 0.0
        %2173 = vmatprep.subr.mxu0 0.0
        %2174 = vmatpush1.msra.mxu0 0.0
        %2175 = vmatprep.subr.mxu0 0.0
        %2176 = vmatpush1.msra.mxu0 0.0
        %2177 = vmatprep.subr.mxu0 0.0
        %2178 = vmatpush1.msra.mxu0 0.0
        %2179 = vmatprep.subr.mxu0 0.0
        %2180 = vmatpush1.msra.mxu0 0.0
        %2181 = vmatprep.subr.mxu0 0.0
        %2182 = vmatpush1.msra.mxu0 0.0
        %2183 = vmatprep.subr.mxu0 0.0
        %2184 = vmatpush1.msra.mxu0 0.0
        %2185 = vmatprep.subr.mxu0 0.0
        %2186 = vmatpush1.msra.mxu0 0.0
        %2187 = vmatprep.subr.mxu0 0.0
        %2188 = vmatpush1.msra.mxu0 0.0
        %2189 = vmatprep.subr.mxu0 0.0
        %2190 = vmatpush1.msra.mxu0 0.0
        %2191 = vmatprep.subr.mxu0 0.0
        %2192 = vmatpush1.msra.mxu0 0.0
        %2193 = vmatprep.subr.mxu0 0.0
        %2194 = vmatpush1.msra.mxu0 0.0
        %2195 = vmatprep.subr.mxu0 0.0
        %2196 = vmatpush1.msra.mxu0 0.0
        %2197 = vmatprep.subr.mxu0 0.0
        %2198 = vmatpush1.msra.mxu0 0.0
        %2199 = vmatprep.subr.mxu0 0.0
        %2200 = vmatpush1.msra.mxu0 0.0
        %2201 = vmatprep.subr.mxu0 0.0
        %2202 = vmatpush1.msra.mxu0 0.0
        %2203 = vmatprep.subr.mxu0 0.0
        %2204 = vmatpush1.msra.mxu0 0.0
        %2205 = vmatprep.subr.mxu0 0.0
        %2206 = vmatpush1.msra.mxu0 0.0
        %2207 = vmatprep.subr.mxu0 0.0
        %2208 = vmatpush1.msra.mxu0 0.0
        %2209 = vmatprep.subr.mxu0 0.0
        %2210 = vmatpush1.msra.mxu0 0.0
        %2211 = vmatprep.subr.mxu0 0.0
        %2212 = vmatpush1.msra.mxu0 0.0
        %2213 = vmatprep.subr.mxu0 0.0
        %2214 = vmatpush1.msra.mxu0 0.0
        %2215 = vmatprep.subr.mxu0 0.0
        %2216 = vmatpush1.msra.mxu0 0.0
        %2217 = vmatprep.subr.mxu0 0.0
        %2218 = vmatpush1.msra.mxu0 0.0
        %2219 = vmatprep.subr.mxu0 0.0
        %2220 = vmatpush1.msra.mxu0 0.0
        %2221 = vmatprep.subr.mxu0 0.0
        %2222 = vmatpush1.msra.mxu0 0.0
        %2223 = vmatprep.subr.mxu0 0.0
        %2224 = vmatpush1.msra.mxu0 0.0
        %2225 = vmatprep.mubr.f32.mxu0 0.0
        %2226 = vmatmul.mubr.f32.gmra.mrb[0].mxu0 %v2159
        %v2227 = vpop.f32.mrb[0].mxu0
        %v2228 = vadd.f32 0.0, %v2227
        %v2229 = vpop.f32.mrb[0].mxu0
        %2230 = vdwg.mxu0
        %2231 = vrot.lane.b32.xlu0 %v1897, 112
        %v2232 = vpop.permute.xlu0 %2231
        %2233 = vrot.lane.b32.xlu0 %v1897, 80
        %v2234 = vpop.permute.xlu0 %2233
        %v2235 = vsel %vm818, %v2232, 0
        %v2237 = vsel %vm818, %v2234, 0
        %2239 = vmatprep.subr.mxu0 0.0
        %2240 = vmatpush1.xpose.msra.mxu0 %v2237
        %2241 = vmatprep.subr.mxu0 0.0
        %2242 = vmatpush1.xpose.msra.mxu0 0.0
        %2243 = vmatprep.subr.mxu0 0.0
        %2244 = vmatpush1.xpose.msra.mxu0 0.0
        %2245 = vmatprep.subr.mxu0 0.0
        %2246 = vmatpush1.xpose.msra.mxu0 0.0
        %2247 = vmatprep.subr.mxu0 0.0
        %2248 = vmatpush1.xpose.msra.mxu0 0.0
        %2249 = vmatprep.subr.mxu0 0.0
        %2250 = vmatpush1.xpose.msra.mxu0 0.0
        %2251 = vmatprep.subr.mxu0 0.0
        %2252 = vmatpush1.xpose.msra.mxu0 0.0
        %2253 = vmatprep.subr.mxu0 0.0
        %2254 = vmatpush1.xpose.msra.mxu0 0.0
        %2255 = vmatprep.subr.mxu0 0.0
        %2256 = vmatpush1.xpose.msra.mxu0 0.0
        %2257 = vmatprep.subr.mxu0 0.0
        %2258 = vmatpush1.xpose.msra.mxu0 0.0
        %2259 = vmatprep.subr.mxu0 0.0
        %2260 = vmatpush1.xpose.msra.mxu0 0.0
        %2261 = vmatprep.subr.mxu0 0.0
        %2262 = vmatpush1.xpose.msra.mxu0 0.0
        %2263 = vmatprep.subr.mxu0 0.0
        %2264 = vmatpush1.xpose.msra.mxu0 0.0
        %2265 = vmatprep.subr.mxu0 0.0
        %2266 = vmatpush1.xpose.msra.mxu0 0.0
        %2267 = vmatprep.subr.mxu0 0.0
        %2268 = vmatpush1.xpose.msra.mxu0 0.0
        %2269 = vmatprep.subr.mxu0 0.0
        %2270 = vmatpush1.xpose.msra.mxu0 0.0
        %2271 = vmatprep.subr.mxu0 0.0
        %2272 = vmatpush1.xpose.msra.mxu0 0.0
        %2273 = vmatprep.subr.mxu0 0.0
        %2274 = vmatpush1.xpose.msra.mxu0 0.0
        %2275 = vmatprep.subr.mxu0 0.0
        %2276 = vmatpush1.xpose.msra.mxu0 0.0
        %2277 = vmatprep.subr.mxu0 0.0
        %2278 = vmatpush1.xpose.msra.mxu0 0.0
        %2279 = vmatprep.subr.mxu0 0.0
        %2280 = vmatpush1.xpose.msra.mxu0 0.0
        %2281 = vmatprep.subr.mxu0 0.0
        %2282 = vmatpush1.xpose.msra.mxu0 0.0
        %2283 = vmatprep.subr.mxu0 0.0
        %2284 = vmatpush1.xpose.msra.mxu0 0.0
        %2285 = vmatprep.subr.mxu0 0.0
        %2286 = vmatpush1.xpose.msra.mxu0 0.0
        %2287 = vmatprep.subr.mxu0 0.0
        %2288 = vmatpush1.xpose.msra.mxu0 0.0
        %2289 = vmatprep.subr.mxu0 0.0
        %2290 = vmatpush1.xpose.msra.mxu0 0.0
        %2291 = vmatprep.subr.mxu0 0.0
        %2292 = vmatpush1.xpose.msra.mxu0 0.0
        %2293 = vmatprep.subr.mxu0 0.0
        %2294 = vmatpush1.xpose.msra.mxu0 0.0
        %2295 = vmatprep.subr.mxu0 0.0
        %2296 = vmatpush1.xpose.msra.mxu0 0.0
        %2297 = vmatprep.subr.mxu0 0.0
        %2298 = vmatpush1.xpose.msra.mxu0 0.0
        %2299 = vmatprep.subr.mxu0 0.0
        %2300 = vmatpush1.xpose.msra.mxu0 0.0
        %2301 = vmatprep.subr.mxu0 0.0
        %2302 = vmatpush1.xpose.msra.mxu0 0.0
        %2303 = vmatprep.mubr.f32.mxu0 0.0
        %2304 = vmatmul.mubr.f32.gmra.mrb[0].mxu0 %v2235
        %v2305 = vpop.f32.mrb[0].mxu0
        %v2306 = vadd.f32 0.0, %v2305
        %v2307 = vpop.f32.mrb[0].mxu0
        %2308 = vdwg.mxu0
        %v2309 = vmul.f32 %v2306, 0.35355338
        %v2310 = vsel %vm818, %v2309, -inf
        %2311 = vmax.xlane.f32.xlu0 %v2310
        %v2312 = vpop.xlane.xlu0 %2311
        %v2313 = vsub.f32 %v2309, %v2312
        %v2314 = vmul.f32 %v2313, 1.442695
        %v2315 = vpow.pop %v2314
        %v2316 = vsel %vm818, %v2315, 0.0
        %2317 = vadd.xlane.f32.xlu0 %v2316
        %v2318 = vpop.xlane.xlu0 %2317
        %v2319 = vrcp.pop %v2318
        %v2320 = vmul.f32 %v2315, %v2319
        %2321 = vrot.lane.b32.xlu0 %v1897, 48
        %v2322 = vpop.permute.xlu0 %2321
        %v2325 = vsel %vm818, %v2320, 0
        %2327 = vmatprep.subr.mxu0 0.0
        %2328 = vmatpush1.msra.mxu0 %v2322
        %2329 = vmatprep.subr.mxu0 0.0
        %2330 = vmatpush1.msra.mxu0 0.0
        %2331 = vmatprep.subr.mxu0 0.0
        %2332 = vmatpush1.msra.mxu0 0.0
        %2333 = vmatprep.subr.mxu0 0.0
        %2334 = vmatpush1.msra.mxu0 0.0
        %2335 = vmatprep.subr.mxu0 0.0
        %2336 = vmatpush1.msra.mxu0 0.0
        %2337 = vmatprep.subr.mxu0 0.0
        %2338 = vmatpush1.msra.mxu0 0.0
        %2339 = vmatprep.subr.mxu0 0.0
        %2340 = vmatpush1.msra.mxu0 0.0
        %2341 = vmatprep.subr.mxu0 0.0
        %2342 = vmatpush1.msra.mxu0 0.0
        %2343 = vmatprep.subr.mxu0 0.0
        %2344 = vmatpush1.msra.mxu0 0.0
        %2345 = vmatprep.subr.mxu0 0.0
        %2346 = vmatpush1.msra.mxu0 0.0
        %2347 = vmatprep.subr.mxu0 0.0
        %2348 = vmatpush1.msra.mxu0 0.0
        %2349 = vmatprep.subr.mxu0 0.0
        %2350 = vmatpush1.msra.mxu0 0.0
        %2351 = vmatprep.subr.mxu0 0.0
        %2352 = vmatpush1.msra.mxu0 0.0
        %2353 = vmatprep.subr.mxu0 0.0
        %2354 = vmatpush1.msra.mxu0 0.0
        %2355 = vmatprep.subr.mxu0 0.0
        %2356 = vmatpush1.msra.mxu0 0.0
        %2357 = vmatprep.subr.mxu0 0.0
        %2358 = vmatpush1.msra.mxu0 0.0
        %2359 = vmatprep.subr.mxu0 0.0
        %2360 = vmatpush1.msra.mxu0 0.0
        %2361 = vmatprep.subr.mxu0 0.0
        %2362 = vmatpush1.msra.mxu0 0.0
        %2363 = vmatprep.subr.mxu0 0.0
        %2364 = vmatpush1.msra.mxu0 0.0
        %2365 = vmatprep.subr.mxu0 0.0
        %2366 = vmatpush1.msra.mxu0 0.0
        %2367 = vmatprep.subr.mxu0 0.0
        %2368 = vmatpush1.msra.mxu0 0.0
        %2369 = vmatprep.subr.mxu0 0.0
        %2370 = vmatpush1.msra.mxu0 0.0
        %2371 = vmatprep.subr.mxu0 0.0
        %2372 = vmatpush1.msra.mxu0 0.0
        %2373 = vmatprep.subr.mxu0 0.0
        %2374 = vmatpush1.msra.mxu0 0.0
        %2375 = vmatprep.subr.mxu0 0.0
        %2376 = vmatpush1.msra.mxu0 0.0
        %2377 = vmatprep.subr.mxu0 0.0
        %2378 = vmatpush1.msra.mxu0 0.0
        %2379 = vmatprep.subr.mxu0 0.0
        %2380 = vmatpush1.msra.mxu0 0.0
        %2381 = vmatprep.subr.mxu0 0.0
        %2382 = vmatpush1.msra.mxu0 0.0
        %2383 = vmatprep.subr.mxu0 0.0
        %2384 = vmatpush1.msra.mxu0 0.0
        %2385 = vmatprep.subr.mxu0 0.0
        %2386 = vmatpush1.msra.mxu0 0.0
        %2387 = vmatprep.subr.mxu0 0.0
        %2388 = vmatpush1.msra.mxu0 0.0
        %2389 = vmatprep.subr.mxu0 0.0
        %2390 = vmatpush1.msra.mxu0 0.0
        %2391 = vmatprep.mubr.f32.mxu0 0.0
        %2392 = vmatmul.mubr.f32.gmra.mrb[0].mxu0 %v2325
        %v2393 = vpop.f32.mrb[0].mxu0
        %v2394 = vadd.f32 0.0, %v2393
        %v2395 = vpop.f32.mrb[0].mxu0
        %2396 = vdwg.mxu0
        %2397 = vrot.lane.b32.xlu0 %v1897, 104
        %v2398 = vpop.permute.xlu0 %2397
        %2399 = vrot.lane.b32.xlu0 %v1897, 72
        %v2400 = vpop.permute.xlu0 %2399
        %v2401 = vsel %vm818, %v2398, 0
        %v2403 = vsel %vm818, %v2400, 0
        %2405 = vmatprep.subr.mxu0 0.0
        %2406 = vmatpush1.xpose.msra.mxu0 %v2403
        %2407 = vmatprep.subr.mxu0 0.0
        %2408 = vmatpush1.xpose.msra.mxu0 0.0
        %2409 = vmatprep.subr.mxu0 0.0
        %2410 = vmatpush1.xpose.msra.mxu0 0.0
        %2411 = vmatprep.subr.mxu0 0.0
        %2412 = vmatpush1.xpose.msra.mxu0 0.0
        %2413 = vmatprep.subr.mxu0 0.0
        %2414 = vmatpush1.xpose.msra.mxu0 0.0
        %2415 = vmatprep.subr.mxu0 0.0
        %2416 = vmatpush1.xpose.msra.mxu0 0.0
        %2417 = vmatprep.subr.mxu0 0.0
        %2418 = vmatpush1.xpose.msra.mxu0 0.0
        %2419 = vmatprep.subr.mxu0 0.0
        %2420 = vmatpush1.xpose.msra.mxu0 0.0
        %2421 = vmatprep.subr.mxu0 0.0
        %2422 = vmatpush1.xpose.msra.mxu0 0.0
        %2423 = vmatprep.subr.mxu0 0.0
        %2424 = vmatpush1.xpose.msra.mxu0 0.0
        %2425 = vmatprep.subr.mxu0 0.0
        %2426 = vmatpush1.xpose.msra.mxu0 0.0
        %2427 = vmatprep.subr.mxu0 0.0
        %2428 = vmatpush1.xpose.msra.mxu0 0.0
        %2429 = vmatprep.subr.mxu0 0.0
        %2430 = vmatpush1.xpose.msra.mxu0 0.0
        %2431 = vmatprep.subr.mxu0 0.0
        %2432 = vmatpush1.xpose.msra.mxu0 0.0
        %2433 = vmatprep.subr.mxu0 0.0
        %2434 = vmatpush1.xpose.msra.mxu0 0.0
        %2435 = vmatprep.subr.mxu0 0.0
        %2436 = vmatpush1.xpose.msra.mxu0 0.0
        %2437 = vmatprep.subr.mxu0 0.0
        %2438 = vmatpush1.xpose.msra.mxu0 0.0
        %2439 = vmatprep.subr.mxu0 0.0
        %2440 = vmatpush1.xpose.msra.mxu0 0.0
        %2441 = vmatprep.subr.mxu0 0.0
        %2442 = vmatpush1.xpose.msra.mxu0 0.0
        %2443 = vmatprep.subr.mxu0 0.0
        %2444 = vmatpush1.xpose.msra.mxu0 0.0
        %2445 = vmatprep.subr.mxu0 0.0
        %2446 = vmatpush1.xpose.msra.mxu0 0.0
        %2447 = vmatprep.subr.mxu0 0.0
        %2448 = vmatpush1.xpose.msra.mxu0 0.0
        %2449 = vmatprep.subr.mxu0 0.0
        %2450 = vmatpush1.xpose.msra.mxu0 0.0
        %2451 = vmatprep.subr.mxu0 0.0
        %2452 = vmatpush1.xpose.msra.mxu0 0.0
        %2453 = vmatprep.subr.mxu0 0.0
        %2454 = vmatpush1.xpose.msra.mxu0 0.0
        %2455 = vmatprep.subr.mxu0 0.0
        %2456 = vmatpush1.xpose.msra.mxu0 0.0
        %2457 = vmatprep.subr.mxu0 0.0
        %2458 = vmatpush1.xpose.msra.mxu0 0.0
        %2459 = vmatprep.subr.mxu0 0.0
        %2460 = vmatpush1.xpose.msra.mxu0 0.0
        %2461 = vmatprep.subr.mxu0 0.0
        %2462 = vmatpush1.xpose.msra.mxu0 0.0
        %2463 = vmatprep.subr.mxu0 0.0
        %2464 = vmatpush1.xpose.msra.mxu0 0.0
        %2465 = vmatprep.subr.mxu0 0.0
        %2466 = vmatpush1.xpose.msra.mxu0 0.0
        %2467 = vmatprep.subr.mxu0 0.0
        %2468 = vmatpush1.xpose.msra.mxu0 0.0
        %2469 = vmatprep.mubr.f32.mxu0 0.0
        %2470 = vmatmul.mubr.f32.gmra.mrb[0].mxu0 %v2401
        %v2471 = vpop.f32.mrb[0].mxu0
        %v2472 = vadd.f32 0.0, %v2471
        %v2473 = vpop.f32.mrb[0].mxu0
        %2474 = vdwg.mxu0
        %v2475 = vmul.f32 %v2472, 0.35355338
        %v2476 = vsel %vm818, %v2475, -inf
        %2477 = vmax.xlane.f32.xlu0 %v2476
        %v2478 = vpop.xlane.xlu0 %2477
        %v2479 = vsub.f32 %v2475, %v2478
        %v2480 = vmul.f32 %v2479, 1.442695
        %v2481 = vpow.pop %v2480
        %v2482 = vsel %vm818, %v2481, 0.0
        %2483 = vadd.xlane.f32.xlu0 %v2482
        %v2484 = vpop.xlane.xlu0 %2483
        %v2485 = vrcp.pop %v2484
        %v2486 = vmul.f32 %v2481, %v2485
        %2487 = vrot.lane.b32.xlu0 %v1897, 40
        %v2488 = vpop.permute.xlu0 %2487
        %v2491 = vsel %vm818, %v2486, 0
        %2493 = vmatprep.subr.mxu0 0.0
        %2494 = vmatpush1.msra.mxu0 %v2488
        %2495 = vmatprep.subr.mxu0 0.0
        %2496 = vmatpush1.msra.mxu0 0.0
        %2497 = vmatprep.subr.mxu0 0.0
        %2498 = vmatpush1.msra.mxu0 0.0
        %2499 = vmatprep.subr.mxu0 0.0
        %2500 = vmatpush1.msra.mxu0 0.0
        %2501 = vmatprep.subr.mxu0 0.0
        %2502 = vmatpush1.msra.mxu0 0.0
        %2503 = vmatprep.subr.mxu0 0.0
        %2504 = vmatpush1.msra.mxu0 0.0
        %2505 = vmatprep.subr.mxu0 0.0
        %2506 = vmatpush1.msra.mxu0 0.0
        %2507 = vmatprep.subr.mxu0 0.0
        %2508 = vmatpush1.msra.mxu0 0.0
        %2509 = vmatprep.subr.mxu0 0.0
        %2510 = vmatpush1.msra.mxu0 0.0
        %2511 = vmatprep.subr.mxu0 0.0
        %2512 = vmatpush1.msra.mxu0 0.0
        %2513 = vmatprep.subr.mxu0 0.0
        %2514 = vmatpush1.msra.mxu0 0.0
        %2515 = vmatprep.subr.mxu0 0.0
        %2516 = vmatpush1.msra.mxu0 0.0
        %2517 = vmatprep.subr.mxu0 0.0
        %2518 = vmatpush1.msra.mxu0 0.0
        %2519 = vmatprep.subr.mxu0 0.0
        %2520 = vmatpush1.msra.mxu0 0.0
        %2521 = vmatprep.subr.mxu0 0.0
        %2522 = vmatpush1.msra.mxu0 0.0
        %2523 = vmatprep.subr.mxu0 0.0
        %2524 = vmatpush1.msra.mxu0 0.0
        %2525 = vmatprep.subr.mxu0 0.0
        %2526 = vmatpush1.msra.mxu0 0.0
        %2527 = vmatprep.subr.mxu0 0.0
        %2528 = vmatpush1.msra.mxu0 0.0
        %2529 = vmatprep.subr.mxu0 0.0
        %2530 = vmatpush1.msra.mxu0 0.0
        %2531 = vmatprep.subr.mxu0 0.0
        %2532 = vmatpush1.msra.mxu0 0.0
        %2533 = vmatprep.subr.mxu0 0.0
        %2534 = vmatpush1.msra.mxu0 0.0
        %2535 = vmatprep.subr.mxu0 0.0
        %2536 = vmatpush1.msra.mxu0 0.0
        %2537 = vmatprep.subr.mxu0 0.0
        %2538 = vmatpush1.msra.mxu0 0.0
        %2539 = vmatprep.subr.mxu0 0.0
        %2540 = vmatpush1.msra.mxu0 0.0
        %2541 = vmatprep.subr.mxu0 0.0
        %2542 = vmatpush1.msra.mxu0 0.0
        %2543 = vmatprep.subr.mxu0 0.0
        %2544 = vmatpush1.msra.mxu0 0.0
        %2545 = vmatprep.subr.mxu0 0.0
        %2546 = vmatpush1.msra.mxu0 0.0
        %2547 = vmatprep.subr.mxu0 0.0
        %2548 = vmatpush1.msra.mxu0 0.0
        %2549 = vmatprep.subr.mxu0 0.0
        %2550 = vmatpush1.msra.mxu0 0.0
        %2551 = vmatprep.subr.mxu0 0.0
        %2552 = vmatpush1.msra.mxu0 0.0
        %2553 = vmatprep.subr.mxu0 0.0
        %2554 = vmatpush1.msra.mxu0 0.0
        %2555 = vmatprep.subr.mxu0 0.0
        %2556 = vmatpush1.msra.mxu0 0.0
        %2557 = vmatprep.mubr.f32.mxu0 0.0
        %2558 = vmatmul.mubr.f32.gmra.mrb[0].mxu0 %v2491
        %v2559 = vpop.f32.mrb[0].mxu0
        %v2560 = vadd.f32 0.0, %v2559
        %v2561 = vpop.f32.mrb[0].mxu0
        %2562 = vdwg.mxu0
        %2564 = vrot.lane.b32.xlu0 %v2228, 8
        %v2565 = vpop.permute.xlu0 %2564
        %2568 = vrot.lane.b32.xlu0 %v2394, 16
        %v2569 = vpop.permute.xlu0 %2568
        %2572 = vrot.lane.b32.xlu0 %v2560, 24
        %v2573 = vpop.permute.xlu0 %2572
        %v2575 = vsel %vm818, %v2062, %v2565
        %v2576 = vsel %vm656, %v2575, %v2569
        %v2577 = vsel %vm1493, %v2576, %v2573
        %s2578 = scalar_lea.vmem %s5, 32
        %v2579 = vld [vmem:[%s2578] sm:$0xff]
        %v2580 = vld [vmem:[%s2578 + $0x8] sm:$0xff]
        %v2581 = vld [vmem:[%s2578 + $0x10] sm:$0xff]
        %v2582 = vld [vmem:[%s2578 + $0x18] sm:$0xff]
        %s2583 = scalar_lea.vmem %s6, 1
        %v2584 = vld [vmem:[%s2583] sm:$0x1]
        %v2586 = vlaneseq
        %v2587 = vshrl.u32 %v2586, 7
        %v2588 = vsub.s32 0, %v2587
        %v2589 = vrot.slane %v2584, %v2588
        %v2592 = vsel %vm741, %v2577, 0
        %2594 = vmatprep.subr.mxu0 0.0
        %2595 = vmatpush1.msra.mxu0 %v2579
        %2596 = vmatprep.subr.mxu0 0.0
        %2597 = vmatpush1.msra.mxu0 %v2580
        %2598 = vmatprep.subr.mxu0 0.0
        %2599 = vmatpush1.msra.mxu0 %v2581
        %2600 = vmatprep.subr.mxu0 0.0
        %2601 = vmatpush1.msra.mxu0 %v2582
        %2602 = vmatprep.subr.mxu0 0.0
        %2603 = vmatpush1.msra.mxu0 0.0
        %2604 = vmatprep.subr.mxu0 0.0
        %2605 = vmatpush1.msra.mxu0 0.0
        %2606 = vmatprep.subr.mxu0 0.0
        %2607 = vmatpush1.msra.mxu0 0.0
        %2608 = vmatprep.subr.mxu0 0.0
        %2609 = vmatpush1.msra.mxu0 0.0
        %2610 = vmatprep.subr.mxu0 0.0
        %2611 = vmatpush1.msra.mxu0 0.0
        %2612 = vmatprep.subr.mxu0 0.0
        %2613 = vmatpush1.msra.mxu0 0.0
        %2614 = vmatprep.subr.mxu0 0.0
        %2615 = vmatpush1.msra.mxu0 0.0
        %2616 = vmatprep.subr.mxu0 0.0
        %2617 = vmatpush1.msra.mxu0 0.0
        %2618 = vmatprep.subr.mxu0 0.0
        %2619 = vmatpush1.msra.mxu0 0.0
        %2620 = vmatprep.subr.mxu0 0.0
        %2621 = vmatpush1.msra.mxu0 0.0
        %2622 = vmatprep.subr.mxu0 0.0
        %2623 = vmatpush1.msra.mxu0 0.0
        %2624 = vmatprep.subr.mxu0 0.0
        %2625 = vmatpush1.msra.mxu0 0.0
        %2626 = vmatprep.subr.mxu0 0.0
        %2627 = vmatpush1.msra.mxu0 0.0
        %2628 = vmatprep.subr.mxu0 0.0
        %2629 = vmatpush1.msra.mxu0 0.0
        %2630 = vmatprep.subr.mxu0 0.0
        %2631 = vmatpush1.msra.mxu0 0.0
        %2632 = vmatprep.subr.mxu0 0.0
        %2633 = vmatpush1.msra.mxu0 0.0
        %2634 = vmatprep.subr.mxu0 0.0
        %2635 = vmatpush1.msra.mxu0 0.0
        %2636 = vmatprep.subr.mxu0 0.0
        %2637 = vmatpush1.msra.mxu0 0.0
        %2638 = vmatprep.subr.mxu0 0.0
        %2639 = vmatpush1.msra.mxu0 0.0
        %2640 = vmatprep.subr.mxu0 0.0
        %2641 = vmatpush1.msra.mxu0 0.0
        %2642 = vmatprep.subr.mxu0 0.0
        %2643 = vmatpush1.msra.mxu0 0.0
        %2644 = vmatprep.subr.mxu0 0.0
        %2645 = vmatpush1.msra.mxu0 0.0
        %2646 = vmatprep.subr.mxu0 0.0
        %2647 = vmatpush1.msra.mxu0 0.0
        %2648 = vmatprep.subr.mxu0 0.0
        %2649 = vmatpush1.msra.mxu0 0.0
        %2650 = vmatprep.subr.mxu0 0.0
        %2651 = vmatpush1.msra.mxu0 0.0
        %2652 = vmatprep.subr.mxu0 0.0
        %2653 = vmatpush1.msra.mxu0 0.0
        %2654 = vmatprep.subr.mxu0 0.0
        %2655 = vmatpush1.msra.mxu0 0.0
        %2656 = vmatprep.subr.mxu0 0.0
        %2657 = vmatpush1.msra.mxu0 0.0
        %2658 = vmatprep.mubr.f32.mxu0 0.0
        %2659 = vmatmul.mubr.f32.gmra.mrb[0].mxu0 %v2592
        %v2660 = vpop.f32.mrb[0].mxu0
        %v2661 = vadd.f32 %v2589, %v2660
        %v2662 = vpop.f32.mrb[0].mxu0
        %2663 = vdwg.mxu0
        %v2664 = vadd.f32 %v1813, %v2661
        %s2665 = scalar_lea.vmem %s7, 1
        %v2666 = vld [vmem:[%s2665] sm:$0x1]
        %s2667 = scalar_lea.vmem %s8, 1
        %v2668 = vld [vmem:[%s2667] sm:$0x1]
        %v2669 = vsel %vm741, %v2664, 0.0
        %2670 = vadd.xlane.f32.xlu0 %v2669
        %v2671 = vpop.xlane.xlu0 %2670
        %v2672 = vmul.f32 %v2671, %v1585
        %v2673 = vsub.f32 %v2664, %v2672
        %v2674 = vmul.f32 %v2673, %v2673
        %v2675 = vsel %vm741, %v2674, 0.0
        %2676 = vadd.xlane.f32.xlu0 %v2675
        %v2677 = vpop.xlane.xlu0 %2676
        %v2678 = vmul.f32 %v2677, %v1585
        %v2679 = vadd.f32 %v2678, 1e-05
        %v2680 = vrsqrt.pop %v2679
        %v2681 = vmul.f32 %v2673, %v2680
        %v2683 = vlaneseq
        %v2684 = vshrl.u32 %v2683, 7
        %v2685 = vsub.s32 0, %v2684
        %v2686 = vrot.slane %v2666, %v2685
        %v2688 = vmul.f32 %v2681, %v2686
        %v2690 = vlaneseq
        %v2691 = vshrl.u32 %v2690, 7
        %v2692 = vsub.s32 0, %v2691
        %v2693 = vrot.slane %v2668, %v2692
        %v2695 = vadd.f32 %v2688, %v2693
        %s2696 = scalar_lea.vmem %s9, 32
        %v2697 = vld [vmem:[%s2696] sm:$0xff]
        %v2698 = vld [vmem:[%s2696 + $0x8] sm:$0xff]
        %v2699 = vld [vmem:[%s2696 + $0x10] sm:$0xff]
        %v2700 = vld [vmem:[%s2696 + $0x18] sm:$0xff]
        %s2701 = scalar_lea.vmem %s10, 1
        %v2702 = vld [vmem:[%s2701] sm:$0x1]
        %v2704 = vlaneseq
        %v2705 = vshrl.u32 %v2704, 7
        %v2706 = vsub.s32 0, %v2705
        %v2707 = vrot.slane %v2702, %v2706
        %v2710 = vsel %vm741, %v2695, 0
        %2712 = vmatprep.subr.mxu0 0.0
        %2713 = vmatpush1.msra.mxu0 %v2697
        %2714 = vmatprep.subr.mxu0 0.0
        %2715 = vmatpush1.msra.mxu0 %v2698
        %2716 = vmatprep.subr.mxu0 0.0
        %2717 = vmatpush1.msra.mxu0 %v2699
        %2718 = vmatprep.subr.mxu0 0.0
        %2719 = vmatpush1.msra.mxu0 %v2700
        %2720 = vmatprep.subr.mxu0 0.0
        %2721 = vmatpush1.msra.mxu0 0.0
        %2722 = vmatprep.subr.mxu0 0.0
        %2723 = vmatpush1.msra.mxu0 0.0
        %2724 = vmatprep.subr.mxu0 0.0
        %2725 = vmatpush1.msra.mxu0 0.0
        %2726 = vmatprep.subr.mxu0 0.0
        %2727 = vmatpush1.msra.mxu0 0.0
        %2728 = vmatprep.subr.mxu0 0.0
        %2729 = vmatpush1.msra.mxu0 0.0
        %2730 = vmatprep.subr.mxu0 0.0
        %2731 = vmatpush1.msra.mxu0 0.0
        %2732 = vmatprep.subr.mxu0 0.0
        %2733 = vmatpush1.msra.mxu0 0.0
        %2734 = vmatprep.subr.mxu0 0.0
        %2735 = vmatpush1.msra.mxu0 0.0
        %2736 = vmatprep.subr.mxu0 0.0
        %2737 = vmatpush1.msra.mxu0 0.0
        %2738 = vmatprep.subr.mxu0 0.0
        %2739 = vmatpush1.msra.mxu0 0.0
        %2740 = vmatprep.subr.mxu0 0.0
        %2741 = vmatpush1.msra.mxu0 0.0
        %2742 = vmatprep.subr.mxu0 0.0
        %2743 = vmatpush1.msra.mxu0 0.0
        %2744 = vmatprep.subr.mxu0 0.0
        %2745 = vmatpush1.msra.mxu0 0.0
        %2746 = vmatprep.subr.mxu0 0.0
        %2747 = vmatpush1.msra.mxu0 0.0
        %2748 = vmatprep.subr.mxu0 0.0
        %2749 = vmatpush1.msra.mxu0 0.0
        %2750 = vmatprep.subr.mxu0 0.0
        %2751 = vmatpush1.msra.mxu0 0.0
        %2752 = vmatprep.subr.mxu0 0.0
        %2753 = vmatpush1.msra.mxu0 0.0
        %2754 = vmatprep.subr.mxu0 0.0
        %2755 = vmatpush1.msra.mxu0 0.0
        %2756 = vmatprep.subr.mxu0 0.0
        %2757 = vmatpush1.msra.mxu0 0.0
        %2758 = vmatprep.subr.mxu0 0.0
        %2759 = vmatpush1.msra.mxu0 0.0
        %2760 = vmatprep.subr.mxu0 0.0
        %2761 = vmatpush1.msra.mxu0 0.0
        %2762 = vmatprep.subr.mxu0 0.0
        %2763 = vmatpush1.msra.mxu0 0.0
        %2764 = vmatprep.subr.mxu0 0.0
        %2765 = vmatpush1.msra.mxu0 0.0
        %2766 = vmatprep.subr.mxu0 0.0
        %2767 = vmatpush1.msra.mxu0 0.0
        %2768 = vmatprep.subr.mxu0 0.0
        %2769 = vmatpush1.msra.mxu0 0.0
        %2770 = vmatprep.subr.mxu0 0.0
        %2771 = vmatpush1.msra.mxu0 0.0
        %2772 = vmatprep.subr.mxu0 0.0
        %2773 = vmatpush1.msra.mxu0 0.0
        %2774 = vmatprep.subr.mxu0 0.0
        %2775 = vmatpush1.msra.mxu0 0.0
        %2776 = vmatprep.mubr.f32.mxu0 0.0
        %2777 = vmatmul.mubr.f32.gmra.mrb[0].mxu0 %v2710
        %v2778 = vpop.f32.mrb[0].mxu0
        %v2779 = vadd.f32 %v2707, %v2778
        %v2780 = vpop.f32.mrb[0].mxu0
        %2781 = vdwg.mxu0
        %v2782 = vmax.f32 %v2779, 0.0
        %s2783 = scalar_lea.vmem %s11, 64
        %v2784 = vld [vmem:[%s2783] sm:$0xff]
        %v2785 = vld [vmem:[%s2783 + $0x8] sm:$0xff]
        %v2786 = vld [vmem:[%s2783 + $0x10] sm:$0xff]
        %v2787 = vld [vmem:[%s2783 + $0x18] sm:$0xff]
        %v2788 = vld [vmem:[%s2783 + $0x20] sm:$0xff]
        %v2789 = vld [vmem:[%s2783 + $0x28] sm:$0xff]
        %v2790 = vld [vmem:[%s2783 + $0x30] sm:$0xff]
        %v2791 = vld [vmem:[%s2783 + $0x38] sm:$0xff]
        %s2792 = scalar_lea.vmem %s12, 1
        %v2793 = vld [vmem:[%s2792] sm:$0x1]
        %v2795 = vlaneseq
        %v2796 = vshrl.u32 %v2795, 7
        %v2797 = vsub.s32 0, %v2796
        %v2798 = vrot.slane %v2793, %v2797
        %v2801 = vsel %vm1710, %v2782, 0
        %2803 = vmatprep.subr.mxu0 0.0
        %2804 = vmatpush1.msra.mxu0 %v2784
        %2805 = vmatprep.subr.mxu0 0.0
        %2806 = vmatpush1.msra.mxu0 %v2785
        %2807 = vmatprep.subr.mxu0 0.0
        %2808 = vmatpush1.msra.mxu0 %v2786
        %2809 = vmatprep.subr.mxu0 0.0
        %2810 = vmatpush1.msra.mxu0 %v2787
        %2811 = vmatprep.subr.mxu0 0.0
        %2812 = vmatpush1.msra.mxu0 %v2788
        %2813 = vmatprep.subr.mxu0 0.0
        %2814 = vmatpush1.msra.mxu0 %v2789
        %2815 = vmatprep.subr.mxu0 0.0
        %2816 = vmatpush1.msra.mxu0 %v2790
        %2817 = vmatprep.subr.mxu0 0.0
        %2818 = vmatpush1.msra.mxu0 %v2791
        %2819 = vmatprep.subr.mxu0 0.0
        %2820 = vmatpush1.msra.mxu0 0.0
        %2821 = vmatprep.subr.mxu0 0.0
        %2822 = vmatpush1.msra.mxu0 0.0
        %2823 = vmatprep.subr.mxu0 0.0
        %2824 = vmatpush1.msra.mxu0 0.0
        %2825 = vmatprep.subr.mxu0 0.0
        %2826 = vmatpush1.msra.mxu0 0.0
        %2827 = vmatprep.subr.mxu0 0.0
        %2828 = vmatpush1.msra.mxu0 0.0
        %2829 = vmatprep.subr.mxu0 0.0
        %2830 = vmatpush1.msra.mxu0 0.0
        %2831 = vmatprep.subr.mxu0 0.0
        %2832 = vmatpush1.msra.mxu0 0.0
        %2833 = vmatprep.subr.mxu0 0.0
        %2834 = vmatpush1.msra.mxu0 0.0
        %2835 = vmatprep.subr.mxu0 0.0
        %2836 = vmatpush1.msra.mxu0 0.0
        %2837 = vmatprep.subr.mxu0 0.0
        %2838 = vmatpush1.msra.mxu0 0.0
        %2839 = vmatprep.subr.mxu0 0.0
        %2840 = vmatpush1.msra.mxu0 0.0
        %2841 = vmatprep.subr.mxu0 0.0
        %2842 = vmatpush1.msra.mxu0 0.0
        %2843 = vmatprep.subr.mxu0 0.0
        %2844 = vmatpush1.msra.mxu0 0.0
        %2845 = vmatprep.subr.mxu0 0.0
        %2846 = vmatpush1.msra.mxu0 0.0
        %2847 = vmatprep.subr.mxu0 0.0
        %2848 = vmatpush1.msra.mxu0 0.0
        %2849 = vmatprep.subr.mxu0 0.0
        %2850 = vmatpush1.msra.mxu0 0.0
        %2851 = vmatprep.subr.mxu0 0.0
        %2852 = vmatpush1.msra.mxu0 0.0
        %2853 = vmatprep.subr.mxu0 0.0
        %2854 = vmatpush1.msra.mxu0 0.0
        %2855 = vmatprep.subr.mxu0 0.0
        %2856 = vmatpush1.msra.mxu0 0.0
        %2857 = vmatprep.subr.mxu0 0.0
        %2858 = vmatpush1.msra.mxu0 0.0
        %2859 = vmatprep.subr.mxu0 0.0
        %2860 = vmatpush1.msra.mxu0 0.0
        %2861 = vmatprep.subr.mxu0 0.0
        %2862 = vmatpush1.msra.mxu0 0.0
        %2863 = vmatprep.subr.mxu0 0.0
        %2864 = vmatpush1.msra.mxu0 0.0
        %2865 = vmatprep.subr.mxu0 0.0
        %2866 = vmatpush1.msra.mxu0 0.0
        %2867 = vmatprep.mubr.f32.mxu0 0.0
        %2868 = vmatmul.mubr.f32.gmra.mrb[0].mxu0 %v2801
        %v2869 = vpop.f32.mrb[0].mxu0
        %v2870 = vadd.f32 %v2798, %v2869
        %v2871 = vpop.f32.mrb[0].mxu0
        %2872 = vdwg.mxu0
        %v2873 = vadd.f32 %v2695, %v2870
        %s2874 = scalar_lea.vmem %s13, 1
        %v2875 = vld [vmem:[%s2874] sm:$0x1]
        %s2876 = scalar_lea.vmem %s14, 1
        %v2877 = vld [vmem:[%s2876] sm:$0x1]
        %v2878 = vsel %vm741, %v2873, 0.0
        %2879 = vadd.xlane.f32.xlu0 %v2878
        %v2880 = vpop.xlane.xlu0 %2879
        %v2881 = vmul.f32 %v2880, %v1585
        %v2882 = vsub.f32 %v2873, %v2881
        %v2883 = vmul.f32 %v2882, %v2882
        %v2884 = vsel %vm741, %v2883, 0.0
        %2885 = vadd.xlane.f32.xlu0 %v2884
        %v2886 = vpop.xlane.xlu0 %2885
        %v2887 = vmul.f32 %v2886, %v1585
        %v2888 = vadd.f32 %v2887, 1e-05
        %v2889 = vrsqrt.pop %v2888
        %v2890 = vmul.f32 %v2882, %v2889
        %v2892 = vlaneseq
        %v2893 = vshrl.u32 %v2892, 7
        %v2894 = vsub.s32 0, %v2893
        %v2895 = vrot.slane %v2875, %v2894
        %v2897 = vmul.f32 %v2890, %v2895
        %v2899 = vlaneseq
        %v2900 = vshrl.u32 %v2899, 7
        %v2901 = vsub.s32 0, %v2900
        %v2902 = vrot.slane %v2877, %v2901
        %v2904 = vadd.f32 %v2897, %v2902
        %v2905 = vld [vmem:[#allocation7] sm:$0xff]
        %v2906 = vld [vmem:[#allocation7 + $0x8] sm:$0xff]
        %v2907 = vld [vmem:[#allocation7 + $0x10] sm:$0xff]
        %v2908 = vld [vmem:[#allocation7 + $0x18] sm:$0xff]
        %v2909 = vld [vmem:[%s16] sm:$0x1]
        %v2911 = vrot.slane %v2904, 7
        %v2912 = vsel %vm741, %v2911, 0
        %2914 = vmatprep.subr.mxu0 0.0
        %2915 = vmatpush1.msra.mxu0 %v2905
        %2916 = vmatprep.subr.mxu0 0.0
        %2917 = vmatpush1.msra.mxu0 %v2906
        %2918 = vmatprep.subr.mxu0 0.0
        %2919 = vmatpush1.msra.mxu0 %v2907
        %2920 = vmatprep.subr.mxu0 0.0
        %2921 = vmatpush1.msra.mxu0 %v2908
        %2922 = vmatprep.subr.mxu0 0.0
        %2923 = vmatpush1.msra.mxu0 0.0
        %2924 = vmatprep.subr.mxu0 0.0
        %2925 = vmatpush1.msra.mxu0 0.0
        %2926 = vmatprep.subr.mxu0 0.0
        %2927 = vmatpush1.msra.mxu0 0.0
        %2928 = vmatprep.subr.mxu0 0.0
        %2929 = vmatpush1.msra.mxu0 0.0
        %2930 = vmatprep.subr.mxu0 0.0
        %2931 = vmatpush1.msra.mxu0 0.0
        %2932 = vmatprep.subr.mxu0 0.0
        %2933 = vmatpush1.msra.mxu0 0.0
        %2934 = vmatprep.subr.mxu0 0.0
        %2935 = vmatpush1.msra.mxu0 0.0
        %2936 = vmatprep.subr.mxu0 0.0
        %2937 = vmatpush1.msra.mxu0 0.0
        %2938 = vmatprep.subr.mxu0 0.0
        %2939 = vmatpush1.msra.mxu0 0.0
        %2940 = vmatprep.subr.mxu0 0.0
        %2941 = vmatpush1.msra.mxu0 0.0
        %2942 = vmatprep.subr.mxu0 0.0
        %2943 = vmatpush1.msra.mxu0 0.0
        %2944 = vmatprep.subr.mxu0 0.0
        %2945 = vmatpush1.msra.mxu0 0.0
        %2946 = vmatprep.subr.mxu0 0.0
        %2947 = vmatpush1.msra.mxu0 0.0
        %2948 = vmatprep.subr.mxu0 0.0
        %2949 = vmatpush1.msra.mxu0 0.0
        %2950 = vmatprep.subr.mxu0 0.0
        %2951 = vmatpush1.msra.mxu0 0.0
        %2952 = vmatprep.subr.mxu0 0.0
        %2953 = vmatpush1.msra.mxu0 0.0
        %2954 = vmatprep.subr.mxu0 0.0
        %2955 = vmatpush1.msra.mxu0 0.0
        %2956 = vmatprep.subr.mxu0 0.0
        %2957 = vmatpush1.msra.mxu0 0.0
        %2958 = vmatprep.subr.mxu0 0.0
        %2959 = vmatpush1.msra.mxu0 0.0
        %2960 = vmatprep.subr.mxu0 0.0
        %2961 = vmatpush1.msra.mxu0 0.0
        %2962 = vmatprep.subr.mxu0 0.0
        %2963 = vmatpush1.msra.mxu0 0.0
        %2964 = vmatprep.subr.mxu0 0.0
        %2965 = vmatpush1.msra.mxu0 0.0
        %2966 = vmatprep.subr.mxu0 0.0
        %2967 = vmatpush1.msra.mxu0 0.0
        %2968 = vmatprep.subr.mxu0 0.0
        %2969 = vmatpush1.msra.mxu0 0.0
        %2970 = vmatprep.subr.mxu0 0.0
        %2971 = vmatpush1.msra.mxu0 0.0
        %2972 = vmatprep.subr.mxu0 0.0
        %2973 = vmatpush1.msra.mxu0 0.0
        %2974 = vmatprep.subr.mxu0 0.0
        %2975 = vmatpush1.msra.mxu0 0.0
        %2976 = vmatprep.subr.mxu0 0.0
        %2977 = vmatpush1.msra.mxu0 0.0
        %2978 = vmatprep.mubr.f32.mxu0 0.0
        %2979 = vmatmul.mubr.f32.gmra.mrb[0].mxu0 %v2912
        %v2980 = vpop.f32.mrb[0].mxu0
        %v2981 = vadd.f32 %v2909, %v2980
        %v2982 = vpop.f32.mrb[0].mxu0
        %2983 = vdwg.mxu0
        %v2984 = vmax.f32 %v2981, 0.0
        %v2985 = vld [vmem:[%s17] sm:$0xff]
        %v2986 = vld [vmem:[%s17 + $0x8] sm:$0xff]
        %v2987 = vld [vmem:[%s17 + $0x10] sm:$0xff]
        %v2988 = vld [vmem:[%s17 + $0x18] sm:$0xff]
        %v2989 = vld [vmem:[%s18] sm:$0x1]
        %v2991 = vsel %vm741, %v2984, 0
        %2993 = vmatprep.subr.mxu0 0.0
        %2994 = vmatpush1.msra.mxu0 %v2985
        %2995 = vmatprep.subr.mxu0 0.0
        %2996 = vmatpush1.msra.mxu0 %v2986
        %2997 = vmatprep.subr.mxu0 0.0
        %2998 = vmatpush1.msra.mxu0 %v2987
        %2999 = vmatprep.subr.mxu0 0.0
        %3000 = vmatpush1.msra.mxu0 %v2988
        %3001 = vmatprep.subr.mxu0 0.0
        %3002 = vmatpush1.msra.mxu0 0.0
        %3003 = vmatprep.subr.mxu0 0.0
        %3004 = vmatpush1.msra.mxu0 0.0
        %3005 = vmatprep.subr.mxu0 0.0
        %3006 = vmatpush1.msra.mxu0 0.0
        %3007 = vmatprep.subr.mxu0 0.0
        %3008 = vmatpush1.msra.mxu0 0.0
        %3009 = vmatprep.subr.mxu0 0.0
        %3010 = vmatpush1.msra.mxu0 0.0
        %3011 = vmatprep.subr.mxu0 0.0
        %3012 = vmatpush1.msra.mxu0 0.0
        %3013 = vmatprep.subr.mxu0 0.0
        %3014 = vmatpush1.msra.mxu0 0.0
        %3015 = vmatprep.subr.mxu0 0.0
        %3016 = vmatpush1.msra.mxu0 0.0
        %3017 = vmatprep.subr.mxu0 0.0
        %3018 = vmatpush1.msra.mxu0 0.0
        %3019 = vmatprep.subr.mxu0 0.0
        %3020 = vmatpush1.msra.mxu0 0.0
        %3021 = vmatprep.subr.mxu0 0.0
        %3022 = vmatpush1.msra.mxu0 0.0
        %3023 = vmatprep.subr.mxu0 0.0
        %3024 = vmatpush1.msra.mxu0 0.0
        %3025 = vmatprep.subr.mxu0 0.0
        %3026 = vmatpush1.msra.mxu0 0.0
        %3027 = vmatprep.subr.mxu0 0.0
        %3028 = vmatpush1.msra.mxu0 0.0
        %3029 = vmatprep.subr.mxu0 0.0
        %3030 = vmatpush1.msra.mxu0 0.0
        %3031 = vmatprep.subr.mxu0 0.0
        %3032 = vmatpush1.msra.mxu0 0.0
        %3033 = vmatprep.subr.mxu0 0.0
        %3034 = vmatpush1.msra.mxu0 0.0
        %3035 = vmatprep.subr.mxu0 0.0
        %3036 = vmatpush1.msra.mxu0 0.0
        %3037 = vmatprep.subr.mxu0 0.0
        %3038 = vmatpush1.msra.mxu0 0.0
        %3039 = vmatprep.subr.mxu0 0.0
        %3040 = vmatpush1.msra.mxu0 0.0
        %3041 = vmatprep.subr.mxu0 0.0
        %3042 = vmatpush1.msra.mxu0 0.0
        %3043 = vmatprep.subr.mxu0 0.0
        %3044 = vmatpush1.msra.mxu0 0.0
        %3045 = vmatprep.subr.mxu0 0.0
        %3046 = vmatpush1.msra.mxu0 0.0
        %3047 = vmatprep.subr.mxu0 0.0
        %3048 = vmatpush1.msra.mxu0 0.0
        %3049 = vmatprep.subr.mxu0 0.0
        %3050 = vmatpush1.msra.mxu0 0.0
        %3051 = vmatprep.subr.mxu0 0.0
        %3052 = vmatpush1.msra.mxu0 0.0
        %3053 = vmatprep.subr.mxu0 0.0
        %3054 = vmatpush1.msra.mxu0 0.0
        %3055 = vmatprep.subr.mxu0 0.0
        %3056 = vmatpush1.msra.mxu0 0.0
        %3057 = vmatprep.mubr.f32.mxu0 0.0
        %3058 = vmatmul.mubr.f32.gmra.mrb[0].mxu0 %v2991
        %v3059 = vpop.f32.mrb[0].mxu0
        %v3060 = vadd.f32 %v2989, %v3059
        %v3061 = vpop.f32.mrb[0].mxu0
        %3062 = vdwg.mxu0
        %vm3063 = vcmask 16384
        %3064 = vst.msk [vmem:[%s645] sm:$0x1] %vm3063, %v3060
        %s3065 = sand.u32 %s449, 1
        %s3066 = scalar_lea.sflag [#allocation4], %s3065
        %s3067 = sand.u32 %s449, 1
        %s3068 = scalar_lea.vmem [#allocation8], %s3067
        // Predicated region
        $region109: #{tpu_custom_call.1} parent=95 // pred_check
          %p3069 = pneg %p459
        $region110: #{tpu_custom_call.1} parent=95 // pred_check_branch
          %3071 = sbr.rel (%p3069) target = $region112
        $region111: #{tpu_custom_call.1} parent=95 // pred_region
          %s3073 = ssub.s32 16, 16
          %3074 = vsyncadd %s3066, %s3073
          %s3075 = smul.addr %s37, 16
          %s3076 = scalar_lea.hbm %s19, %s3075
          %s3078 = sshll.u32 %s3068, 4
          %s3079 = int_to_ptr.vmem [resolvable:$true] %s3078
          %3081 = dma.vmem_to_hbm [thread:$0]  %s3079, 16, %s3076, %s3066
        $region112: #{tpu_custom_call.1} parent=95 // pred_fallthru
          _
      $region96: #{tpu_custom_call.1} parent=5 // pred_fallthru
        _
      %p3082 = scmp.le.s32.totalorder 2, %s32
      // Predicated region
      $region113: #{tpu_custom_call.1} parent=5 // pred_check
        %p3083 = pneg %p3082
      $region114: #{tpu_custom_call.1} parent=5 // pred_check_branch
        %3085 = sbr.rel (%p3083) target = $region116
      $region115: #{tpu_custom_call.1} parent=5 // pred_region
        %s3086 = ssub.s32 %s32, 2
        // Predicated region
        $region117: #{tpu_custom_call.1} parent=115 // pred_check
          %p3087 = pneg %p465
        $region118: #{tpu_custom_call.1} parent=115 // pred_check_branch
          %3089 = sbr.rel (%p3087) target = $region120
        $region119: #{tpu_custom_call.1} parent=115 // pred_region
          %s3090 = sand.u32 %s450, 1
          %s3091 = scalar_lea.sflag [#allocation4], %s3090
          %s3092 = sand.u32 %s450, 1
          %s3093 = scalar_lea.vmem [#allocation8], %s3092
          %3094 = dma.done %s3091, 16
        $region120: #{tpu_custom_call.1} parent=115 // pred_fallthru
          _
      $region116: #{tpu_custom_call.1} parent=5 // pred_fallthru
        _
    $region6: #{tpu_custom_call.1} parent=1 // loop_footer
      %s36 = sadd.s32 1, %s32
    $region7: #{tpu_custom_call.1} parent=1 // loop_footer_branch
      %31 = sbr.rel target = $region3
    $region8: #{tpu_custom_call.1} parent=1 // loop_exit
      _
    %3095 = vsyncpa [#allocation3], 1
    %s3096 = scalar_lea.sflag [#allocation3], 1
    %3097 = vsyncpa %s3096, 1
    %3098 = vsyncpa [#allocation6], 1
    %3099 = vsyncpa [#allocation4], 1
    %s3100 = scalar_lea.sflag [#allocation4], 1
    %3101 = vsyncpa %s3100, 1

</llo_original>
